<compile_context>
chip_gen: v7x
topology: tpu7x:2x2x1
jax: 0.10.0
libtpu: 0.0.40
codegen_flags: <defaults>
</compile_context>

<pallas_src>
import functools
import math

import jax
import jax.numpy as jnp
from jax import lax
from jax.experimental import pallas as pl
from jax.experimental.pallas import tpu as pltpu


def _encoder_block_kernel(xq_ref, xkv_ref,
                          wq_ref, bq_ref, wk_ref, bk_ref, wv_ref, bv_ref,
                          wo_ref, bo_ref,
                          ln1g_ref, ln1b_ref,
                          w1_ref, b1_ref, w2_ref, b2_ref,
                          ln2g_ref, ln2b_ref,
                          out_ref,
                          k_scr, v_scr,
                          *, n_heads, d_keys, d_values, d_ff_chunk, kv_chunk,
                          compute_dtype):
    f32 = jnp.float32
    cd = compute_dtype
    H, dk, dv = n_heads, d_keys, d_values
    S = xkv_ref.shape[1]
    TS = xq_ref.shape[1]
    D = xq_ref.shape[2]

    # contract the last (D) dim of both operands: (F, D) x (R, D) -> (F, R)
    dn_last = (((1,), (1,)), ((), ()))

    # ---- K/V projections: once per batch element, cached head-major in VMEM.
    @pl.when(pl.program_id(1) == 0)
    def _fill_kv_cache():
        xkv = xkv_ref[0]                                             # (S, D) bf16
        kT = lax.dot_general(wk_ref[...], xkv, dn_last,
                             preferred_element_type=f32) + bk_ref[...]   # (H*dk, S)
        k_scr[...] = kT.reshape(H, dk, S).astype(cd)
        vT = lax.dot_general(wv_ref[...], xkv, dn_last,
                             preferred_element_type=f32) + bv_ref[...]   # (H*dv, S)
        v_scr[...] = vT.reshape(H, dv, S).astype(cd)

    # ---- Q projection (scale 1/sqrt(dk) already folded into wq/bq) ----------
    xq = xq_ref[0]                                                   # (TS, D) f32
    qT = lax.dot_general(wq_ref[...], xq.astype(cd), dn_last,
                         preferred_element_type=f32) + bq_ref[...]   # (H*dk, TS)
    qh = jnp.swapaxes(qT.reshape(H, dk, TS), 1, 2).astype(cd)        # (H, TS, dk)

    # ---- attention: online softmax over key/value chunks (flash-style) ------
    m_i = jnp.full((H, TS, 1), -jnp.inf, f32)
    l_i = jnp.zeros((H, TS, 1), f32)
    acc = jnp.zeros((H, TS, dv), f32)
    for c0 in range(0, S, kv_chunk):
        c1 = min(c0 + kv_chunk, S)
        kc = k_scr[:, :, c0:c1]                                      # (H, dk, C) bf16
        vc = v_scr[:, :, c0:c1]                                      # (H, dv, C) bf16
        s_blk = jnp.einsum("hqd,hdk->hqk", qh, kc,
                           preferred_element_type=f32)               # (H, TS, C)
        m_new = jnp.maximum(m_i, jnp.max(s_blk, axis=-1, keepdims=True))
        alpha = jnp.exp(m_i - m_new)
        p = jnp.exp(s_blk - m_new)
        l_i = alpha * l_i + jnp.sum(p, axis=-1, keepdims=True)
        acc = alpha * acc + jnp.einsum("hqk,hdk->hqd", p.astype(cd), vc,
                                       preferred_element_type=f32)   # (H, TS, dv)
        m_i = m_new
    ctx = acc * pl.reciprocal(l_i, approx=True)                      # (H, TS, dv)

    # ---- fused output projection: one K = H*dv matmul, no (H, TS, D) temp ---
    ctx2 = jnp.swapaxes(ctx, 1, 2).reshape(H * dv, TS)               # (H*dv, TS)
    attn_out = jnp.dot(ctx2.T.astype(cd), wo_ref[...],
                       preferred_element_type=f32) + bo_ref[...]     # (TS, D)

    def layer_norm(y, g, b, eps=1e-5):
        mu = jnp.mean(y, axis=-1, keepdims=True)
        c = y - mu
        var = jnp.mean(c * c, axis=-1, keepdims=True)
        return c * lax.rsqrt(var + eps) * g + b

    # dropout: identity in eval mode
    x1 = layer_norm(xq + attn_out, ln1g_ref[...], ln1b_ref[...])     # (TS, D) f32

    # ---- position-wise FFN, chunked over d_ff --------------------------------
    x1_c = x1.astype(cd)
    d_ff = w1_ref.shape[1]
    ff = jnp.zeros((TS, D), f32)
    for c0 in range(0, d_ff, d_ff_chunk):
        c1 = min(c0 + d_ff_chunk, d_ff)
        h1 = jnp.dot(x1_c, w1_ref[:, c0:c1],
                     preferred_element_type=f32) + b1_ref[:, c0:c1]
        h1 = jnp.maximum(h1, 0.0)                                     # ReLU
        ff = ff + jnp.dot(h1.astype(cd), w2_ref[c0:c1, :],
                          preferred_element_type=f32)
    ff = ff + b2_ref[...]

    x2 = layer_norm(x1 + ff, ln2g_ref[...], ln2b_ref[...])
    out_ref[0] = x2.astype(out_ref.dtype)


def _pick_seq_tile(S, target=256):
    """Largest divisor of S that is a multiple of 8 and <= target (else S)."""
    for t in range(min(S, target), 7, -1):
        if S % t == 0 and t % 8 == 0:
            return t
    return S


def encoder_block(x, params, *, n_heads, d_keys, d_values,
                  seq_tile=None, kv_chunk=512, d_ff_chunk=2048,
                  compute_dtype=jnp.bfloat16):
    B, S, D = x.shape
    H, dk, dv = n_heads, d_keys, d_values
    d_ff = params["w1"].shape[1]
    f32, cd = jnp.float32, compute_dtype
    itemsize_cd = jnp.dtype(cd).itemsize

    TS = seq_tile if seq_tile is not None else _pick_seq_tile(S)
    if S % TS != 0 or (TS != S and TS % 8 != 0):
        TS = S
    n_s_tiles = S // TS
    kv_chunk = max(1, min(int(kv_chunk), S))
    d_ff_chunk = max(1, min(int(d_ff_chunk), d_ff))

    # ---- weight preprocessing (plain JAX, outside the kernel) ---------------
    scale = 1.0 / math.sqrt(float(dk))                 # folded into Q weights
    wq = (params["wq"].T * scale).astype(cd)           # (H*dk, D)
    bq = (params["bq"].reshape(-1, 1) * scale).astype(f32)
    wk = params["wk"].T.astype(cd)                     # (H*dk, D)
    bk = params["bk"].reshape(-1, 1).astype(f32)
    wv = params["wv"].T.astype(cd)                     # (H*dv, D)
    bv = params["bv"].reshape(-1, 1).astype(f32)
    wo = params["wo"].astype(cd)                       # (H*dv, D)
    bo = params["bo"].reshape(1, -1).astype(f32)
    w1 = params["w1"].astype(cd)                       # (D, d_ff)
    b1 = params["b1"].reshape(1, -1).astype(f32)
    w2 = params["w2"].astype(cd)                       # (d_ff, D)
    b2 = params["b2"].reshape(1, -1).astype(f32)
    ln1g = params["ln1_g"].reshape(1, -1).astype(f32)
    ln1b = params["ln1_b"].reshape(1, -1).astype(f32)
    ln2g = params["ln2_g"].reshape(1, -1).astype(f32)
    ln2b = params["ln2_b"].reshape(1, -1).astype(f32)

    weights = [wq, bq, wk, bk, wv, bv, wo, bo,
               ln1g, ln1b, w1, b1, w2, b2, ln2g, ln2b]

    x_kv = x.astype(cd)   # bf16 copy of x for K/V: halves the largest DMA

    weight_bytes = sum(int(a.size) * a.dtype.itemsize for a in weights)
    scratch_bytes = (H * dk * S + H * dv * S) * itemsize_cd
    stream_bytes = 2 * (TS * D * 4 + S * D * itemsize_cd + TS * D * x.dtype.itemsize)
    # kernel-internal values are NOT double-buffered
    act_bytes = 4 * (H * max(dk, dv) * S               # f32 kT/vT fill transient
                     + 2 * H * TS * dk                 # qT, qh
                     + 3 * H * TS * kv_chunk           # s_blk / p / exp temps
                     + 4 * H * TS * dv                 # acc, ctx, ctx transposes
                     + 8 * TS * D                      # attn_out/x1/ff/x2/temps
                     + 2 * TS * d_ff_chunk)            # FFN hidden chunk
    try:
        phys_vmem = int(pltpu.get_tpu_info().vmem_capacity_bytes)
    except Exception:
        phys_vmem = 64 * 1024 * 1024                   # conservative (v7x)

    flops = 2 * B * (S * D * H * (2 * dk + dv)         # Q, K, V projections
                     + H * S * S * (dk + dv)           # scores + context
                     + S * H * dv * D                  # output projection
                     + 2 * S * D * d_ff)               # FFN
    cost = pl.CostEstimate(
        flops=int(flops),
        transcendentals=int(B * H * S * S),
        bytes_accessed=int(B * S * D * (4 + itemsize_cd + 4) + weight_bytes))

    kernel = functools.partial(_encoder_block_kernel,
                               n_heads=H, d_keys=dk, d_values=dv,
                               d_ff_chunk=d_ff_chunk, kv_chunk=kv_chunk,
                               compute_dtype=cd)

    def build(buffered_weights):
        def const_spec(arr):
            if buffered_weights:
                # constant index_map -> fetched once; single buffer halves
                # weight VMEM residency vs. default double buffering.
                return pl.BlockSpec(arr.shape, lambda b, s: (0, 0),
                                    pipeline_mode=pl.Buffered(1))
            return pl.BlockSpec(arr.shape, lambda b, s: (0, 0))

        in_specs = ([pl.BlockSpec((1, TS, D), lambda b, s: (b, s, 0)),   # f32 q tile
                     pl.BlockSpec((1, S, D), lambda b, s: (b, 0, 0))]    # bf16 full seq
                    + [const_spec(w) for w in weights])
        out_spec = pl.BlockSpec((1, TS, D), lambda b, s: (b, s, 0))

        wmult = 1 if buffered_weights else 2
        vmem_limit = int(min(int(0.9 * phys_vmem),
                             max(32 * 1024 * 1024,
                                 wmult * weight_bytes + scratch_bytes
                                 + stream_bytes + int(1.5 * act_bytes)
                                 + (8 << 20))))

        return pl.pallas_call(
            kernel,
            out_shape=jax.ShapeDtypeStruct((B, S, D), x.dtype),
            grid_spec=pltpu.PrefetchScalarGridSpec(
                num_scalar_prefetch=0,
                grid=(B, n_s_tiles),
                in_specs=in_specs,
                out_specs=out_spec,
                scratch_shapes=[pltpu.VMEM((H, dk, S), cd),   # K cache (head-major)
                                pltpu.VMEM((H, dv, S), cd)],  # V cache (head-major)
            ),
            compiler_params=pltpu.CompilerParams(
                dimension_semantics=("parallel", "arbitrary"),
                vmem_limit_bytes=vmem_limit),
            cost_estimate=cost,
        )

    try:
        return build(True)(x, x_kv, *weights)
    except Exception:
        # Fall back to default double-buffering if pl.Buffered(1) is not
        # supported by this jax version.
        return build(False)(x, x_kv, *weights)


def encoder_block_reference(x, params, *, n_heads, d_keys, d_values,
                            compute_dtype=jnp.bfloat16):
    """Pure-JAX reference with matching (bf16 matmul, f32 accumulate) precision."""
    f32, cd = jnp.float32, compute_dtype
    B, S, D = x.shape
    H, dk, dv = n_heads, d_keys, d_values

    def ln(y, g, b, eps=1e-5):
        mu = jnp.mean(y, axis=-1, keepdims=True)
        var = jnp.mean((y - mu) ** 2, axis=-1, keepdims=True)
        return (y - mu) / jnp.sqrt(var + eps) * g + b

    x32 = x.astype(f32)
    xc = x.astype(cd)
    q = jnp.einsum("bsd,df->bsf", xc, params["wq"].astype(cd),
                   preferred_element_type=f32) + params["bq"]
    k = jnp.einsum("bsd,df->bsf", xc, params["wk"].astype(cd),
                   preferred_element_type=f32) + params["bk"]
    v = jnp.einsum("bsd,df->bsf", xc, params["wv"].astype(cd),
                   preferred_element_type=f32) + params["bv"]
    q = q * (1.0 / math.sqrt(float(dk)))

    qh = q.reshape(B, S, H, dk).transpose(0, 2, 1, 3).astype(cd)
    kh = k.reshape(B, S, H, dk).transpose(0, 2, 1, 3).astype(cd)
    vh = v.reshape(B, S, H, dv).transpose(0, 2, 1, 3).astype(cd)
    scores = jnp.einsum("bhqd,bhkd->bhqk", qh, kh, preferred_element_type=f32)
    p = jax.nn.softmax(scores, axis=-1)
    ctx = jnp.einsum("bhqk,bhkd->bhqd", p.astype(cd), vh, preferred_element_type=f32)
    ctx = ctx.transpose(0, 2, 1, 3).reshape(B, S, H * dv)
    attn_out = jnp.einsum("bsf,fd->bsd", ctx.astype(cd), params["wo"].astype(cd),
                          preferred_element_type=f32) + params["bo"]

    x1 = ln(x32 + attn_out, params["ln1_g"], params["ln1_b"])
    h1 = jnp.maximum(
        jnp.einsum("bsd,df->bsf", x1.astype(cd), params["w1"].astype(cd),
                   preferred_element_type=f32) + params["b1"], 0.0)
    ff = jnp.einsum("bsf,fd->bsd", h1.astype(cd), params["w2"].astype(cd),
                    preferred_element_type=f32) + params["b2"]
    x2 = ln(x1 + ff, params["ln2_g"], params["ln2_b"])
    return x2.astype(x.dtype)


def init_params(key, d_model, d_keys, d_values, n_heads, d_ff):
    ks = jax.random.split(key, 16)
    s = 0.1

    def w(k, shape):
        return jax.random.normal(k, shape, jnp.float32) * s

    return {
        "wq": w(ks[0], (d_model, n_heads * d_keys)),
        "bq": w(ks[1], (1, n_heads * d_keys)),
        "wk": w(ks[2], (d_model, n_heads * d_keys)),
        "bk": w(ks[3], (1, n_heads * d_keys)),
        "wv": w(ks[4], (d_model, n_heads * d_values)),
        "bv": w(ks[5], (1, n_heads * d_values)),
        "wo": w(ks[6], (n_heads * d_values, d_model)),
        "bo": w(ks[7], (1, d_model)),
        "ln1_g": 1.0 + w(ks[8], (1, d_model)),
        "ln1_b": w(ks[9], (1, d_model)),
        "w1": w(ks[10], (d_model, d_ff)),
        "b1": w(ks[11], (1, d_ff)),
        "w2": w(ks[12], (d_ff, d_model)),
        "b2": w(ks[13], (1, d_model)),
        "ln2_g": 1.0 + w(ks[14], (1, d_model)),
        "ln2_b": w(ks[15], (1, d_model)),
    }


if __name__ == "__main__":
    root = jax.random.PRNGKey(0)

    def run_case(B, S, d_model, d_keys, d_values, n_heads, d_ff, **kw):
        xkey, pkey = jax.random.split(jax.random.fold_in(root, S))
        x = jax.random.normal(xkey, (B, S, d_model), jnp.float32)
        params = init_params(pkey, d_model, d_keys, d_values, n_heads, d_ff)
        out = encoder_block(x, params, n_heads=n_heads, d_keys=d_keys,
                            d_values=d_values, **kw)
        out = jax.block_until_ready(out)
        ref = encoder_block_reference(x, params, n_heads=n_heads,
                                      d_keys=d_keys, d_values=d_values)
        assert out.shape == x.shape
        max_err = float(jnp.max(jnp.abs(out - ref)))
        assert jnp.allclose(out, ref, atol=2e-2, rtol=2e-2), \
            f"mismatch vs JAX reference (max abs err {max_err})"

    # 1) module-consistent small shapes (single q-tile / kv-chunk / ffn-chunk)
    run_case(2, 8, 32, 8, 8, 4, 64)
    # 2) exercise the tiled paths: 2 q-tiles reusing the K/V cache, 2 kv chunks
    #    (online softmax across chunks), 2 FFN chunks -- still small and fast.
    run_case(2, 32, 32, 8, 8, 4, 64, seq_tile=16, kv_chunk=16, d_ff_chunk=32)

    print("KERNEL_OK")
</pallas_src>

<mosaic_0001>
module attributes {stable_mosaic.version = 11 : i64} {
  func.func @_encoder_block_kernel(%arg0: i32, %arg1: i32, %arg2: memref<1x8x32xf32, #tpu.memory_space<vmem>>, %arg3: memref<1x8x32xbf16, #tpu.memory_space<vmem>>, %arg4: memref<32x32xbf16, #tpu.memory_space<vmem>>, %arg5: memref<32x1xf32, #tpu.memory_space<vmem>>, %arg6: memref<32x32xbf16, #tpu.memory_space<vmem>>, %arg7: memref<32x1xf32, #tpu.memory_space<vmem>>, %arg8: memref<32x32xbf16, #tpu.memory_space<vmem>>, %arg9: memref<32x1xf32, #tpu.memory_space<vmem>>, %arg10: memref<32x32xbf16, #tpu.memory_space<vmem>>, %arg11: memref<1x32xf32, #tpu.memory_space<vmem>>, %arg12: memref<1x32xf32, #tpu.memory_space<vmem>>, %arg13: memref<1x32xf32, #tpu.memory_space<vmem>>, %arg14: memref<32x64xbf16, #tpu.memory_space<vmem>>, %arg15: memref<1x64xf32, #tpu.memory_space<vmem>>, %arg16: memref<64x32xbf16, #tpu.memory_space<vmem>>, %arg17: memref<1x32xf32, #tpu.memory_space<vmem>>, %arg18: memref<1x32xf32, #tpu.memory_space<vmem>>, %arg19: memref<1x32xf32, #tpu.memory_space<vmem>>, %arg20: memref<1x8x32xf32, #tpu.memory_space<vmem>>, %arg21: memref<4x8x8xbf16, #tpu.memory_space<vmem>>, %arg22: memref<4x8x8xbf16, #tpu.memory_space<vmem>>) attributes {dimension_semantics = [#tpu.dimension_semantics<parallel>, #tpu.dimension_semantics<arbitrary>], iteration_bounds = array<i64: 2, 1>, scalar_prefetch = 0 : i64, scratch_operands = 2 : i64, tpu.core_type = #tpu.core_type<tc>, window_params = [{transform_indices = @transform_0, window_bounds = array<i64: 1, 8, 32>}, {transform_indices = @transform_1, window_bounds = array<i64: 1, 8, 32>}, {pipeline_mode = #tpu.pipeline_mode<synchronous>, transform_indices = @transform_2, window_bounds = array<i64: 32, 32>}, {pipeline_mode = #tpu.pipeline_mode<synchronous>, transform_indices = @transform_3, window_bounds = array<i64: 32, 1>}, {pipeline_mode = #tpu.pipeline_mode<synchronous>, transform_indices = @transform_4, window_bounds = array<i64: 32, 32>}, {pipeline_mode = #tpu.pipeline_mode<synchronous>, transform_indices = @transform_5, window_bounds = array<i64: 32, 1>}, {pipeline_mode = #tpu.pipeline_mode<synchronous>, transform_indices = @transform_6, window_bounds = array<i64: 32, 32>}, {pipeline_mode = #tpu.pipeline_mode<synchronous>, transform_indices = @transform_7, window_bounds = array<i64: 32, 1>}, {pipeline_mode = #tpu.pipeline_mode<synchronous>, transform_indices = @transform_8, window_bounds = array<i64: 32, 32>}, {pipeline_mode = #tpu.pipeline_mode<synchronous>, transform_indices = @transform_9, window_bounds = array<i64: 1, 32>}, {pipeline_mode = #tpu.pipeline_mode<synchronous>, transform_indices = @transform_10, window_bounds = array<i64: 1, 32>}, {pipeline_mode = #tpu.pipeline_mode<synchronous>, transform_indices = @transform_11, window_bounds = array<i64: 1, 32>}, {pipeline_mode = #tpu.pipeline_mode<synchronous>, transform_indices = @transform_12, window_bounds = array<i64: 32, 64>}, {pipeline_mode = #tpu.pipeline_mode<synchronous>, transform_indices = @transform_13, window_bounds = array<i64: 1, 64>}, {pipeline_mode = #tpu.pipeline_mode<synchronous>, transform_indices = @transform_14, window_bounds = array<i64: 64, 32>}, {pipeline_mode = #tpu.pipeline_mode<synchronous>, transform_indices = @transform_15, window_bounds = array<i64: 1, 32>}, {pipeline_mode = #tpu.pipeline_mode<synchronous>, transform_indices = @transform_16, window_bounds = array<i64: 1, 32>}, {pipeline_mode = #tpu.pipeline_mode<synchronous>, transform_indices = @transform_17, window_bounds = array<i64: 1, 32>}, {transform_indices = @transform_18, window_bounds = array<i64: 1, 8, 32>}]} {
    %c0_i32 = arith.constant 0 : i32
    %0 = arith.cmpi eq, %arg1, %c0_i32 : i32
    %1 = arith.extui %0 : i1 to i32
    %c0_i32_0 = arith.constant 0 : i32
    %2 = arith.cmpi ne, %1, %c0_i32_0 : i32
    scf.if %2 {
      %c0_58 = arith.constant 0 : index
      %c0_59 = arith.constant 0 : index
      %c0_60 = arith.constant 0 : index
      %114 = vector.load %arg3[%c0_58, %c0_59, %c0_60] : memref<1x8x32xbf16, #tpu.memory_space<vmem>>, vector<1x8x32xbf16>
      %115 = vector.shape_cast %114 : vector<1x8x32xbf16> to vector<8x32xbf16>
      %c0_61 = arith.constant 0 : index
      %c0_62 = arith.constant 0 : index
      %116 = vector.load %arg6[%c0_61, %c0_62] : memref<32x32xbf16, #tpu.memory_space<vmem>>, vector<32x32xbf16>
      %cst_63 = arith.constant dense<0.000000e+00> : vector<32x8xf32>
      %117 = tpu.matmul %116, %115, %cst_63 {dimension_numbers = #tpu.dot_dimension_numbers<[1], [1], [0], [0], [0, 0, 1, 0], [], []>} : vector<32x32xbf16>, vector<8x32xbf16>, vector<32x8xf32> -> vector<32x8xf32>
      %c0_64 = arith.constant 0 : index
      %c0_65 = arith.constant 0 : index
      %118 = vector.load %arg7[%c0_64, %c0_65] : memref<32x1xf32, #tpu.memory_space<vmem>>, vector<32x1xf32>
      %119 = vector.broadcast %118 : vector<32x1xf32> to vector<32x8xf32>
      %120 = arith.addf %117, %119 : vector<32x8xf32>
      %121 = vector.shape_cast %120 : vector<32x8xf32> to vector<4x8x8xf32>
      %122 = arith.truncf %121 : vector<4x8x8xf32> to vector<4x8x8xbf16>
      %c0_66 = arith.constant 0 : index
      %c0_67 = arith.constant 0 : index
      %c0_68 = arith.constant 0 : index
      %123 = vector.load %arg21[%c0_66, %c0_67, %c0_68] : memref<4x8x8xbf16, #tpu.memory_space<vmem>>, vector<4x8x8xbf16>
      tpu.vector_store %arg21[%c0_66, %c0_67, %c0_68], %122 {strides = array<i32>} : memref<4x8x8xbf16, #tpu.memory_space<vmem>>, vector<4x8x8xbf16>,
      %c0_69 = arith.constant 0 : index
      %c0_70 = arith.constant 0 : index
      %124 = vector.load %arg8[%c0_69, %c0_70] : memref<32x32xbf16, #tpu.memory_space<vmem>>, vector<32x32xbf16>
      %cst_71 = arith.constant dense<0.000000e+00> : vector<32x8xf32>
      %125 = tpu.matmul %124, %115, %cst_71 {dimension_numbers = #tpu.dot_dimension_numbers<[1], [1], [0], [0], [0, 0, 1, 0], [], []>} : vector<32x32xbf16>, vector<8x32xbf16>, vector<32x8xf32> -> vector<32x8xf32>
      %c0_72 = arith.constant 0 : index
      %c0_73 = arith.constant 0 : index
      %126 = vector.load %arg9[%c0_72, %c0_73] : memref<32x1xf32, #tpu.memory_space<vmem>>, vector<32x1xf32>
      %127 = vector.broadcast %126 : vector<32x1xf32> to vector<32x8xf32>
      %128 = arith.addf %125, %127 : vector<32x8xf32>
      %129 = vector.shape_cast %128 : vector<32x8xf32> to vector<4x8x8xf32>
      %130 = arith.truncf %129 : vector<4x8x8xf32> to vector<4x8x8xbf16>
      %c0_74 = arith.constant 0 : index
      %c0_75 = arith.constant 0 : index
      %c0_76 = arith.constant 0 : index
      %131 = vector.load %arg22[%c0_74, %c0_75, %c0_76] : memref<4x8x8xbf16, #tpu.memory_space<vmem>>, vector<4x8x8xbf16>
      tpu.vector_store %arg22[%c0_74, %c0_75, %c0_76], %130 {strides = array<i32>} : memref<4x8x8xbf16, #tpu.memory_space<vmem>>, vector<4x8x8xbf16>,
    } else {
    }
    %c0 = arith.constant 0 : index
    %c0_1 = arith.constant 0 : index
    %c0_2 = arith.constant 0 : index
    %3 = vector.load %arg2[%c0, %c0_1, %c0_2] : memref<1x8x32xf32, #tpu.memory_space<vmem>>, vector<1x8x32xf32>
    %4 = vector.shape_cast %3 : vector<1x8x32xf32> to vector<8x32xf32>
    %c0_3 = arith.constant 0 : index
    %c0_4 = arith.constant 0 : index
    %5 = vector.load %arg4[%c0_3, %c0_4] : memref<32x32xbf16, #tpu.memory_space<vmem>>, vector<32x32xbf16>
    %6 = arith.truncf %4 : vector<8x32xf32> to vector<8x32xbf16>
    %cst = arith.constant dense<0.000000e+00> : vector<32x8xf32>
    %7 = tpu.matmul %5, %6, %cst {dimension_numbers = #tpu.dot_dimension_numbers<[1], [1], [0], [0], [0, 0, 1, 0], [], []>} : vector<32x32xbf16>, vector<8x32xbf16>, vector<32x8xf32> -> vector<32x8xf32>
    %c0_5 = arith.constant 0 : index
    %c0_6 = arith.constant 0 : index
    %8 = vector.load %arg5[%c0_5, %c0_6] : memref<32x1xf32, #tpu.memory_space<vmem>>, vector<32x1xf32>
    %9 = vector.broadcast %8 : vector<32x1xf32> to vector<32x8xf32>
    %10 = arith.addf %7, %9 : vector<32x8xf32>
    %11 = vector.shape_cast %10 : vector<32x8xf32> to vector<4x8x8xf32>
    %12 = tpu.transpose %11, [0, 2, 1] : vector<4x8x8xf32> -> vector<4x8x8xf32>
    %13 = arith.truncf %12 : vector<4x8x8xf32> to vector<4x8x8xbf16>
    %cst_7 = arith.constant 0xFF800000 : f32
    %14 = vector.broadcast %cst_7 : f32 to vector<4x8x1xf32>
    %cst_8 = arith.constant 0.000000e+00 : f32
    %15 = vector.broadcast %cst_8 : f32 to vector<4x8x1xf32>
    %cst_9 = arith.constant 0.000000e+00 : f32
    %16 = vector.broadcast %cst_9 : f32 to vector<4x8x8xf32>
    %c0_10 = arith.constant 0 : index
    %c0_11 = arith.constant 0 : index
    %c0_12 = arith.constant 0 : index
    %17 = vector.load %arg21[%c0_10, %c0_11, %c0_12] : memref<4x8x8xbf16, #tpu.memory_space<vmem>>, vector<4x8x8xbf16>
    %c0_13 = arith.constant 0 : index
    %c0_14 = arith.constant 0 : index
    %c0_15 = arith.constant 0 : index
    %18 = vector.load %arg22[%c0_13, %c0_14, %c0_15] : memref<4x8x8xbf16, #tpu.memory_space<vmem>>, vector<4x8x8xbf16>
    "tpu.trace_start"() <{level = 10 : i32, message = "hqd,hdk->hqk"}> : () -> ()
    %cst_16 = arith.constant dense<0.000000e+00> : vector<4x8x8xf32>
    %19 = tpu.matmul %13, %17, %cst_16 {dimension_numbers = #tpu.dot_dimension_numbers<[2], [1], [1], [2], [0, 0, 0, 1, 1, 2], [0], [0]>} : vector<4x8x8xbf16>, vector<4x8x8xbf16>, vector<4x8x8xf32> -> vector<4x8x8xf32>
    "tpu.trace_stop"() : () -> ()
    %cst_17 = arith.constant dense<0xFF800000> : vector<4x8xf32>
    %20 = vector.multi_reduction <maximumf>, %19, %cst_17 [2] : vector<4x8x8xf32> to vector<4x8xf32>
    %21 = vector.shape_cast %20 : vector<4x8xf32> to vector<4x8x1xf32>
    %22 = arith.maximumf %14, %21 : vector<4x8x1xf32>
    %23 = arith.subf %14, %22 : vector<4x8x1xf32>
    %24 = math.exp %23 : vector<4x8x1xf32>
    %25 = vector.broadcast %22 : vector<4x8x1xf32> to vector<4x8x8xf32>
    %26 = arith.subf %19, %25 : vector<4x8x8xf32>
    %27 = math.exp %26 : vector<4x8x8xf32>
    %28 = arith.mulf %24, %15 : vector<4x8x1xf32>
    %cst_18 = arith.constant dense<0.000000e+00> : vector<4x8xf32>
    %29 = vector.multi_reduction <add>, %27, %cst_18 [2] : vector<4x8x8xf32> to vector<4x8xf32>
    %30 = vector.shape_cast %29 : vector<4x8xf32> to vector<4x8x1xf32>
    %31 = arith.addf %28, %30 : vector<4x8x1xf32>
    %32 = vector.broadcast %24 : vector<4x8x1xf32> to vector<4x8x8xf32>
    %33 = arith.mulf %32, %16 : vector<4x8x8xf32>
    %34 = arith.truncf %27 : vector<4x8x8xf32> to vector<4x8x8xbf16>
    "tpu.trace_start"() <{level = 10 : i32, message = "hqk,hdk->hqd"}> : () -> ()
    %cst_19 = arith.constant dense<0.000000e+00> : vector<4x8x8xf32>
    %35 = tpu.matmul %34, %18, %cst_19 {dimension_numbers = #tpu.dot_dimension_numbers<[2], [2], [1], [1], [0, 0, 0, 1, 1, 1], [0], [0]>} : vector<4x8x8xbf16>, vector<4x8x8xbf16>, vector<4x8x8xf32> -> vector<4x8x8xf32>
    "tpu.trace_stop"() : () -> ()
    %36 = arith.addf %33, %35 : vector<4x8x8xf32>
    %37 = tpu.reciprocal %31 {approx = true} : vector<4x8x1xf32> -> vector<4x8x1xf32>
    %38 = vector.broadcast %37 : vector<4x8x1xf32> to vector<4x8x8xf32>
    %39 = arith.mulf %36, %38 : vector<4x8x8xf32>
    %40 = tpu.transpose %39, [0, 2, 1] : vector<4x8x8xf32> -> vector<4x8x8xf32>
    %41 = vector.shape_cast %40 : vector<4x8x8xf32> to vector<32x8xf32>
    %42 = tpu.transpose %41, [1, 0] : vector<32x8xf32> -> vector<8x32xf32>
    %43 = arith.truncf %42 : vector<8x32xf32> to vector<8x32xbf16>
    %c0_20 = arith.constant 0 : index
    %c0_21 = arith.constant 0 : index
    %44 = vector.load %arg10[%c0_20, %c0_21] : memref<32x32xbf16, #tpu.memory_space<vmem>>, vector<32x32xbf16>
    %cst_22 = arith.constant dense<0.000000e+00> : vector<8x32xf32>
    %45 = tpu.matmul %43, %44, %cst_22 {dimension_numbers = #tpu.dot_dimension_numbers<[1], [0], [0], [1], [0, 0, 1, 1], [], []>} : vector<8x32xbf16>, vector<32x32xbf16>, vector<8x32xf32> -> vector<8x32xf32>
    %c0_23 = arith.constant 0 : index
    %c0_24 = arith.constant 0 : index
    %46 = vector.load %arg11[%c0_23, %c0_24] : memref<1x32xf32, #tpu.memory_space<vmem>>, vector<1x32xf32>
    %47 = vector.broadcast %46 : vector<1x32xf32> to vector<8x32xf32>
    %48 = arith.addf %45, %47 : vector<8x32xf32>
    %49 = arith.addf %4, %48 : vector<8x32xf32>
    %c0_25 = arith.constant 0 : index
    %c0_26 = arith.constant 0 : index
    %50 = vector.load %arg12[%c0_25, %c0_26] : memref<1x32xf32, #tpu.memory_space<vmem>>, vector<1x32xf32>
    %c0_27 = arith.constant 0 : index
    %c0_28 = arith.constant 0 : index
    %51 = vector.load %arg13[%c0_27, %c0_28] : memref<1x32xf32, #tpu.memory_space<vmem>>, vector<1x32xf32>
    %cst_29 = arith.constant dense<0.000000e+00> : vector<8xf32>
    %52 = vector.multi_reduction <add>, %49, %cst_29 [1] : vector<8x32xf32> to vector<8xf32>
    %53 = vector.shape_cast %52 : vector<8xf32> to vector<8x1xf32>
    %cst_30 = arith.constant 3.200000e+01 : f32
    %54 = vector.broadcast %cst_30 : f32 to vector<8x1xf32>
    %55 = arith.divf %53, %54 : vector<8x1xf32>
    %56 = vector.broadcast %55 : vector<8x1xf32> to vector<8x32xf32>
    %57 = arith.subf %49, %56 : vector<8x32xf32>
    %58 = arith.mulf %57, %57 : vector<8x32xf32>
    %cst_31 = arith.constant dense<0.000000e+00> : vector<8xf32>
    %59 = vector.multi_reduction <add>, %58, %cst_31 [1] : vector<8x32xf32> to vector<8xf32>
    %60 = vector.shape_cast %59 : vector<8xf32> to vector<8x1xf32>
    %cst_32 = arith.constant 3.200000e+01 : f32
    %61 = vector.broadcast %cst_32 : f32 to vector<8x1xf32>
    %62 = arith.divf %60, %61 : vector<8x1xf32>
    %cst_33 = arith.constant 9.99999974E-6 : f32
    %63 = vector.broadcast %cst_33 : f32 to vector<8x1xf32>
    %64 = arith.addf %62, %63 : vector<8x1xf32>
    %65 = math.rsqrt %64 : vector<8x1xf32>
    %66 = vector.broadcast %65 : vector<8x1xf32> to vector<8x32xf32>
    %67 = arith.mulf %57, %66 : vector<8x32xf32>
    %68 = vector.broadcast %50 : vector<1x32xf32> to vector<8x32xf32>
    %69 = arith.mulf %67, %68 : vector<8x32xf32>
    %70 = vector.broadcast %51 : vector<1x32xf32> to vector<8x32xf32>
    %71 = arith.addf %69, %70 : vector<8x32xf32>
    %72 = arith.truncf %71 : vector<8x32xf32> to vector<8x32xbf16>
    %cst_34 = arith.constant 0.000000e+00 : f32
    %73 = vector.broadcast %cst_34 : f32 to vector<8x32xf32>
    %c0_35 = arith.constant 0 : index
    %c0_36 = arith.constant 0 : index
    %74 = vector.load %arg14[%c0_35, %c0_36] : memref<32x64xbf16, #tpu.memory_space<vmem>>, vector<32x64xbf16>
    %cst_37 = arith.constant dense<0.000000e+00> : vector<8x64xf32>
    %75 = tpu.matmul %72, %74, %cst_37 {dimension_numbers = #tpu.dot_dimension_numbers<[1], [0], [0], [1], [0, 0, 1, 1], [], []>} : vector<8x32xbf16>, vector<32x64xbf16>, vector<8x64xf32> -> vector<8x64xf32>
    %c0_38 = arith.constant 0 : index
    %c0_39 = arith.constant 0 : index
    %76 = vector.load %arg15[%c0_38, %c0_39] : memref<1x64xf32, #tpu.memory_space<vmem>>, vector<1x64xf32>
    %77 = vector.broadcast %76 : vector<1x64xf32> to vector<8x64xf32>
    %78 = arith.addf %75, %77 : vector<8x64xf32>
    %cst_40 = arith.constant 0.000000e+00 : f32
    %79 = vector.broadcast %cst_40 : f32 to vector<8x64xf32>
    %80 = arith.maximumf %78, %79 : vector<8x64xf32>
    %81 = arith.truncf %80 : vector<8x64xf32> to vector<8x64xbf16>
    %c0_41 = arith.constant 0 : index
    %c0_42 = arith.constant 0 : index
    %82 = vector.load %arg16[%c0_41, %c0_42] : memref<64x32xbf16, #tpu.memory_space<vmem>>, vector<64x32xbf16>
    %cst_43 = arith.constant dense<0.000000e+00> : vector<8x32xf32>
    %83 = tpu.matmul %81, %82, %cst_43 {dimension_numbers = #tpu.dot_dimension_numbers<[1], [0], [0], [1], [0, 0, 1, 1], [], []>} : vector<8x64xbf16>, vector<64x32xbf16>, vector<8x32xf32> -> vector<8x32xf32>
    %84 = arith.addf %73, %83 : vector<8x32xf32>
    %c0_44 = arith.constant 0 : index
    %c0_45 = arith.constant 0 : index
    %85 = vector.load %arg17[%c0_44, %c0_45] : memref<1x32xf32, #tpu.memory_space<vmem>>, vector<1x32xf32>
    %86 = vector.broadcast %85 : vector<1x32xf32> to vector<8x32xf32>
    %87 = arith.addf %84, %86 : vector<8x32xf32>
    %88 = arith.addf %71, %87 : vector<8x32xf32>
    %c0_46 = arith.constant 0 : index
    %c0_47 = arith.constant 0 : index
    %89 = vector.load %arg18[%c0_46, %c0_47] : memref<1x32xf32, #tpu.memory_space<vmem>>, vector<1x32xf32>
    %c0_48 = arith.constant 0 : index
    %c0_49 = arith.constant 0 : index
    %90 = vector.load %arg19[%c0_48, %c0_49] : memref<1x32xf32, #tpu.memory_space<vmem>>, vector<1x32xf32>
    %cst_50 = arith.constant dense<0.000000e+00> : vector<8xf32>
    %91 = vector.multi_reduction <add>, %88, %cst_50 [1] : vector<8x32xf32> to vector<8xf32>
    %92 = vector.shape_cast %91 : vector<8xf32> to vector<8x1xf32>
    %cst_51 = arith.constant 3.200000e+01 : f32
    %93 = vector.broadcast %cst_51 : f32 to vector<8x1xf32>
    %94 = arith.divf %92, %93 : vector<8x1xf32>
    %95 = vector.broadcast %94 : vector<8x1xf32> to vector<8x32xf32>
    %96 = arith.subf %88, %95 : vector<8x32xf32>
    %97 = arith.mulf %96, %96 : vector<8x32xf32>
    %cst_52 = arith.constant dense<0.000000e+00> : vector<8xf32>
    %98 = vector.multi_reduction <add>, %97, %cst_52 [1] : vector<8x32xf32> to vector<8xf32>
    %99 = vector.shape_cast %98 : vector<8xf32> to vector<8x1xf32>
    %cst_53 = arith.constant 3.200000e+01 : f32
    %100 = vector.broadcast %cst_53 : f32 to vector<8x1xf32>
    %101 = arith.divf %99, %100 : vector<8x1xf32>
    %cst_54 = arith.constant 9.99999974E-6 : f32
    %102 = vector.broadcast %cst_54 : f32 to vector<8x1xf32>
    %103 = arith.addf %101, %102 : vector<8x1xf32>
    %104 = math.rsqrt %103 : vector<8x1xf32>
    %105 = vector.broadcast %104 : vector<8x1xf32> to vector<8x32xf32>
    %106 = arith.mulf %96, %105 : vector<8x32xf32>
    %107 = vector.broadcast %89 : vector<1x32xf32> to vector<8x32xf32>
    %108 = arith.mulf %106, %107 : vector<8x32xf32>
    %109 = vector.broadcast %90 : vector<1x32xf32> to vector<8x32xf32>
    %110 = arith.addf %108, %109 : vector<8x32xf32>
    %c0_55 = arith.constant 0 : index
    %c0_56 = arith.constant 0 : index
    %c0_57 = arith.constant 0 : index
    %111 = vector.load %arg20[%c0_55, %c0_56, %c0_57] : memref<1x8x32xf32, #tpu.memory_space<vmem>>, vector<1x8x32xf32>
    %112 = vector.shape_cast %111 : vector<1x8x32xf32> to vector<8x32xf32>
    %113 = vector.shape_cast %110 : vector<8x32xf32> to vector<1x8x32xf32>
    tpu.vector_store %arg20[%c0_55, %c0_56, %c0_57], %113 {strides = array<i32>} : memref<1x8x32xf32, #tpu.memory_space<vmem>>, vector<1x8x32xf32>,
    return
  }
  func.func @transform_0(%arg0: i32, %arg1: i32) -> (i32, i32, i32) {
    %c0_i32 = arith.constant 0 : i32
    %c0_i32_0 = arith.constant 0 : i32
    return %arg0, %arg1, %c0_i32 : i32, i32, i32
  }
  func.func @transform_1(%arg0: i32, %arg1: i32) -> (i32, i32, i32) {
    %c0_i32 = arith.constant 0 : i32
    %c0_i32_0 = arith.constant 0 : i32
    %c0_i32_1 = arith.constant 0 : i32
    return %arg0, %c0_i32, %c0_i32_0 : i32, i32, i32
  }
  func.func @transform_2(%arg0: i32, %arg1: i32) -> (i32, i32) {
    %c0_i32 = arith.constant 0 : i32
    %c0_i32_0 = arith.constant 0 : i32
    %c0_i32_1 = arith.constant 0 : i32
    return %c0_i32, %c0_i32_0 : i32, i32
  }
  func.func @transform_3(%arg0: i32, %arg1: i32) -> (i32, i32) {
    %c0_i32 = arith.constant 0 : i32
    %c0_i32_0 = arith.constant 0 : i32
    %c0_i32_1 = arith.constant 0 : i32
    return %c0_i32, %c0_i32_0 : i32, i32
  }
  func.func @transform_4(%arg0: i32, %arg1: i32) -> (i32, i32) {
    %c0_i32 = arith.constant 0 : i32
    %c0_i32_0 = arith.constant 0 : i32
    %c0_i32_1 = arith.constant 0 : i32
    return %c0_i32, %c0_i32_0 : i32, i32
  }
  func.func @transform_5(%arg0: i32, %arg1: i32) -> (i32, i32) {
    %c0_i32 = arith.constant 0 : i32
    %c0_i32_0 = arith.constant 0 : i32
    %c0_i32_1 = arith.constant 0 : i32
    return %c0_i32, %c0_i32_0 : i32, i32
  }
  func.func @transform_6(%arg0: i32, %arg1: i32) -> (i32, i32) {
    %c0_i32 = arith.constant 0 : i32
    %c0_i32_0 = arith.constant 0 : i32
    %c0_i32_1 = arith.constant 0 : i32
    return %c0_i32, %c0_i32_0 : i32, i32
  }
  func.func @transform_7(%arg0: i32, %arg1: i32) -> (i32, i32) {
    %c0_i32 = arith.constant 0 : i32
    %c0_i32_0 = arith.constant 0 : i32
    %c0_i32_1 = arith.constant 0 : i32
    return %c0_i32, %c0_i32_0 : i32, i32
  }
  func.func @transform_8(%arg0: i32, %arg1: i32) -> (i32, i32) {
    %c0_i32 = arith.constant 0 : i32
    %c0_i32_0 = arith.constant 0 : i32
    %c0_i32_1 = arith.constant 0 : i32
    return %c0_i32, %c0_i32_0 : i32, i32
  }
  func.func @transform_9(%arg0: i32, %arg1: i32) -> (i32, i32) {
    %c0_i32 = arith.constant 0 : i32
    %c0_i32_0 = arith.constant 0 : i32
    %c0_i32_1 = arith.constant 0 : i32
    return %c0_i32, %c0_i32_0 : i32, i32
  }
  func.func @transform_10(%arg0: i32, %arg1: i32) -> (i32, i32) {
    %c0_i32 = arith.constant 0 : i32
    %c0_i32_0 = arith.constant 0 : i32
    %c0_i32_1 = arith.constant 0 : i32
    return %c0_i32, %c0_i32_0 : i32, i32
  }
  func.func @transform_11(%arg0: i32, %arg1: i32) -> (i32, i32) {
    %c0_i32 = arith.constant 0 : i32
    %c0_i32_0 = arith.constant 0 : i32
    %c0_i32_1 = arith.constant 0 : i32
    return %c0_i32, %c0_i32_0 : i32, i32
  }
  func.func @transform_12(%arg0: i32, %arg1: i32) -> (i32, i32) {
    %c0_i32 = arith.constant 0 : i32
    %c0_i32_0 = arith.constant 0 : i32
    %c0_i32_1 = arith.constant 0 : i32
    return %c0_i32, %c0_i32_0 : i32, i32
  }
  func.func @transform_13(%arg0: i32, %arg1: i32) -> (i32, i32) {
    %c0_i32 = arith.constant 0 : i32
    %c0_i32_0 = arith.constant 0 : i32
    %c0_i32_1 = arith.constant 0 : i32
    return %c0_i32, %c0_i32_0 : i32, i32
  }
  func.func @transform_14(%arg0: i32, %arg1: i32) -> (i32, i32) {
    %c0_i32 = arith.constant 0 : i32
    %c0_i32_0 = arith.constant 0 : i32
    %c0_i32_1 = arith.constant 0 : i32
    return %c0_i32, %c0_i32_0 : i32, i32
  }
  func.func @transform_15(%arg0: i32, %arg1: i32) -> (i32, i32) {
    %c0_i32 = arith.constant 0 : i32
    %c0_i32_0 = arith.constant 0 : i32
    %c0_i32_1 = arith.constant 0 : i32
    return %c0_i32, %c0_i32_0 : i32, i32
  }
  func.func @transform_16(%arg0: i32, %arg1: i32) -> (i32, i32) {
    %c0_i32 = arith.constant 0 : i32
    %c0_i32_0 = arith.constant 0 : i32
    %c0_i32_1 = arith.constant 0 : i32
    return %c0_i32, %c0_i32_0 : i32, i32
  }
  func.func @transform_17(%arg0: i32, %arg1: i32) -> (i32, i32) {
    %c0_i32 = arith.constant 0 : i32
    %c0_i32_0 = arith.constant 0 : i32
    %c0_i32_1 = arith.constant 0 : i32
    return %c0_i32, %c0_i32_0 : i32, i32
  }
  func.func @transform_18(%arg0: i32, %arg1: i32) -> (i32, i32, i32) {
    %c0_i32 = arith.constant 0 : i32
    %c0_i32_0 = arith.constant 0 : i32
    return %arg0, %arg1, %c0_i32 : i32, i32, i32
  }
}

module attributes {stable_mosaic.version = 11 : i64} {
  func.func @_encoder_block_kernel(%arg0: i32, %arg1: i32, %arg2: memref<1x8x32xf32, #tpu.memory_space<vmem>>, %arg3: memref<1x8x32xbf16, #tpu.memory_space<vmem>>, %arg4: memref<32x32xbf16, #tpu.memory_space<vmem>>, %arg5: memref<32x1xf32, #tpu.memory_space<vmem>>, %arg6: memref<32x32xbf16, #tpu.memory_space<vmem>>, %arg7: memref<32x1xf32, #tpu.memory_space<vmem>>, %arg8: memref<32x32xbf16, #tpu.memory_space<vmem>>, %arg9: memref<32x1xf32, #tpu.memory_space<vmem>>, %arg10: memref<32x32xbf16, #tpu.memory_space<vmem>>, %arg11: memref<1x32xf32, #tpu.memory_space<vmem>>, %arg12: memref<1x32xf32, #tpu.memory_space<vmem>>, %arg13: memref<1x32xf32, #tpu.memory_space<vmem>>, %arg14: memref<32x64xbf16, #tpu.memory_space<vmem>>, %arg15: memref<1x64xf32, #tpu.memory_space<vmem>>, %arg16: memref<64x32xbf16, #tpu.memory_space<vmem>>, %arg17: memref<1x32xf32, #tpu.memory_space<vmem>>, %arg18: memref<1x32xf32, #tpu.memory_space<vmem>>, %arg19: memref<1x32xf32, #tpu.memory_space<vmem>>, %arg20: memref<1x8x32xf32, #tpu.memory_space<vmem>>, %arg21: memref<4x8x8xbf16, #tpu.memory_space<vmem>>, %arg22: memref<4x8x8xbf16, #tpu.memory_space<vmem>>) attributes {dimension_semantics = [#tpu.dimension_semantics<parallel>, #tpu.dimension_semantics<arbitrary>], iteration_bounds = array<i64: 2, 1>, scalar_prefetch = 0 : i64, scratch_operands = 2 : i64, tpu.core_type = #tpu.core_type<tc>, window_params = [{transform_indices = @transform_0, window_bounds = array<i64: 1, 8, 32>}, {transform_indices = @transform_1, window_bounds = array<i64: 1, 8, 32>}, {pipeline_mode = #tpu.pipeline_mode<synchronous>, transform_indices = @transform_2, window_bounds = array<i64: 32, 32>}, {pipeline_mode = #tpu.pipeline_mode<synchronous>, transform_indices = @transform_3, window_bounds = array<i64: 32, 1>}, {pipeline_mode = #tpu.pipeline_mode<synchronous>, transform_indices = @transform_4, window_bounds = array<i64: 32, 32>}, {pipeline_mode = #tpu.pipeline_mode<synchronous>, transform_indices = @transform_5, window_bounds = array<i64: 32, 1>}, {pipeline_mode = #tpu.pipeline_mode<synchronous>, transform_indices = @transform_6, window_bounds = array<i64: 32, 32>}, {pipeline_mode = #tpu.pipeline_mode<synchronous>, transform_indices = @transform_7, window_bounds = array<i64: 32, 1>}, {pipeline_mode = #tpu.pipeline_mode<synchronous>, transform_indices = @transform_8, window_bounds = array<i64: 32, 32>}, {pipeline_mode = #tpu.pipeline_mode<synchronous>, transform_indices = @transform_9, window_bounds = array<i64: 1, 32>}, {pipeline_mode = #tpu.pipeline_mode<synchronous>, transform_indices = @transform_10, window_bounds = array<i64: 1, 32>}, {pipeline_mode = #tpu.pipeline_mode<synchronous>, transform_indices = @transform_11, window_bounds = array<i64: 1, 32>}, {pipeline_mode = #tpu.pipeline_mode<synchronous>, transform_indices = @transform_12, window_bounds = array<i64: 32, 64>}, {pipeline_mode = #tpu.pipeline_mode<synchronous>, transform_indices = @transform_13, window_bounds = array<i64: 1, 64>}, {pipeline_mode = #tpu.pipeline_mode<synchronous>, transform_indices = @transform_14, window_bounds = array<i64: 64, 32>}, {pipeline_mode = #tpu.pipeline_mode<synchronous>, transform_indices = @transform_15, window_bounds = array<i64: 1, 32>}, {pipeline_mode = #tpu.pipeline_mode<synchronous>, transform_indices = @transform_16, window_bounds = array<i64: 1, 32>}, {pipeline_mode = #tpu.pipeline_mode<synchronous>, transform_indices = @transform_17, window_bounds = array<i64: 1, 32>}, {transform_indices = @transform_18, window_bounds = array<i64: 1, 8, 32>}]} {
    %c0_i32 = arith.constant 0 : i32
    %0 = arith.cmpi eq, %arg1, %c0_i32 : i32
    %1 = arith.extui %0 : i1 to i32
    %c0_i32_0 = arith.constant 0 : i32
    %2 = arith.cmpi ne, %1, %c0_i32_0 : i32
    scf.if %2 {
      %c0_58 = arith.constant 0 : index
      %c0_59 = arith.constant 0 : index
      %c0_60 = arith.constant 0 : index
      %114 = vector.load %arg3[%c0_58, %c0_59, %c0_60] : memref<1x8x32xbf16, #tpu.memory_space<vmem>>, vector<1x8x32xbf16>
      %115 = vector.shape_cast %114 : vector<1x8x32xbf16> to vector<8x32xbf16>
      %c0_61 = arith.constant 0 : index
      %c0_62 = arith.constant 0 : index
      %116 = vector.load %arg6[%c0_61, %c0_62] : memref<32x32xbf16, #tpu.memory_space<vmem>>, vector<32x32xbf16>
      %cst_63 = arith.constant dense<0.000000e+00> : vector<32x8xf32>
      %117 = tpu.matmul %116, %115, %cst_63 {dimension_numbers = #tpu.dot_dimension_numbers<[1], [1], [0], [0], [0, 0, 1, 0], [], []>} : vector<32x32xbf16>, vector<8x32xbf16>, vector<32x8xf32> -> vector<32x8xf32>
      %c0_64 = arith.constant 0 : index
      %c0_65 = arith.constant 0 : index
      %118 = vector.load %arg7[%c0_64, %c0_65] : memref<32x1xf32, #tpu.memory_space<vmem>>, vector<32x1xf32>
      %119 = vector.broadcast %118 : vector<32x1xf32> to vector<32x8xf32>
      %120 = arith.addf %117, %119 : vector<32x8xf32>
      %121 = vector.shape_cast %120 : vector<32x8xf32> to vector<4x8x8xf32>
      %122 = arith.truncf %121 : vector<4x8x8xf32> to vector<4x8x8xbf16>
      %c0_66 = arith.constant 0 : index
      %c0_67 = arith.constant 0 : index
      %c0_68 = arith.constant 0 : index
      %123 = vector.load %arg21[%c0_66, %c0_67, %c0_68] : memref<4x8x8xbf16, #tpu.memory_space<vmem>>, vector<4x8x8xbf16>
      tpu.vector_store %arg21[%c0_66, %c0_67, %c0_68], %122 {strides = array<i32>} : memref<4x8x8xbf16, #tpu.memory_space<vmem>>, vector<4x8x8xbf16>,
      %c0_69 = arith.constant 0 : index
      %c0_70 = arith.constant 0 : index
      %124 = vector.load %arg8[%c0_69, %c0_70] : memref<32x32xbf16, #tpu.memory_space<vmem>>, vector<32x32xbf16>
      %cst_71 = arith.constant dense<0.000000e+00> : vector<32x8xf32>
      %125 = tpu.matmul %124, %115, %cst_71 {dimension_numbers = #tpu.dot_dimension_numbers<[1], [1], [0], [0], [0, 0, 1, 0], [], []>} : vector<32x32xbf16>, vector<8x32xbf16>, vector<32x8xf32> -> vector<32x8xf32>
      %c0_72 = arith.constant 0 : index
      %c0_73 = arith.constant 0 : index
      %126 = vector.load %arg9[%c0_72, %c0_73] : memref<32x1xf32, #tpu.memory_space<vmem>>, vector<32x1xf32>
      %127 = vector.broadcast %126 : vector<32x1xf32> to vector<32x8xf32>
      %128 = arith.addf %125, %127 : vector<32x8xf32>
      %129 = vector.shape_cast %128 : vector<32x8xf32> to vector<4x8x8xf32>
      %130 = arith.truncf %129 : vector<4x8x8xf32> to vector<4x8x8xbf16>
      %c0_74 = arith.constant 0 : index
      %c0_75 = arith.constant 0 : index
      %c0_76 = arith.constant 0 : index
      %131 = vector.load %arg22[%c0_74, %c0_75, %c0_76] : memref<4x8x8xbf16, #tpu.memory_space<vmem>>, vector<4x8x8xbf16>
      tpu.vector_store %arg22[%c0_74, %c0_75, %c0_76], %130 {strides = array<i32>} : memref<4x8x8xbf16, #tpu.memory_space<vmem>>, vector<4x8x8xbf16>,
    } else {
    }
    %c0 = arith.constant 0 : index
    %c0_1 = arith.constant 0 : index
    %c0_2 = arith.constant 0 : index
    %3 = vector.load %arg2[%c0, %c0_1, %c0_2] : memref<1x8x32xf32, #tpu.memory_space<vmem>>, vector<1x8x32xf32>
    %4 = vector.shape_cast %3 : vector<1x8x32xf32> to vector<8x32xf32>
    %c0_3 = arith.constant 0 : index
    %c0_4 = arith.constant 0 : index
    %5 = vector.load %arg4[%c0_3, %c0_4] : memref<32x32xbf16, #tpu.memory_space<vmem>>, vector<32x32xbf16>
    %6 = arith.truncf %4 : vector<8x32xf32> to vector<8x32xbf16>
    %cst = arith.constant dense<0.000000e+00> : vector<32x8xf32>
    %7 = tpu.matmul %5, %6, %cst {dimension_numbers = #tpu.dot_dimension_numbers<[1], [1], [0], [0], [0, 0, 1, 0], [], []>} : vector<32x32xbf16>, vector<8x32xbf16>, vector<32x8xf32> -> vector<32x8xf32>
    %c0_5 = arith.constant 0 : index
    %c0_6 = arith.constant 0 : index
    %8 = vector.load %arg5[%c0_5, %c0_6] : memref<32x1xf32, #tpu.memory_space<vmem>>, vector<32x1xf32>
    %9 = vector.broadcast %8 : vector<32x1xf32> to vector<32x8xf32>
    %10 = arith.addf %7, %9 : vector<32x8xf32>
    %11 = vector.shape_cast %10 : vector<32x8xf32> to vector<4x8x8xf32>
    %12 = tpu.transpose %11, [0, 2, 1] : vector<4x8x8xf32> -> vector<4x8x8xf32>
    %13 = arith.truncf %12 : vector<4x8x8xf32> to vector<4x8x8xbf16>
    %cst_7 = arith.constant 0xFF800000 : f32
    %14 = vector.broadcast %cst_7 : f32 to vector<4x8x1xf32>
    %cst_8 = arith.constant 0.000000e+00 : f32
    %15 = vector.broadcast %cst_8 : f32 to vector<4x8x1xf32>
    %cst_9 = arith.constant 0.000000e+00 : f32
    %16 = vector.broadcast %cst_9 : f32 to vector<4x8x8xf32>
    %c0_10 = arith.constant 0 : index
    %c0_11 = arith.constant 0 : index
    %c0_12 = arith.constant 0 : index
    %17 = vector.load %arg21[%c0_10, %c0_11, %c0_12] : memref<4x8x8xbf16, #tpu.memory_space<vmem>>, vector<4x8x8xbf16>
    %c0_13 = arith.constant 0 : index
    %c0_14 = arith.constant 0 : index
    %c0_15 = arith.constant 0 : index
    %18 = vector.load %arg22[%c0_13, %c0_14, %c0_15] : memref<4x8x8xbf16, #tpu.memory_space<vmem>>, vector<4x8x8xbf16>
    "tpu.trace_start"() <{level = 10 : i32, message = "hqd,hdk->hqk"}> : () -> ()
    %cst_16 = arith.constant dense<0.000000e+00> : vector<4x8x8xf32>
    %19 = tpu.matmul %13, %17, %cst_16 {dimension_numbers = #tpu.dot_dimension_numbers<[2], [1], [1], [2], [0, 0, 0, 1, 1, 2], [0], [0]>} : vector<4x8x8xbf16>, vector<4x8x8xbf16>, vector<4x8x8xf32> -> vector<4x8x8xf32>
    "tpu.trace_stop"() : () -> ()
    %cst_17 = arith.constant dense<0xFF800000> : vector<4x8xf32>
    %20 = vector.multi_reduction <maximumf>, %19, %cst_17 [2] : vector<4x8x8xf32> to vector<4x8xf32>
    %21 = vector.shape_cast %20 : vector<4x8xf32> to vector<4x8x1xf32>
    %22 = arith.maximumf %14, %21 : vector<4x8x1xf32>
    %23 = arith.subf %14, %22 : vector<4x8x1xf32>
    %24 = math.exp %23 : vector<4x8x1xf32>
    %25 = vector.broadcast %22 : vector<4x8x1xf32> to vector<4x8x8xf32>
    %26 = arith.subf %19, %25 : vector<4x8x8xf32>
    %27 = math.exp %26 : vector<4x8x8xf32>
    %28 = arith.mulf %24, %15 : vector<4x8x1xf32>
    %cst_18 = arith.constant dense<0.000000e+00> : vector<4x8xf32>
    %29 = vector.multi_reduction <add>, %27, %cst_18 [2] : vector<4x8x8xf32> to vector<4x8xf32>
    %30 = vector.shape_cast %29 : vector<4x8xf32> to vector<4x8x1xf32>
    %31 = arith.addf %28, %30 : vector<4x8x1xf32>
    %32 = vector.broadcast %24 : vector<4x8x1xf32> to vector<4x8x8xf32>
    %33 = arith.mulf %32, %16 : vector<4x8x8xf32>
    %34 = arith.truncf %27 : vector<4x8x8xf32> to vector<4x8x8xbf16>
    "tpu.trace_start"() <{level = 10 : i32, message = "hqk,hdk->hqd"}> : () -> ()
    %cst_19 = arith.constant dense<0.000000e+00> : vector<4x8x8xf32>
    %35 = tpu.matmul %34, %18, %cst_19 {dimension_numbers = #tpu.dot_dimension_numbers<[2], [2], [1], [1], [0, 0, 0, 1, 1, 1], [0], [0]>} : vector<4x8x8xbf16>, vector<4x8x8xbf16>, vector<4x8x8xf32> -> vector<4x8x8xf32>
    "tpu.trace_stop"() : () -> ()
    %36 = arith.addf %33, %35 : vector<4x8x8xf32>
    %37 = tpu.reciprocal %31 {approx = true} : vector<4x8x1xf32> -> vector<4x8x1xf32>
    %38 = vector.broadcast %37 : vector<4x8x1xf32> to vector<4x8x8xf32>
    %39 = arith.mulf %36, %38 : vector<4x8x8xf32>
    %40 = tpu.transpose %39, [0, 2, 1] : vector<4x8x8xf32> -> vector<4x8x8xf32>
    %41 = vector.shape_cast %40 : vector<4x8x8xf32> to vector<32x8xf32>
    %42 = tpu.transpose %41, [1, 0] : vector<32x8xf32> -> vector<8x32xf32>
    %43 = arith.truncf %42 : vector<8x32xf32> to vector<8x32xbf16>
    %c0_20 = arith.constant 0 : index
    %c0_21 = arith.constant 0 : index
    %44 = vector.load %arg10[%c0_20, %c0_21] : memref<32x32xbf16, #tpu.memory_space<vmem>>, vector<32x32xbf16>
    %cst_22 = arith.constant dense<0.000000e+00> : vector<8x32xf32>
    %45 = tpu.matmul %43, %44, %cst_22 {dimension_numbers = #tpu.dot_dimension_numbers<[1], [0], [0], [1], [0, 0, 1, 1], [], []>} : vector<8x32xbf16>, vector<32x32xbf16>, vector<8x32xf32> -> vector<8x32xf32>
    %c0_23 = arith.constant 0 : index
    %c0_24 = arith.constant 0 : index
    %46 = vector.load %arg11[%c0_23, %c0_24] : memref<1x32xf32, #tpu.memory_space<vmem>>, vector<1x32xf32>
    %47 = vector.broadcast %46 : vector<1x32xf32> to vector<8x32xf32>
    %48 = arith.addf %45, %47 : vector<8x32xf32>
    %49 = arith.addf %4, %48 : vector<8x32xf32>
    %c0_25 = arith.constant 0 : index
    %c0_26 = arith.constant 0 : index
    %50 = vector.load %arg12[%c0_25, %c0_26] : memref<1x32xf32, #tpu.memory_space<vmem>>, vector<1x32xf32>
    %c0_27 = arith.constant 0 : index
    %c0_28 = arith.constant 0 : index
    %51 = vector.load %arg13[%c0_27, %c0_28] : memref<1x32xf32, #tpu.memory_space<vmem>>, vector<1x32xf32>
    %cst_29 = arith.constant dense<0.000000e+00> : vector<8xf32>
    %52 = vector.multi_reduction <add>, %49, %cst_29 [1] : vector<8x32xf32> to vector<8xf32>
    %53 = vector.shape_cast %52 : vector<8xf32> to vector<8x1xf32>
    %cst_30 = arith.constant 3.200000e+01 : f32
    %54 = vector.broadcast %cst_30 : f32 to vector<8x1xf32>
    %55 = arith.divf %53, %54 : vector<8x1xf32>
    %56 = vector.broadcast %55 : vector<8x1xf32> to vector<8x32xf32>
    %57 = arith.subf %49, %56 : vector<8x32xf32>
    %58 = arith.mulf %57, %57 : vector<8x32xf32>
    %cst_31 = arith.constant dense<0.000000e+00> : vector<8xf32>
    %59 = vector.multi_reduction <add>, %58, %cst_31 [1] : vector<8x32xf32> to vector<8xf32>
    %60 = vector.shape_cast %59 : vector<8xf32> to vector<8x1xf32>
    %cst_32 = arith.constant 3.200000e+01 : f32
    %61 = vector.broadcast %cst_32 : f32 to vector<8x1xf32>
    %62 = arith.divf %60, %61 : vector<8x1xf32>
    %cst_33 = arith.constant 9.99999974E-6 : f32
    %63 = vector.broadcast %cst_33 : f32 to vector<8x1xf32>
    %64 = arith.addf %62, %63 : vector<8x1xf32>
    %65 = math.rsqrt %64 : vector<8x1xf32>
    %66 = vector.broadcast %65 : vector<8x1xf32> to vector<8x32xf32>
    %67 = arith.mulf %57, %66 : vector<8x32xf32>
    %68 = vector.broadcast %50 : vector<1x32xf32> to vector<8x32xf32>
    %69 = arith.mulf %67, %68 : vector<8x32xf32>
    %70 = vector.broadcast %51 : vector<1x32xf32> to vector<8x32xf32>
    %71 = arith.addf %69, %70 : vector<8x32xf32>
    %72 = arith.truncf %71 : vector<8x32xf32> to vector<8x32xbf16>
    %cst_34 = arith.constant 0.000000e+00 : f32
    %73 = vector.broadcast %cst_34 : f32 to vector<8x32xf32>
    %c0_35 = arith.constant 0 : index
    %c0_36 = arith.constant 0 : index
    %74 = vector.load %arg14[%c0_35, %c0_36] : memref<32x64xbf16, #tpu.memory_space<vmem>>, vector<32x64xbf16>
    %cst_37 = arith.constant dense<0.000000e+00> : vector<8x64xf32>
    %75 = tpu.matmul %72, %74, %cst_37 {dimension_numbers = #tpu.dot_dimension_numbers<[1], [0], [0], [1], [0, 0, 1, 1], [], []>} : vector<8x32xbf16>, vector<32x64xbf16>, vector<8x64xf32> -> vector<8x64xf32>
    %c0_38 = arith.constant 0 : index
    %c0_39 = arith.constant 0 : index
    %76 = vector.load %arg15[%c0_38, %c0_39] : memref<1x64xf32, #tpu.memory_space<vmem>>, vector<1x64xf32>
    %77 = vector.broadcast %76 : vector<1x64xf32> to vector<8x64xf32>
    %78 = arith.addf %75, %77 : vector<8x64xf32>
    %cst_40 = arith.constant 0.000000e+00 : f32
    %79 = vector.broadcast %cst_40 : f32 to vector<8x64xf32>
    %80 = arith.maximumf %78, %79 : vector<8x64xf32>
    %81 = arith.truncf %80 : vector<8x64xf32> to vector<8x64xbf16>
    %c0_41 = arith.constant 0 : index
    %c0_42 = arith.constant 0 : index
    %82 = vector.load %arg16[%c0_41, %c0_42] : memref<64x32xbf16, #tpu.memory_space<vmem>>, vector<64x32xbf16>
    %cst_43 = arith.constant dense<0.000000e+00> : vector<8x32xf32>
    %83 = tpu.matmul %81, %82, %cst_43 {dimension_numbers = #tpu.dot_dimension_numbers<[1], [0], [0], [1], [0, 0, 1, 1], [], []>} : vector<8x64xbf16>, vector<64x32xbf16>, vector<8x32xf32> -> vector<8x32xf32>
    %84 = arith.addf %73, %83 : vector<8x32xf32>
    %c0_44 = arith.constant 0 : index
    %c0_45 = arith.constant 0 : index
    %85 = vector.load %arg17[%c0_44, %c0_45] : memref<1x32xf32, #tpu.memory_space<vmem>>, vector<1x32xf32>
    %86 = vector.broadcast %85 : vector<1x32xf32> to vector<8x32xf32>
    %87 = arith.addf %84, %86 : vector<8x32xf32>
    %88 = arith.addf %71, %87 : vector<8x32xf32>
    %c0_46 = arith.constant 0 : index
    %c0_47 = arith.constant 0 : index
    %89 = vector.load %arg18[%c0_46, %c0_47] : memref<1x32xf32, #tpu.memory_space<vmem>>, vector<1x32xf32>
    %c0_48 = arith.constant 0 : index
    %c0_49 = arith.constant 0 : index
    %90 = vector.load %arg19[%c0_48, %c0_49] : memref<1x32xf32, #tpu.memory_space<vmem>>, vector<1x32xf32>
    %cst_50 = arith.constant dense<0.000000e+00> : vector<8xf32>
    %91 = vector.multi_reduction <add>, %88, %cst_50 [1] : vector<8x32xf32> to vector<8xf32>
    %92 = vector.shape_cast %91 : vector<8xf32> to vector<8x1xf32>
    %cst_51 = arith.constant 3.200000e+01 : f32
    %93 = vector.broadcast %cst_51 : f32 to vector<8x1xf32>
    %94 = arith.divf %92, %93 : vector<8x1xf32>
    %95 = vector.broadcast %94 : vector<8x1xf32> to vector<8x32xf32>
    %96 = arith.subf %88, %95 : vector<8x32xf32>
    %97 = arith.mulf %96, %96 : vector<8x32xf32>
    %cst_52 = arith.constant dense<0.000000e+00> : vector<8xf32>
    %98 = vector.multi_reduction <add>, %97, %cst_52 [1] : vector<8x32xf32> to vector<8xf32>
    %99 = vector.shape_cast %98 : vector<8xf32> to vector<8x1xf32>
    %cst_53 = arith.constant 3.200000e+01 : f32
    %100 = vector.broadcast %cst_53 : f32 to vector<8x1xf32>
    %101 = arith.divf %99, %100 : vector<8x1xf32>
    %cst_54 = arith.constant 9.99999974E-6 : f32
    %102 = vector.broadcast %cst_54 : f32 to vector<8x1xf32>
    %103 = arith.addf %101, %102 : vector<8x1xf32>
    %104 = math.rsqrt %103 : vector<8x1xf32>
    %105 = vector.broadcast %104 : vector<8x1xf32> to vector<8x32xf32>
    %106 = arith.mulf %96, %105 : vector<8x32xf32>
    %107 = vector.broadcast %89 : vector<1x32xf32> to vector<8x32xf32>
    %108 = arith.mulf %106, %107 : vector<8x32xf32>
    %109 = vector.broadcast %90 : vector<1x32xf32> to vector<8x32xf32>
    %110 = arith.addf %108, %109 : vector<8x32xf32>
    %c0_55 = arith.constant 0 : index
    %c0_56 = arith.constant 0 : index
    %c0_57 = arith.constant 0 : index
    %111 = vector.load %arg20[%c0_55, %c0_56, %c0_57] : memref<1x8x32xf32, #tpu.memory_space<vmem>>, vector<1x8x32xf32>
    %112 = vector.shape_cast %111 : vector<1x8x32xf32> to vector<8x32xf32>
    %113 = vector.shape_cast %110 : vector<8x32xf32> to vector<1x8x32xf32>
    tpu.vector_store %arg20[%c0_55, %c0_56, %c0_57], %113 {strides = array<i32>} : memref<1x8x32xf32, #tpu.memory_space<vmem>>, vector<1x8x32xf32>,
    return
  }
  func.func @transform_0(%arg0: i32, %arg1: i32) -> (i32, i32, i32) {
    %c0_i32 = arith.constant 0 : i32
    %c0_i32_0 = arith.constant 0 : i32
    return %arg0, %arg1, %c0_i32 : i32, i32, i32
  }
  func.func @transform_1(%arg0: i32, %arg1: i32) -> (i32, i32, i32) {
    %c0_i32 = arith.constant 0 : i32
    %c0_i32_0 = arith.constant 0 : i32
    %c0_i32_1 = arith.constant 0 : i32
    return %arg0, %c0_i32, %c0_i32_0 : i32, i32, i32
  }
  func.func @transform_2(%arg0: i32, %arg1: i32) -> (i32, i32) {
    %c0_i32 = arith.constant 0 : i32
    %c0_i32_0 = arith.constant 0 : i32
    %c0_i32_1 = arith.constant 0 : i32
    return %c0_i32, %c0_i32_0 : i32, i32
  }
  func.func @transform_3(%arg0: i32, %arg1: i32) -> (i32, i32) {
    %c0_i32 = arith.constant 0 : i32
    %c0_i32_0 = arith.constant 0 : i32
    %c0_i32_1 = arith.constant 0 : i32
    return %c0_i32, %c0_i32_0 : i32, i32
  }
  func.func @transform_4(%arg0: i32, %arg1: i32) -> (i32, i32) {
    %c0_i32 = arith.constant 0 : i32
    %c0_i32_0 = arith.constant 0 : i32
    %c0_i32_1 = arith.constant 0 : i32
    return %c0_i32, %c0_i32_0 : i32, i32
  }
  func.func @transform_5(%arg0: i32, %arg1: i32) -> (i32, i32) {
    %c0_i32 = arith.constant 0 : i32
    %c0_i32_0 = arith.constant 0 : i32
    %c0_i32_1 = arith.constant 0 : i32
    return %c0_i32, %c0_i32_0 : i32, i32
  }
  func.func @transform_6(%arg0: i32, %arg1: i32) -> (i32, i32) {
    %c0_i32 = arith.constant 0 : i32
    %c0_i32_0 = arith.constant 0 : i32
    %c0_i32_1 = arith.constant 0 : i32
    return %c0_i32, %c0_i32_0 : i32, i32
  }
  func.func @transform_7(%arg0: i32, %arg1: i32) -> (i32, i32) {
    %c0_i32 = arith.constant 0 : i32
    %c0_i32_0 = arith.constant 0 : i32
    %c0_i32_1 = arith.constant 0 : i32
    return %c0_i32, %c0_i32_0 : i32, i32
  }
  func.func @transform_8(%arg0: i32, %arg1: i32) -> (i32, i32) {
    %c0_i32 = arith.constant 0 : i32
    %c0_i32_0 = arith.constant 0 : i32
    %c0_i32_1 = arith.constant 0 : i32
    return %c0_i32, %c0_i32_0 : i32, i32
  }
  func.func @transform_9(%arg0: i32, %arg1: i32) -> (i32, i32) {
    %c0_i32 = arith.constant 0 : i32
    %c0_i32_0 = arith.constant 0 : i32
    %c0_i32_1 = arith.constant 0 : i32
    return %c0_i32, %c0_i32_0 : i32, i32
  }
  func.func @transform_10(%arg0: i32, %arg1: i32) -> (i32, i32) {
    %c0_i32 = arith.constant 0 : i32
    %c0_i32_0 = arith.constant 0 : i32
    %c0_i32_1 = arith.constant 0 : i32
    return %c0_i32, %c0_i32_0 : i32, i32
  }
  func.func @transform_11(%arg0: i32, %arg1: i32) -> (i32, i32) {
    %c0_i32 = arith.constant 0 : i32
    %c0_i32_0 = arith.constant 0 : i32
    %c0_i32_1 = arith.constant 0 : i32
    return %c0_i32, %c0_i32_0 : i32, i32
  }
  func.func @transform_12(%arg0: i32, %arg1: i32) -> (i32, i32) {
    %c0_i32 = arith.constant 0 : i32
    %c0_i32_0 = arith.constant 0 : i32
    %c0_i32_1 = arith.constant 0 : i32
    return %c0_i32, %c0_i32_0 : i32, i32
  }
  func.func @transform_13(%arg0: i32, %arg1: i32) -> (i32, i32) {
    %c0_i32 = arith.constant 0 : i32
    %c0_i32_0 = arith.constant 0 : i32
    %c0_i32_1 = arith.constant 0 : i32
    return %c0_i32, %c0_i32_0 : i32, i32
  }
  func.func @transform_14(%arg0: i32, %arg1: i32) -> (i32, i32) {
    %c0_i32 = arith.constant 0 : i32
    %c0_i32_0 = arith.constant 0 : i32
    %c0_i32_1 = arith.constant 0 : i32
    return %c0_i32, %c0_i32_0 : i32, i32
  }
  func.func @transform_15(%arg0: i32, %arg1: i32) -> (i32, i32) {
    %c0_i32 = arith.constant 0 : i32
    %c0_i32_0 = arith.constant 0 : i32
    %c0_i32_1 = arith.constant 0 : i32
    return %c0_i32, %c0_i32_0 : i32, i32
  }
  func.func @transform_16(%arg0: i32, %arg1: i32) -> (i32, i32) {
    %c0_i32 = arith.constant 0 : i32
    %c0_i32_0 = arith.constant 0 : i32
    %c0_i32_1 = arith.constant 0 : i32
    return %c0_i32, %c0_i32_0 : i32, i32
  }
  func.func @transform_17(%arg0: i32, %arg1: i32) -> (i32, i32) {
    %c0_i32 = arith.constant 0 : i32
    %c0_i32_0 = arith.constant 0 : i32
    %c0_i32_1 = arith.constant 0 : i32
    return %c0_i32, %c0_i32_0 : i32, i32
  }
  func.func @transform_18(%arg0: i32, %arg1: i32) -> (i32, i32, i32) {
    %c0_i32 = arith.constant 0 : i32
    %c0_i32_0 = arith.constant 0 : i32
    return %arg0, %arg1, %c0_i32 : i32, i32, i32
  }
}

</mosaic_0001>

<llo_original>
// kernel: tpu_custom_call.1
$region0: #{tpu_custom_call.1}
  #allocation0 [shape = 'u32[]', space=smem, size = 0x4, offset = 0x4, fixed_abs, tag = 'smem constant byte address 0x4 - core index']
  #allocation1 [shape = 'u32[144,128]{1,0:T(1,128)}', space=vmem, size = 0x12000, scoped, tag = 'internal scratch']
  #allocation2 [shape = 'bf16[4,8,8]{2,1,0:T(8,128)(2,1)}', space=vmem, size = 0x2000, scoped, tag = 'scratch operand']
  #allocation3 [shape = 'bf16[4,8,8]{2,1,0:T(8,128)(2,1)}', space=vmem, size = 0x2000, scoped, tag = 'scratch operand']
  %s0 = inlined_call_operand.vmem [shape: f32[2,8,32], index: 0, kind: input, shape index: {}]
  %s1 = inlined_call_operand.vmem [shape: bf16[2,8,32], index: 1, kind: input, shape index: {}]
  %s2 = inlined_call_operand.vmem [shape: bf16[32,32], index: 2, kind: input, shape index: {}]
  %s3 = inlined_call_operand.vmem [shape: f32[32,1], index: 3, kind: input, shape index: {}]
  %s4 = inlined_call_operand.vmem [shape: bf16[32,32], index: 4, kind: input, shape index: {}]
  %s5 = inlined_call_operand.vmem [shape: f32[32,1], index: 5, kind: input, shape index: {}]
  %s6 = inlined_call_operand.vmem [shape: bf16[32,32], index: 6, kind: input, shape index: {}]
  %s7 = inlined_call_operand.vmem [shape: f32[32,1], index: 7, kind: input, shape index: {}]
  %s8 = inlined_call_operand.vmem [shape: bf16[32,32], index: 8, kind: input, shape index: {}]
  %s9 = inlined_call_operand.vmem [shape: f32[1,32], index: 9, kind: input, shape index: {}]
  %s10 = inlined_call_operand.vmem [shape: f32[1,32], index: 10, kind: input, shape index: {}]
  %s11 = inlined_call_operand.vmem [shape: f32[1,32], index: 11, kind: input, shape index: {}]
  %s12 = inlined_call_operand.vmem [shape: bf16[32,64], index: 12, kind: input, shape index: {}]
  %s13 = inlined_call_operand.vmem [shape: f32[1,64], index: 13, kind: input, shape index: {}]
  %s14 = inlined_call_operand.vmem [shape: bf16[64,32], index: 14, kind: input, shape index: {}]
  %s15 = inlined_call_operand.vmem [shape: f32[1,32], index: 15, kind: input, shape index: {}]
  %s16 = inlined_call_operand.vmem [shape: f32[1,32], index: 16, kind: input, shape index: {}]
  %s17 = inlined_call_operand.vmem [shape: f32[1,32], index: 17, kind: input, shape index: {}]
  %s18 = inlined_call_operand.hbm [shape: f32[2,8,32], index: 18, kind: output, shape index: {}]
  %s19 = sld [smem:[#allocation0]]
  $region109: #{tpu_custom_call.1} parent=0
    _
  %s21 = ssub.s32 1, %s19
  %s22 = scalar_select 0, %s21, %s19
  $region1: #{tpu_custom_call.1} parent=0
    #allocation4 [shape = 'u8[8192]{0}', space=vmem, size = 0x2000, scoped, tag = 'output window, operand 0']
    #allocation5 [shape = 's32[2]{0}', space=sflag, size = 0x8, scoped, tag = 'scoped memory for tpu_custom_call.1']
    %23 = vsyncpa [#allocation5], 0
    %s24 = scalar_lea.sflag [#allocation5], 1
    %25 = vsyncpa %s24, 0
    loop: start=0, step=1, limit=4
    $region2: #{tpu_custom_call.1} parent=1 // loop_pre_header
      _
    $region3: #{tpu_custom_call.1} parent=1 // loop_header
      %s27 = sphi 0, %s31
      %p28 = scmp.ge.s32.totalorder %s27, 4
      %s34 = sphi 0, %s46
      %s35 = sphi 0, %s42
      %s36 = sphi 0, %s34
      %s37 = sphi 0, %s35
      %s38 = sphi 0, %s36
      %s39 = sphi 0, %s37
      %s51 = sphi 0, %s53
      %s54 = sphi 0, %s51
      %s55 = sphi 0, %s54
      %s71 = sphi 0, %s55
      %s77 = sphi 0, %s79
      %s80 = sphi 0, %s77
      %s81 = sphi 0, %s80
      %s97 = sphi 0, %s81
      %s101 = sphi 0, %s101
      %s103 = sphi 0, %s101
      %s104 = sphi 0, %s103
      %s118 = sphi 0, %s104
      %s122 = sphi 0, %s122
      %s124 = sphi 0, %s122
      %s125 = sphi 0, %s124
      %s139 = sphi 0, %s125
      %s143 = sphi 0, %s143
      %s145 = sphi 0, %s143
      %s146 = sphi 0, %s145
      %s160 = sphi 0, %s146
      %s164 = sphi 0, %s164
      %s166 = sphi 0, %s164
      %s167 = sphi 0, %s166
      %s181 = sphi 0, %s167
      %s185 = sphi 0, %s185
      %s187 = sphi 0, %s185
      %s188 = sphi 0, %s187
      %s202 = sphi 0, %s188
      %s206 = sphi 0, %s206
      %s208 = sphi 0, %s206
      %s209 = sphi 0, %s208
      %s223 = sphi 0, %s209
      %s227 = sphi 0, %s227
      %s229 = sphi 0, %s227
      %s230 = sphi 0, %s229
      %s244 = sphi 0, %s230
      %s248 = sphi 0, %s248
      %s250 = sphi 0, %s248
      %s251 = sphi 0, %s250
      %s265 = sphi 0, %s251
      %s269 = sphi 0, %s269
      %s271 = sphi 0, %s269
      %s272 = sphi 0, %s271
      %s286 = sphi 0, %s272
      %s290 = sphi 0, %s290
      %s292 = sphi 0, %s290
      %s293 = sphi 0, %s292
      %s307 = sphi 0, %s293
      %s311 = sphi 0, %s311
      %s313 = sphi 0, %s311
      %s314 = sphi 0, %s313
      %s328 = sphi 0, %s314
      %s332 = sphi 0, %s332
      %s334 = sphi 0, %s332
      %s335 = sphi 0, %s334
      %s349 = sphi 0, %s335
      %s353 = sphi 0, %s353
      %s355 = sphi 0, %s353
      %s356 = sphi 0, %s355
      %s370 = sphi 0, %s356
      %s374 = sphi 0, %s374
      %s376 = sphi 0, %s374
      %s377 = sphi 0, %s376
      %s391 = sphi 0, %s377
      %s395 = sphi 0, %s395
      %s397 = sphi 0, %s395
      %s398 = sphi 0, %s397
      %s412 = sphi 0, %s398
      %s416 = sphi 0, %s416
      %s418 = sphi 0, %s416
      %s419 = sphi 0, %s418
      %s433 = sphi 0, %s419
      %s441 = sphi 0, %s443
      %s444 = sphi 0, %s441
      %s445 = sphi 0, %s444
      %s461 = sphi 0, %s445
    $region4: #{tpu_custom_call.1} parent=1 // loop_header_branch
      %30 = sbr.rel (%p28) target = $region8
    $region5: #{tpu_custom_call.1} parent=1 // loop_body
      %s32 = ssub.s32 %s27, 1
      %s33 = ssub.s32 %s27, 2
      %s40 = sadd.s32 1, %s35
      %p41 = scmp.ge.s32.totalorder %s40, 1
      %s42 = scalar_select %p41, 0, %s40
      %s43 = sadd.s32 1, %s34
      %s44 = scalar_select %p41, %s43, %s34
      %p45 = scmp.ge.s32.totalorder %s44, 2
      %s46 = scalar_select %p45, 0, %s44
      %s47 = ssub.s32 %s34, %s46
      %s48 = ssub.s32 %s35, %s42
      %s49 = sor.u32 %s47, %s48
      %p50 = scmp.eq.s32.totalorder %s49, 0
      %s52 = sadd.s32 %s51, 1
      %s53 = scalar_select %p50, %s51, %s52
      %p56 = pneg %p50
      %p57 = scmp.eq.s32.totalorder %s27, 1
      %p58 = por %p56, %p57
      %p59 = scmp.ne.s32.totalorder %s51, %s54
      %p60 = scmp.eq.s32.totalorder %s27, 0
      %p61 = por %p59, %p60
      %p62 = scmp.ne.s32.totalorder %s51, %s54
      %p63 = scmp.eq.s32.totalorder %s32, 1
      %p64 = por %p62, %p63
      %p65 = scmp.ne.s32.totalorder %s54, %s55
      %p66 = scmp.eq.s32.totalorder %s32, 0
      %p67 = por %p65, %p66
      %p68 = scmp.ne.s32.totalorder %s54, %s55
      %p69 = scmp.eq.s32.totalorder %s33, 1
      %p70 = por %p68, %p69
      %p72 = scmp.ne.s32.totalorder %s55, %s71
      %p73 = scmp.eq.s32.totalorder %s33, 0
      %p74 = por %p72, %p73
      %s75 = ssub.s32 %s34, %s46
      %p76 = scmp.eq.s32.totalorder %s75, 0
      %s78 = sadd.s32 %s77, 1
      %s79 = scalar_select %p76, %s77, %s78
      %p82 = pneg %p76
      %p83 = scmp.eq.s32.totalorder %s27, 1
      %p84 = por %p82, %p83
      %p85 = scmp.ne.s32.totalorder %s77, %s80
      %p86 = scmp.eq.s32.totalorder %s27, 0
      %p87 = por %p85, %p86
      %p88 = scmp.ne.s32.totalorder %s77, %s80
      %p89 = scmp.eq.s32.totalorder %s32, 1
      %p90 = por %p88, %p89
      %p91 = scmp.ne.s32.totalorder %s80, %s81
      %p92 = scmp.eq.s32.totalorder %s32, 0
      %p93 = por %p91, %p92
      %p94 = scmp.ne.s32.totalorder %s80, %s81
      %p95 = scmp.eq.s32.totalorder %s33, 1
      %p96 = por %p94, %p95
      %p98 = scmp.ne.s32.totalorder %s81, %s97
      %p99 = scmp.eq.s32.totalorder %s33, 0
      %p100 = por %p98, %p99
      %s102 = sadd.s32 %s101, 1
      %p105 = scmp.eq.s32.totalorder %s27, 1
      %p106 = scmp.ne.s32.totalorder %s101, %s103
      %p107 = scmp.eq.s32.totalorder %s27, 0
      %p108 = por %p106, %p107
      %p109 = scmp.ne.s32.totalorder %s101, %s103
      %p110 = scmp.eq.s32.totalorder %s32, 1
      %p111 = por %p109, %p110
      %p112 = scmp.ne.s32.totalorder %s103, %s104
      %p113 = scmp.eq.s32.totalorder %s32, 0
      %p114 = por %p112, %p113
      %p115 = scmp.ne.s32.totalorder %s103, %s104
      %p116 = scmp.eq.s32.totalorder %s33, 1
      %p117 = por %p115, %p116
      %p119 = scmp.ne.s32.totalorder %s104, %s118
      %p120 = scmp.eq.s32.totalorder %s33, 0
      %p121 = por %p119, %p120
      %s123 = sadd.s32 %s122, 1
      %p126 = scmp.eq.s32.totalorder %s27, 1
      %p127 = scmp.ne.s32.totalorder %s122, %s124
      %p128 = scmp.eq.s32.totalorder %s27, 0
      %p129 = por %p127, %p128
      %p130 = scmp.ne.s32.totalorder %s122, %s124
      %p131 = scmp.eq.s32.totalorder %s32, 1
      %p132 = por %p130, %p131
      %p133 = scmp.ne.s32.totalorder %s124, %s125
      %p134 = scmp.eq.s32.totalorder %s32, 0
      %p135 = por %p133, %p134
      %p136 = scmp.ne.s32.totalorder %s124, %s125
      %p137 = scmp.eq.s32.totalorder %s33, 1
      %p138 = por %p136, %p137
      %p140 = scmp.ne.s32.totalorder %s125, %s139
      %p141 = scmp.eq.s32.totalorder %s33, 0
      %p142 = por %p140, %p141
      %s144 = sadd.s32 %s143, 1
      %p147 = scmp.eq.s32.totalorder %s27, 1
      %p148 = scmp.ne.s32.totalorder %s143, %s145
      %p149 = scmp.eq.s32.totalorder %s27, 0
      %p150 = por %p148, %p149
      %p151 = scmp.ne.s32.totalorder %s143, %s145
      %p152 = scmp.eq.s32.totalorder %s32, 1
      %p153 = por %p151, %p152
      %p154 = scmp.ne.s32.totalorder %s145, %s146
      %p155 = scmp.eq.s32.totalorder %s32, 0
      %p156 = por %p154, %p155
      %p157 = scmp.ne.s32.totalorder %s145, %s146
      %p158 = scmp.eq.s32.totalorder %s33, 1
      %p159 = por %p157, %p158
      %p161 = scmp.ne.s32.totalorder %s146, %s160
      %p162 = scmp.eq.s32.totalorder %s33, 0
      %p163 = por %p161, %p162
      %s165 = sadd.s32 %s164, 1
      %p168 = scmp.eq.s32.totalorder %s27, 1
      %p169 = scmp.ne.s32.totalorder %s164, %s166
      %p170 = scmp.eq.s32.totalorder %s27, 0
      %p171 = por %p169, %p170
      %p172 = scmp.ne.s32.totalorder %s164, %s166
      %p173 = scmp.eq.s32.totalorder %s32, 1
      %p174 = por %p172, %p173
      %p175 = scmp.ne.s32.totalorder %s166, %s167
      %p176 = scmp.eq.s32.totalorder %s32, 0
      %p177 = por %p175, %p176
      %p178 = scmp.ne.s32.totalorder %s166, %s167
      %p179 = scmp.eq.s32.totalorder %s33, 1
      %p180 = por %p178, %p179
      %p182 = scmp.ne.s32.totalorder %s167, %s181
      %p183 = scmp.eq.s32.totalorder %s33, 0
      %p184 = por %p182, %p183
      %s186 = sadd.s32 %s185, 1
      %p189 = scmp.eq.s32.totalorder %s27, 1
      %p190 = scmp.ne.s32.totalorder %s185, %s187
      %p191 = scmp.eq.s32.totalorder %s27, 0
      %p192 = por %p190, %p191
      %p193 = scmp.ne.s32.totalorder %s185, %s187
      %p194 = scmp.eq.s32.totalorder %s32, 1
      %p195 = por %p193, %p194
      %p196 = scmp.ne.s32.totalorder %s187, %s188
      %p197 = scmp.eq.s32.totalorder %s32, 0
      %p198 = por %p196, %p197
      %p199 = scmp.ne.s32.totalorder %s187, %s188
      %p200 = scmp.eq.s32.totalorder %s33, 1
      %p201 = por %p199, %p200
      %p203 = scmp.ne.s32.totalorder %s188, %s202
      %p204 = scmp.eq.s32.totalorder %s33, 0
      %p205 = por %p203, %p204
      %s207 = sadd.s32 %s206, 1
      %p210 = scmp.eq.s32.totalorder %s27, 1
      %p211 = scmp.ne.s32.totalorder %s206, %s208
      %p212 = scmp.eq.s32.totalorder %s27, 0
      %p213 = por %p211, %p212
      %p214 = scmp.ne.s32.totalorder %s206, %s208
      %p215 = scmp.eq.s32.totalorder %s32, 1
      %p216 = por %p214, %p215
      %p217 = scmp.ne.s32.totalorder %s208, %s209
      %p218 = scmp.eq.s32.totalorder %s32, 0
      %p219 = por %p217, %p218
      %p220 = scmp.ne.s32.totalorder %s208, %s209
      %p221 = scmp.eq.s32.totalorder %s33, 1
      %p222 = por %p220, %p221
      %p224 = scmp.ne.s32.totalorder %s209, %s223
      %p225 = scmp.eq.s32.totalorder %s33, 0
      %p226 = por %p224, %p225
      %s228 = sadd.s32 %s227, 1
      %p231 = scmp.eq.s32.totalorder %s27, 1
      %p232 = scmp.ne.s32.totalorder %s227, %s229
      %p233 = scmp.eq.s32.totalorder %s27, 0
      %p234 = por %p232, %p233
      %p235 = scmp.ne.s32.totalorder %s227, %s229
      %p236 = scmp.eq.s32.totalorder %s32, 1
      %p237 = por %p235, %p236
      %p238 = scmp.ne.s32.totalorder %s229, %s230
      %p239 = scmp.eq.s32.totalorder %s32, 0
      %p240 = por %p238, %p239
      %p241 = scmp.ne.s32.totalorder %s229, %s230
      %p242 = scmp.eq.s32.totalorder %s33, 1
      %p243 = por %p241, %p242
      %p245 = scmp.ne.s32.totalorder %s230, %s244
      %p246 = scmp.eq.s32.totalorder %s33, 0
      %p247 = por %p245, %p246
      %s249 = sadd.s32 %s248, 1
      %p252 = scmp.eq.s32.totalorder %s27, 1
      %p253 = scmp.ne.s32.totalorder %s248, %s250
      %p254 = scmp.eq.s32.totalorder %s27, 0
      %p255 = por %p253, %p254
      %p256 = scmp.ne.s32.totalorder %s248, %s250
      %p257 = scmp.eq.s32.totalorder %s32, 1
      %p258 = por %p256, %p257
      %p259 = scmp.ne.s32.totalorder %s250, %s251
      %p260 = scmp.eq.s32.totalorder %s32, 0
      %p261 = por %p259, %p260
      %p262 = scmp.ne.s32.totalorder %s250, %s251
      %p263 = scmp.eq.s32.totalorder %s33, 1
      %p264 = por %p262, %p263
      %p266 = scmp.ne.s32.totalorder %s251, %s265
      %p267 = scmp.eq.s32.totalorder %s33, 0
      %p268 = por %p266, %p267
      %s270 = sadd.s32 %s269, 1
      %p273 = scmp.eq.s32.totalorder %s27, 1
      %p274 = scmp.ne.s32.totalorder %s269, %s271
      %p275 = scmp.eq.s32.totalorder %s27, 0
      %p276 = por %p274, %p275
      %p277 = scmp.ne.s32.totalorder %s269, %s271
      %p278 = scmp.eq.s32.totalorder %s32, 1
      %p279 = por %p277, %p278
      %p280 = scmp.ne.s32.totalorder %s271, %s272
      %p281 = scmp.eq.s32.totalorder %s32, 0
      %p282 = por %p280, %p281
      %p283 = scmp.ne.s32.totalorder %s271, %s272
      %p284 = scmp.eq.s32.totalorder %s33, 1
      %p285 = por %p283, %p284
      %p287 = scmp.ne.s32.totalorder %s272, %s286
      %p288 = scmp.eq.s32.totalorder %s33, 0
      %p289 = por %p287, %p288
      %s291 = sadd.s32 %s290, 1
      %p294 = scmp.eq.s32.totalorder %s27, 1
      %p295 = scmp.ne.s32.totalorder %s290, %s292
      %p296 = scmp.eq.s32.totalorder %s27, 0
      %p297 = por %p295, %p296
      %p298 = scmp.ne.s32.totalorder %s290, %s292
      %p299 = scmp.eq.s32.totalorder %s32, 1
      %p300 = por %p298, %p299
      %p301 = scmp.ne.s32.totalorder %s292, %s293
      %p302 = scmp.eq.s32.totalorder %s32, 0
      %p303 = por %p301, %p302
      %p304 = scmp.ne.s32.totalorder %s292, %s293
      %p305 = scmp.eq.s32.totalorder %s33, 1
      %p306 = por %p304, %p305
      %p308 = scmp.ne.s32.totalorder %s293, %s307
      %p309 = scmp.eq.s32.totalorder %s33, 0
      %p310 = por %p308, %p309
      %s312 = sadd.s32 %s311, 1
      %p315 = scmp.eq.s32.totalorder %s27, 1
      %p316 = scmp.ne.s32.totalorder %s311, %s313
      %p317 = scmp.eq.s32.totalorder %s27, 0
      %p318 = por %p316, %p317
      %p319 = scmp.ne.s32.totalorder %s311, %s313
      %p320 = scmp.eq.s32.totalorder %s32, 1
      %p321 = por %p319, %p320
      %p322 = scmp.ne.s32.totalorder %s313, %s314
      %p323 = scmp.eq.s32.totalorder %s32, 0
      %p324 = por %p322, %p323
      %p325 = scmp.ne.s32.totalorder %s313, %s314
      %p326 = scmp.eq.s32.totalorder %s33, 1
      %p327 = por %p325, %p326
      %p329 = scmp.ne.s32.totalorder %s314, %s328
      %p330 = scmp.eq.s32.totalorder %s33, 0
      %p331 = por %p329, %p330
      %s333 = sadd.s32 %s332, 1
      %p336 = scmp.eq.s32.totalorder %s27, 1
      %p337 = scmp.ne.s32.totalorder %s332, %s334
      %p338 = scmp.eq.s32.totalorder %s27, 0
      %p339 = por %p337, %p338
      %p340 = scmp.ne.s32.totalorder %s332, %s334
      %p341 = scmp.eq.s32.totalorder %s32, 1
      %p342 = por %p340, %p341
      %p343 = scmp.ne.s32.totalorder %s334, %s335
      %p344 = scmp.eq.s32.totalorder %s32, 0
      %p345 = por %p343, %p344
      %p346 = scmp.ne.s32.totalorder %s334, %s335
      %p347 = scmp.eq.s32.totalorder %s33, 1
      %p348 = por %p346, %p347
      %p350 = scmp.ne.s32.totalorder %s335, %s349
      %p351 = scmp.eq.s32.totalorder %s33, 0
      %p352 = por %p350, %p351
      %s354 = sadd.s32 %s353, 1
      %p357 = scmp.eq.s32.totalorder %s27, 1
      %p358 = scmp.ne.s32.totalorder %s353, %s355
      %p359 = scmp.eq.s32.totalorder %s27, 0
      %p360 = por %p358, %p359
      %p361 = scmp.ne.s32.totalorder %s353, %s355
      %p362 = scmp.eq.s32.totalorder %s32, 1
      %p363 = por %p361, %p362
      %p364 = scmp.ne.s32.totalorder %s355, %s356
      %p365 = scmp.eq.s32.totalorder %s32, 0
      %p366 = por %p364, %p365
      %p367 = scmp.ne.s32.totalorder %s355, %s356
      %p368 = scmp.eq.s32.totalorder %s33, 1
      %p369 = por %p367, %p368
      %p371 = scmp.ne.s32.totalorder %s356, %s370
      %p372 = scmp.eq.s32.totalorder %s33, 0
      %p373 = por %p371, %p372
      %s375 = sadd.s32 %s374, 1
      %p378 = scmp.eq.s32.totalorder %s27, 1
      %p379 = scmp.ne.s32.totalorder %s374, %s376
      %p380 = scmp.eq.s32.totalorder %s27, 0
      %p381 = por %p379, %p380
      %p382 = scmp.ne.s32.totalorder %s374, %s376
      %p383 = scmp.eq.s32.totalorder %s32, 1
      %p384 = por %p382, %p383
      %p385 = scmp.ne.s32.totalorder %s376, %s377
      %p386 = scmp.eq.s32.totalorder %s32, 0
      %p387 = por %p385, %p386
      %p388 = scmp.ne.s32.totalorder %s376, %s377
      %p389 = scmp.eq.s32.totalorder %s33, 1
      %p390 = por %p388, %p389
      %p392 = scmp.ne.s32.totalorder %s377, %s391
      %p393 = scmp.eq.s32.totalorder %s33, 0
      %p394 = por %p392, %p393
      %s396 = sadd.s32 %s395, 1
      %p399 = scmp.eq.s32.totalorder %s27, 1
      %p400 = scmp.ne.s32.totalorder %s395, %s397
      %p401 = scmp.eq.s32.totalorder %s27, 0
      %p402 = por %p400, %p401
      %p403 = scmp.ne.s32.totalorder %s395, %s397
      %p404 = scmp.eq.s32.totalorder %s32, 1
      %p405 = por %p403, %p404
      %p406 = scmp.ne.s32.totalorder %s397, %s398
      %p407 = scmp.eq.s32.totalorder %s32, 0
      %p408 = por %p406, %p407
      %p409 = scmp.ne.s32.totalorder %s397, %s398
      %p410 = scmp.eq.s32.totalorder %s33, 1
      %p411 = por %p409, %p410
      %p413 = scmp.ne.s32.totalorder %s398, %s412
      %p414 = scmp.eq.s32.totalorder %s33, 0
      %p415 = por %p413, %p414
      %s417 = sadd.s32 %s416, 1
      %p420 = scmp.eq.s32.totalorder %s27, 1
      %p421 = scmp.ne.s32.totalorder %s416, %s418
      %p422 = scmp.eq.s32.totalorder %s27, 0
      %p423 = por %p421, %p422
      %p424 = scmp.ne.s32.totalorder %s416, %s418
      %p425 = scmp.eq.s32.totalorder %s32, 1
      %p426 = por %p424, %p425
      %p427 = scmp.ne.s32.totalorder %s418, %s419
      %p428 = scmp.eq.s32.totalorder %s32, 0
      %p429 = por %p427, %p428
      %p430 = scmp.ne.s32.totalorder %s418, %s419
      %p431 = scmp.eq.s32.totalorder %s33, 1
      %p432 = por %p430, %p431
      %p434 = scmp.ne.s32.totalorder %s419, %s433
      %p435 = scmp.eq.s32.totalorder %s33, 0
      %p436 = por %p434, %p435
      %s437 = ssub.s32 %s34, %s46
      %s438 = ssub.s32 %s35, %s42
      %s439 = sor.u32 %s437, %s438
      %p440 = scmp.eq.s32.totalorder %s439, 0
      %s442 = sadd.s32 %s441, 1
      %s443 = scalar_select %p440, %s441, %s442
      %p446 = pneg %p440
      %p447 = scmp.eq.s32.totalorder %s27, 1
      %p448 = por %p446, %p447
      %p449 = scmp.ne.s32.totalorder %s441, %s444
      %p450 = scmp.eq.s32.totalorder %s27, 0
      %p451 = por %p449, %p450
      %p452 = scmp.ne.s32.totalorder %s441, %s444
      %p453 = scmp.eq.s32.totalorder %s32, 1
      %p454 = por %p452, %p453
      %p455 = scmp.ne.s32.totalorder %s444, %s445
      %p456 = scmp.eq.s32.totalorder %s32, 0
      %p457 = por %p455, %p456
      %p458 = scmp.ne.s32.totalorder %s444, %s445
      %p459 = scmp.eq.s32.totalorder %s33, 1
      %p460 = por %p458, %p459
      %p462 = scmp.ne.s32.totalorder %s445, %s461
      %p463 = scmp.eq.s32.totalorder %s33, 0
      %p464 = por %p462, %p463
      %p465 = scmp.le.s32.totalorder 1, %s27
      %p466 = scmp.lt.s32.totalorder %s27, 3
      %p467 = pnand %p465, %p466
      %p468 = pneg %p467
      // Predicated region
      $region9: #{tpu_custom_call.1} parent=5 // pred_check
        _
      $region10: #{tpu_custom_call.1} parent=5 // pred_check_branch
        %470 = sbr.rel (%p467) target = $region12
      $region11: #{tpu_custom_call.1} parent=5 // pred_region
        %s471 = ssub.s32 %s27, 1
        // Predicated region
        $region13: #{tpu_custom_call.1} parent=11 // pred_check
          %p472 = pneg %p114
        $region14: #{tpu_custom_call.1} parent=11 // pred_check_branch
          %474 = sbr.rel (%p472) target = $region16
        $region15: #{tpu_custom_call.1} parent=11 // pred_region
          _
        $region16: #{tpu_custom_call.1} parent=11 // pred_fallthru
          _
        // Predicated region
        $region17: #{tpu_custom_call.1} parent=11 // pred_check
          %p475 = pneg %p135
        $region18: #{tpu_custom_call.1} parent=11 // pred_check_branch
          %477 = sbr.rel (%p475) target = $region20
        $region19: #{tpu_custom_call.1} parent=11 // pred_region
          _
        $region20: #{tpu_custom_call.1} parent=11 // pred_fallthru
          _
        // Predicated region
        $region21: #{tpu_custom_call.1} parent=11 // pred_check
          %p478 = pneg %p156
        $region22: #{tpu_custom_call.1} parent=11 // pred_check_branch
          %480 = sbr.rel (%p478) target = $region24
        $region23: #{tpu_custom_call.1} parent=11 // pred_region
          _
        $region24: #{tpu_custom_call.1} parent=11 // pred_fallthru
          _
        // Predicated region
        $region25: #{tpu_custom_call.1} parent=11 // pred_check
          %p481 = pneg %p177
        $region26: #{tpu_custom_call.1} parent=11 // pred_check_branch
          %483 = sbr.rel (%p481) target = $region28
        $region27: #{tpu_custom_call.1} parent=11 // pred_region
          _
        $region28: #{tpu_custom_call.1} parent=11 // pred_fallthru
          _
        // Predicated region
        $region29: #{tpu_custom_call.1} parent=11 // pred_check
          %p484 = pneg %p198
        $region30: #{tpu_custom_call.1} parent=11 // pred_check_branch
          %486 = sbr.rel (%p484) target = $region32
        $region31: #{tpu_custom_call.1} parent=11 // pred_region
          _
        $region32: #{tpu_custom_call.1} parent=11 // pred_fallthru
          _
        // Predicated region
        $region33: #{tpu_custom_call.1} parent=11 // pred_check
          %p487 = pneg %p219
        $region34: #{tpu_custom_call.1} parent=11 // pred_check_branch
          %489 = sbr.rel (%p487) target = $region36
        $region35: #{tpu_custom_call.1} parent=11 // pred_region
          _
        $region36: #{tpu_custom_call.1} parent=11 // pred_fallthru
          _
        // Predicated region
        $region37: #{tpu_custom_call.1} parent=11 // pred_check
          %p490 = pneg %p240
        $region38: #{tpu_custom_call.1} parent=11 // pred_check_branch
          %492 = sbr.rel (%p490) target = $region40
        $region39: #{tpu_custom_call.1} parent=11 // pred_region
          _
        $region40: #{tpu_custom_call.1} parent=11 // pred_fallthru
          _
        // Predicated region
        $region41: #{tpu_custom_call.1} parent=11 // pred_check
          %p493 = pneg %p261
        $region42: #{tpu_custom_call.1} parent=11 // pred_check_branch
          %495 = sbr.rel (%p493) target = $region44
        $region43: #{tpu_custom_call.1} parent=11 // pred_region
          _
        $region44: #{tpu_custom_call.1} parent=11 // pred_fallthru
          _
        // Predicated region
        $region45: #{tpu_custom_call.1} parent=11 // pred_check
          %p496 = pneg %p282
        $region46: #{tpu_custom_call.1} parent=11 // pred_check_branch
          %498 = sbr.rel (%p496) target = $region48
        $region47: #{tpu_custom_call.1} parent=11 // pred_region
          _
        $region48: #{tpu_custom_call.1} parent=11 // pred_fallthru
          _
        // Predicated region
        $region49: #{tpu_custom_call.1} parent=11 // pred_check
          %p499 = pneg %p303
        $region50: #{tpu_custom_call.1} parent=11 // pred_check_branch
          %501 = sbr.rel (%p499) target = $region52
        $region51: #{tpu_custom_call.1} parent=11 // pred_region
          _
        $region52: #{tpu_custom_call.1} parent=11 // pred_fallthru
          _
        // Predicated region
        $region53: #{tpu_custom_call.1} parent=11 // pred_check
          %p502 = pneg %p324
        $region54: #{tpu_custom_call.1} parent=11 // pred_check_branch
          %504 = sbr.rel (%p502) target = $region56
        $region55: #{tpu_custom_call.1} parent=11 // pred_region
          _
        $region56: #{tpu_custom_call.1} parent=11 // pred_fallthru
          _
        // Predicated region
        $region57: #{tpu_custom_call.1} parent=11 // pred_check
          %p505 = pneg %p345
        $region58: #{tpu_custom_call.1} parent=11 // pred_check_branch
          %507 = sbr.rel (%p505) target = $region60
        $region59: #{tpu_custom_call.1} parent=11 // pred_region
          _
        $region60: #{tpu_custom_call.1} parent=11 // pred_fallthru
          _
        // Predicated region
        $region61: #{tpu_custom_call.1} parent=11 // pred_check
          %p508 = pneg %p366
        $region62: #{tpu_custom_call.1} parent=11 // pred_check_branch
          %510 = sbr.rel (%p508) target = $region64
        $region63: #{tpu_custom_call.1} parent=11 // pred_region
          _
        $region64: #{tpu_custom_call.1} parent=11 // pred_fallthru
          _
        // Predicated region
        $region65: #{tpu_custom_call.1} parent=11 // pred_check
          %p511 = pneg %p387
        $region66: #{tpu_custom_call.1} parent=11 // pred_check_branch
          %513 = sbr.rel (%p511) target = $region68
        $region67: #{tpu_custom_call.1} parent=11 // pred_region
          _
        $region68: #{tpu_custom_call.1} parent=11 // pred_fallthru
          _
        // Predicated region
        $region69: #{tpu_custom_call.1} parent=11 // pred_check
          %p514 = pneg %p408
        $region70: #{tpu_custom_call.1} parent=11 // pred_check_branch
          %516 = sbr.rel (%p514) target = $region72
        $region71: #{tpu_custom_call.1} parent=11 // pred_region
          _
        $region72: #{tpu_custom_call.1} parent=11 // pred_fallthru
          _
        // Predicated region
        $region73: #{tpu_custom_call.1} parent=11 // pred_check
          %p517 = pneg %p429
        $region74: #{tpu_custom_call.1} parent=11 // pred_check_branch
          %519 = sbr.rel (%p517) target = $region76
        $region75: #{tpu_custom_call.1} parent=11 // pred_region
          _
        $region76: #{tpu_custom_call.1} parent=11 // pred_fallthru
          _
      $region12: #{tpu_custom_call.1} parent=5 // pred_fallthru
        _
      %p520 = scmp.lt.s32.totalorder %s27, 2
      // Predicated region
      $region77: #{tpu_custom_call.1} parent=5 // pred_check
        %p521 = pneg %p520
      $region78: #{tpu_custom_call.1} parent=5 // pred_check_branch
        %523 = sbr.rel (%p521) target = $region80
      $region79: #{tpu_custom_call.1} parent=5 // pred_region
        // Predicated region
        $region81: #{tpu_custom_call.1} parent=79 // pred_check
          %p524 = pneg %p61
        $region82: #{tpu_custom_call.1} parent=79 // pred_check_branch
          %526 = sbr.rel (%p524) target = $region84
        $region83: #{tpu_custom_call.1} parent=79 // pred_region
          %p527 = scmp.lt.s32.totalorder %s34, 1
          %s528 = scalar_select %p527, %s34, 1
          %p529 = scmp.lt.s32.totalorder %s35, 0
          %s530 = scalar_select %p529, %s35, 0
          %s531 = sadd.s32 %s530, %s528
          %s532 = smul.addr %s531, 8
          %s533 = scalar_lea.vmem %s0, %s532
        $region84: #{tpu_custom_call.1} parent=79 // pred_fallthru
          _
        // Predicated region
        $region85: #{tpu_custom_call.1} parent=79 // pred_check
          %p534 = pneg %p87
        $region86: #{tpu_custom_call.1} parent=79 // pred_check_branch
          %536 = sbr.rel (%p534) target = $region88
        $region87: #{tpu_custom_call.1} parent=79 // pred_region
          %p537 = scmp.lt.s32.totalorder %s34, 1
          %s538 = scalar_select %p537, %s34, 1
          %s539 = smul.addr %s538, 4
          %s540 = scalar_lea.vmem %s1, %s539
        $region88: #{tpu_custom_call.1} parent=79 // pred_fallthru
          _
      $region80: #{tpu_custom_call.1} parent=5 // pred_fallthru
        _
      %p541 = scmp.le.s32.totalorder 1, %s27
      %p542 = scmp.lt.s32.totalorder %s27, 3
      %p543 = pnand %p541, %p542
      %p544 = pneg %p543
      // Predicated region
      $region89: #{tpu_custom_call.1} parent=5 // pred_check
        _
      $region90: #{tpu_custom_call.1} parent=5 // pred_check_branch
        %546 = sbr.rel (%p543) target = $region92
      $region91: #{tpu_custom_call.1} parent=5 // pred_region
        %s547 = ssub.s32 %s27, 1
        %p548 = scmp.lt.s32.totalorder %s36, 1
        %s549 = scalar_select %p548, %s36, 1
        %p550 = scmp.lt.s32.totalorder %s37, 0
        %s551 = scalar_select %p550, %s37, 0
        %s552 = sadd.s32 %s551, %s549
        %s553 = smul.addr %s552, 8
        %s554 = scalar_lea.vmem %s0, %s553
        %p555 = pneg %p67
        %p556 = pneg %p64
        %p557 = scmp.lt.s32.totalorder %s36, 1
        %s558 = scalar_select %p557, %s36, 1
        %s559 = smul.addr %s558, 4
        %s560 = scalar_lea.vmem %s1, %s559
        %p561 = pneg %p93
        %p562 = pneg %p90
        %p563 = pneg %p114
        %p564 = pneg %p111
        %p565 = pneg %p135
        %p566 = pneg %p132
        %p567 = pneg %p156
        %p568 = pneg %p153
        %p569 = pneg %p177
        %p570 = pneg %p174
        %p571 = pneg %p198
        %p572 = pneg %p195
        %p573 = pneg %p219
        %p574 = pneg %p216
        %p575 = pneg %p240
        %p576 = pneg %p237
        %p577 = pneg %p261
        %p578 = pneg %p258
        %p579 = pneg %p282
        %p580 = pneg %p279
        %p581 = pneg %p303
        %p582 = pneg %p300
        %p583 = pneg %p324
        %p584 = pneg %p321
        %p585 = pneg %p345
        %p586 = pneg %p342
        %p587 = pneg %p366
        %p588 = pneg %p363
        %p589 = pneg %p387
        %p590 = pneg %p384
        %p591 = pneg %p408
        %p592 = pneg %p405
        %p593 = pneg %p429
        %p594 = pneg %p426
        %p595 = pneg %p457
        %p596 = pneg %p454
        %s597 = sand.u32 %s444, 1
        %s598 = scalar_lea.sflag [#allocation5], %s597
        %s599 = sand.u32 %s444, 1
        %s600 = smul.addr %s599, 8
        %s601 = scalar_lea.vmem [#allocation4], %s600
        %p602 = scmp.lt.s32.totalorder %s36, 1
        %s603 = scalar_select %p602, %s36, 1
        %p604 = scmp.lt.s32.totalorder %s37, 0
        %s605 = scalar_select %p604, %s37, 0
        %s606 = sadd.s32 %s605, %s603
        %s607 = smul.addr %s606, 8
        %s608 = scalar_lea.vmem %s0, %s607
        %p609 = scmp.lt.s32.totalorder %s36, 1
        %s610 = scalar_select %p609, %s36, 1
        %s611 = smul.addr %s610, 4
        %s612 = scalar_lea.vmem %s1, %s611
        %p614 = scmp.eq.s32.totalorder %s37, 0
        // Predicated region
        $region93: #{tpu_custom_call.1} parent=91 // pred_check
          %p615 = pneg %p614
        $region94: #{tpu_custom_call.1} parent=91 // pred_check_branch
          %617 = sbr.rel (%p615) target = $region96
        $region95: #{tpu_custom_call.1} parent=91 // pred_region
          %v618 = vld [vmem:[%s612] sm:$0xf]
          %v619 = vld [vmem:[%s4] sm:$0xf]
          %v620 = vld [vmem:[%s4 + $0x4] sm:$0xf]
          %v621 = vld [vmem:[%s4 + $0x8] sm:$0xf]
          %v622 = vld [vmem:[%s4 + $0xc] sm:$0xf]
          %v623 = vld [vmem:[%s5] sm:$0xff]
          %v624 = vld [vmem:[%s5 + $0x8] sm:$0xff]
          %v625 = vld [vmem:[%s5 + $0x10] sm:$0xff]
          %v626 = vld [vmem:[%s5 + $0x18] sm:$0xff]
          %628 = vset.pattern.permute.xlu0 0
          %629 = vperm.xlu0 %628, %v623
          %v630 = vpop.permute.xlu0 %629
          %633 = vset.pattern.permute.xlu0 0
          %634 = vperm.xlu0 %633, %v624
          %v635 = vpop.permute.xlu0 %634
          %638 = vset.pattern.permute.xlu0 0
          %639 = vperm.xlu0 %638, %v625
          %v640 = vpop.permute.xlu0 %639
          %643 = vset.pattern.permute.xlu0 0
          %644 = vperm.xlu0 %643, %v626
          %v645 = vpop.permute.xlu0 %644
          %v651 = vunpack.c.l.b16 %v619
          %v652 = vunpack.c.l.b16 %v620
          %v653 = vunpack.c.l.b16 %v621
          %v654 = vunpack.c.l.b16 %v622
          %v655 = vpack.c.b16 %v652, %v651
          %v656 = vpack.c.b16 %v654, %v653
          %vm657 = vcmask 261120
          %v659 = vsel %vm657, %v655, 0
          %v662 = vsel %vm657, %v656, 0
          %v665 = vsel %vm657, %v618, 0
          %667 = vmatprep.subr.bf16.mxu0 0
          %668 = vmatpush1.bf16.xpose.msra.mxu0 %v665
          %669 = vmatprep.subr.bf16.mxu0 0
          %670 = vmatpush1.bf16.xpose.msra.mxu0 0
          %671 = vmatprep.subr.bf16.mxu0 0
          %672 = vmatpush1.bf16.xpose.msra.mxu0 0
          %673 = vmatprep.subr.bf16.mxu0 0
          %674 = vmatpush1.bf16.xpose.msra.mxu0 0
          %675 = vmatprep.subr.bf16.mxu0 0
          %676 = vmatpush1.bf16.xpose.msra.mxu0 0
          %677 = vmatprep.subr.bf16.mxu0 0
          %678 = vmatpush1.bf16.xpose.msra.mxu0 0
          %679 = vmatprep.subr.bf16.mxu0 0
          %680 = vmatpush1.bf16.xpose.msra.mxu0 0
          %681 = vmatprep.subr.bf16.mxu0 0
          %682 = vmatpush1.bf16.xpose.msra.mxu0 0
          %683 = vmatprep.subr.bf16.mxu0 0
          %684 = vmatpush1.bf16.xpose.msra.mxu0 0
          %685 = vmatprep.subr.bf16.mxu0 0
          %686 = vmatpush1.bf16.xpose.msra.mxu0 0
          %687 = vmatprep.subr.bf16.mxu0 0
          %688 = vmatpush1.bf16.xpose.msra.mxu0 0
          %689 = vmatprep.subr.bf16.mxu0 0
          %690 = vmatpush1.bf16.xpose.msra.mxu0 0
          %691 = vmatprep.subr.bf16.mxu0 0
          %692 = vmatpush1.bf16.xpose.msra.mxu0 0
          %693 = vmatprep.subr.bf16.mxu0 0
          %694 = vmatpush1.bf16.xpose.msra.mxu0 0
          %695 = vmatprep.subr.bf16.mxu0 0
          %696 = vmatpush1.bf16.xpose.msra.mxu0 0
          %697 = vmatprep.subr.bf16.mxu0 0
          %698 = vmatpush1.bf16.xpose.msra.mxu0 0
          %699 = vmatprep.mubr.bf16.mxu0 0
          %700 = vmatmul.mubr.bf16.gmra.mrb[0].mxu0 %v659
          %v701 = vpop.f32.mrb[0].mxu0
          %v702 = vadd.f32 %v630, %v701
          %v703 = vpop.f32.mrb[0].mxu0
          %v704 = vpop.f32.mrb[0].mxu0
          %v705 = vadd.f32 %v635, %v704
          %v706 = vpop.f32.mrb[0].mxu0
          %707 = vmatprep.mubr.bf16.mxu0 0
          %708 = vmatmul.mubr.bf16.gmra.mrb[0].mxu0 %v662
          %v709 = vpop.f32.mrb[0].mxu0
          %v710 = vadd.f32 %v640, %v709
          %v711 = vpop.f32.mrb[0].mxu0
          %v712 = vpop.f32.mrb[0].mxu0
          %v713 = vadd.f32 %v645, %v712
          %v714 = vpop.f32.mrb[0].mxu0
          %715 = vdwg.mxu0
          %v716 = vpack.c.bf16 %v702, %v702
          %v717 = vpack.c.bf16 %v705, %v705
          %v718 = vpack.c.bf16 %v710, %v710
          %v719 = vpack.c.bf16 %v713, %v713
          %vm720 = vcmask 60416
          %721 = vst.msk [vmem:[#allocation2] sm:$0xf] %vm720, %v716
          %722 = vst.msk [vmem:[#allocation2 + $0x4] sm:$0xf] %vm720, %v717
          %723 = vst.msk [vmem:[#allocation2 + $0x8] sm:$0xf] %vm720, %v718
          %724 = vst.msk [vmem:[#allocation2 + $0xc] sm:$0xf] %vm720, %v719
          %v725 = vld [vmem:[%s6] sm:$0xf]
          %v726 = vld [vmem:[%s6 + $0x4] sm:$0xf]
          %v727 = vld [vmem:[%s6 + $0x8] sm:$0xf]
          %v728 = vld [vmem:[%s6 + $0xc] sm:$0xf]
          %v729 = vld [vmem:[%s7] sm:$0xff]
          %v730 = vld [vmem:[%s7 + $0x8] sm:$0xff]
          %v731 = vld [vmem:[%s7 + $0x10] sm:$0xff]
          %v732 = vld [vmem:[%s7 + $0x18] sm:$0xff]
          %734 = vset.pattern.permute.xlu0 0
          %735 = vperm.xlu0 %734, %v729
          %v736 = vpop.permute.xlu0 %735
          %739 = vset.pattern.permute.xlu0 0
          %740 = vperm.xlu0 %739, %v730
          %v741 = vpop.permute.xlu0 %740
          %744 = vset.pattern.permute.xlu0 0
          %745 = vperm.xlu0 %744, %v731
          %v746 = vpop.permute.xlu0 %745
          %749 = vset.pattern.permute.xlu0 0
          %750 = vperm.xlu0 %749, %v732
          %v751 = vpop.permute.xlu0 %750
          %v757 = vunpack.c.l.b16 %v725
          %v758 = vunpack.c.l.b16 %v726
          %v759 = vunpack.c.l.b16 %v727
          %v760 = vunpack.c.l.b16 %v728
          %v761 = vpack.c.b16 %v758, %v757
          %v762 = vpack.c.b16 %v760, %v759
          %v764 = vsel %vm657, %v761, 0
          %v767 = vsel %vm657, %v762, 0
          %769 = vmatprep.subr.bf16.mxu0 0
          %770 = vmatpush1.bf16.xpose.msra.mxu0 %v665
          %771 = vmatprep.subr.bf16.mxu0 0
          %772 = vmatpush1.bf16.xpose.msra.mxu0 0
          %773 = vmatprep.subr.bf16.mxu0 0
          %774 = vmatpush1.bf16.xpose.msra.mxu0 0
          %775 = vmatprep.subr.bf16.mxu0 0
          %776 = vmatpush1.bf16.xpose.msra.mxu0 0
          %777 = vmatprep.subr.bf16.mxu0 0
          %778 = vmatpush1.bf16.xpose.msra.mxu0 0
          %779 = vmatprep.subr.bf16.mxu0 0
          %780 = vmatpush1.bf16.xpose.msra.mxu0 0
          %781 = vmatprep.subr.bf16.mxu0 0
          %782 = vmatpush1.bf16.xpose.msra.mxu0 0
          %783 = vmatprep.subr.bf16.mxu0 0
          %784 = vmatpush1.bf16.xpose.msra.mxu0 0
          %785 = vmatprep.subr.bf16.mxu0 0
          %786 = vmatpush1.bf16.xpose.msra.mxu0 0
          %787 = vmatprep.subr.bf16.mxu0 0
          %788 = vmatpush1.bf16.xpose.msra.mxu0 0
          %789 = vmatprep.subr.bf16.mxu0 0
          %790 = vmatpush1.bf16.xpose.msra.mxu0 0
          %791 = vmatprep.subr.bf16.mxu0 0
          %792 = vmatpush1.bf16.xpose.msra.mxu0 0
          %793 = vmatprep.subr.bf16.mxu0 0
          %794 = vmatpush1.bf16.xpose.msra.mxu0 0
          %795 = vmatprep.subr.bf16.mxu0 0
          %796 = vmatpush1.bf16.xpose.msra.mxu0 0
          %797 = vmatprep.subr.bf16.mxu0 0
          %798 = vmatpush1.bf16.xpose.msra.mxu0 0
          %799 = vmatprep.subr.bf16.mxu0 0
          %800 = vmatpush1.bf16.xpose.msra.mxu0 0
          %801 = vmatprep.mubr.bf16.mxu0 0
          %802 = vmatmul.mubr.bf16.gmra.mrb[0].mxu0 %v764
          %v803 = vpop.f32.mrb[0].mxu0
          %v804 = vadd.f32 %v736, %v803
          %v805 = vpop.f32.mrb[0].mxu0
          %v806 = vpop.f32.mrb[0].mxu0
          %v807 = vadd.f32 %v741, %v806
          %v808 = vpop.f32.mrb[0].mxu0
          %809 = vmatprep.mubr.bf16.mxu0 0
          %810 = vmatmul.mubr.bf16.gmra.mrb[0].mxu0 %v767
          %v811 = vpop.f32.mrb[0].mxu0
          %v812 = vadd.f32 %v746, %v811
          %v813 = vpop.f32.mrb[0].mxu0
          %v814 = vpop.f32.mrb[0].mxu0
          %v815 = vadd.f32 %v751, %v814
          %v816 = vpop.f32.mrb[0].mxu0
          %817 = vdwg.mxu0
          %v818 = vpack.c.bf16 %v804, %v804
          %v819 = vpack.c.bf16 %v807, %v807
          %v820 = vpack.c.bf16 %v812, %v812
          %v821 = vpack.c.bf16 %v815, %v815
          %822 = vst.msk [vmem:[#allocation3] sm:$0xf] %vm720, %v818
          %823 = vst.msk [vmem:[#allocation3 + $0x4] sm:$0xf] %vm720, %v819
          %824 = vst.msk [vmem:[#allocation3 + $0x8] sm:$0xf] %vm720, %v820
          %825 = vst.msk [vmem:[#allocation3 + $0xc] sm:$0xf] %vm720, %v821
        $region96: #{tpu_custom_call.1} parent=91 // pred_fallthru
          _
        %v826 = vld [vmem:[%s608] sm:$0xff]
        %v827 = vld [vmem:[%s2] sm:$0xf]
        %v828 = vld [vmem:[%s2 + $0x4] sm:$0xf]
        %v829 = vld [vmem:[%s2 + $0x8] sm:$0xf]
        %v830 = vld [vmem:[%s2 + $0xc] sm:$0xf]
        %v831 = vpack.c.bf16 %v826, %v826
        %v832 = vld [vmem:[%s3] sm:$0xff]
        %v833 = vld [vmem:[%s3 + $0x8] sm:$0xff]
        %v834 = vld [vmem:[%s3 + $0x10] sm:$0xff]
        %v835 = vld [vmem:[%s3 + $0x18] sm:$0xff]
        %837 = vset.pattern.permute.xlu0 0
        %838 = vperm.xlu0 %837, %v832
        %v839 = vpop.permute.xlu0 %838
        %842 = vset.pattern.permute.xlu0 0
        %843 = vperm.xlu0 %842, %v833
        %v844 = vpop.permute.xlu0 %843
        %847 = vset.pattern.permute.xlu0 0
        %848 = vperm.xlu0 %847, %v834
        %v849 = vpop.permute.xlu0 %848
        %852 = vset.pattern.permute.xlu0 0
        %853 = vperm.xlu0 %852, %v835
        %v854 = vpop.permute.xlu0 %853
        %v860 = vunpack.c.l.b16 %v827
        %v861 = vunpack.c.l.b16 %v828
        %v862 = vunpack.c.l.b16 %v829
        %v863 = vunpack.c.l.b16 %v830
        %v864 = vpack.c.b16 %v861, %v860
        %v865 = vpack.c.b16 %v863, %v862
        %vm866 = vcmask 261120
        %v868 = vsel %vm866, %v864, 0
        %v871 = vsel %vm866, %v865, 0
        %v874 = vsel %vm866, %v831, 0
        %876 = vmatprep.subr.bf16.mxu0 0
        %877 = vmatpush1.bf16.xpose.msra.mxu0 %v874
        %878 = vmatprep.subr.bf16.mxu0 0
        %879 = vmatpush1.bf16.xpose.msra.mxu0 0
        %880 = vmatprep.subr.bf16.mxu0 0
        %881 = vmatpush1.bf16.xpose.msra.mxu0 0
        %882 = vmatprep.subr.bf16.mxu0 0
        %883 = vmatpush1.bf16.xpose.msra.mxu0 0
        %884 = vmatprep.subr.bf16.mxu0 0
        %885 = vmatpush1.bf16.xpose.msra.mxu0 0
        %886 = vmatprep.subr.bf16.mxu0 0
        %887 = vmatpush1.bf16.xpose.msra.mxu0 0
        %888 = vmatprep.subr.bf16.mxu0 0
        %889 = vmatpush1.bf16.xpose.msra.mxu0 0
        %890 = vmatprep.subr.bf16.mxu0 0
        %891 = vmatpush1.bf16.xpose.msra.mxu0 0
        %892 = vmatprep.subr.bf16.mxu0 0
        %893 = vmatpush1.bf16.xpose.msra.mxu0 0
        %894 = vmatprep.subr.bf16.mxu0 0
        %895 = vmatpush1.bf16.xpose.msra.mxu0 0
        %896 = vmatprep.subr.bf16.mxu0 0
        %897 = vmatpush1.bf16.xpose.msra.mxu0 0
        %898 = vmatprep.subr.bf16.mxu0 0
        %899 = vmatpush1.bf16.xpose.msra.mxu0 0
        %900 = vmatprep.subr.bf16.mxu0 0
        %901 = vmatpush1.bf16.xpose.msra.mxu0 0
        %902 = vmatprep.subr.bf16.mxu0 0
        %903 = vmatpush1.bf16.xpose.msra.mxu0 0
        %904 = vmatprep.subr.bf16.mxu0 0
        %905 = vmatpush1.bf16.xpose.msra.mxu0 0
        %906 = vmatprep.subr.bf16.mxu0 0
        %907 = vmatpush1.bf16.xpose.msra.mxu0 0
        %908 = vmatprep.mubr.bf16.mxu0 0
        %909 = vmatmul.mubr.bf16.gmra.mrb[0].mxu0 %v868
        %v910 = vpop.f32.mrb[0].mxu0
        %v911 = vadd.f32 %v839, %v910
        %v912 = vpop.f32.mrb[0].mxu0
        %v913 = vpop.f32.mrb[0].mxu0
        %v914 = vadd.f32 %v844, %v913
        %v915 = vpop.f32.mrb[0].mxu0
        %916 = vmatprep.mubr.bf16.mxu0 0
        %917 = vmatmul.mubr.bf16.gmra.mrb[0].mxu0 %v871
        %v918 = vpop.f32.mrb[0].mxu0
        %v919 = vadd.f32 %v849, %v918
        %v920 = vpop.f32.mrb[0].mxu0
        %v921 = vpop.f32.mrb[0].mxu0
        %v922 = vadd.f32 %v854, %v921
        %v923 = vpop.f32.mrb[0].mxu0
        %924 = vdwg.mxu0
        %925 = vxpose.xlu0.b32.start [1/16] %v911, 128
        %926 = vxpose.xlu0.b32.cont [2/16] 0.0, 128
        %927 = vxpose.xlu0.b32.cont [3/16] 0.0, 128
        %928 = vxpose.xlu0.b32.cont [4/16] 0.0, 128
        %929 = vxpose.xlu0.b32.cont [5/16] 0.0, 128
        %930 = vxpose.xlu0.b32.cont [6/16] 0.0, 128
        %931 = vxpose.xlu0.b32.cont [7/16] 0.0, 128
        %932 = vxpose.xlu0.b32.cont [8/16] 0.0, 128
        %933 = vxpose.xlu0.b32.cont [9/16] 0.0, 128
        %934 = vxpose.xlu0.b32.cont [10/16] 0.0, 128
        %935 = vxpose.xlu0.b32.cont [11/16] 0.0, 128
        %936 = vxpose.xlu0.b32.cont [12/16] 0.0, 128
        %937 = vxpose.xlu0.b32.cont [13/16] 0.0, 128
        %938 = vxpose.xlu0.b32.cont [14/16] 0.0, 128
        %939 = vxpose.xlu0.b32.cont [15/16] 0.0, 128
        %940 = vxpose.xlu0.b32.end [16/16] 0.0, 128
        %v941 = vpop.trf.xlu0
        %v942 = vpop.trf.xlu0
        %v943 = vpop.trf.xlu0
        %v944 = vpop.trf.xlu0
        %v945 = vpop.trf.xlu0
        %v946 = vpop.trf.xlu0
        %v947 = vpop.trf.xlu0
        %v948 = vpop.trf.xlu0
        %v949 = vpop.trf.xlu0
        %v950 = vpop.trf.xlu0
        %v951 = vpop.trf.xlu0
        %v952 = vpop.trf.xlu0
        %v953 = vpop.trf.xlu0
        %v954 = vpop.trf.xlu0
        %v955 = vpop.trf.xlu0
        %v956 = vpop.trf.xlu0
        %957 = vxpose.xlu0.b32.start [1/16] %v914, 128
        %958 = vxpose.xlu0.b32.cont [2/16] 0.0, 128
        %959 = vxpose.xlu0.b32.cont [3/16] 0.0, 128
        %960 = vxpose.xlu0.b32.cont [4/16] 0.0, 128
        %961 = vxpose.xlu0.b32.cont [5/16] 0.0, 128
        %962 = vxpose.xlu0.b32.cont [6/16] 0.0, 128
        %963 = vxpose.xlu0.b32.cont [7/16] 0.0, 128
        %964 = vxpose.xlu0.b32.cont [8/16] 0.0, 128
        %965 = vxpose.xlu0.b32.cont [9/16] 0.0, 128
        %966 = vxpose.xlu0.b32.cont [10/16] 0.0, 128
        %967 = vxpose.xlu0.b32.cont [11/16] 0.0, 128
        %968 = vxpose.xlu0.b32.cont [12/16] 0.0, 128
        %969 = vxpose.xlu0.b32.cont [13/16] 0.0, 128
        %970 = vxpose.xlu0.b32.cont [14/16] 0.0, 128
        %971 = vxpose.xlu0.b32.cont [15/16] 0.0, 128
        %972 = vxpose.xlu0.b32.end [16/16] 0.0, 128
        %v973 = vpop.trf.xlu0
        %v974 = vpop.trf.xlu0
        %v975 = vpop.trf.xlu0
        %v976 = vpop.trf.xlu0
        %v977 = vpop.trf.xlu0
        %v978 = vpop.trf.xlu0
        %v979 = vpop.trf.xlu0
        %v980 = vpop.trf.xlu0
        %v981 = vpop.trf.xlu0
        %v982 = vpop.trf.xlu0
        %v983 = vpop.trf.xlu0
        %v984 = vpop.trf.xlu0
        %v985 = vpop.trf.xlu0
        %v986 = vpop.trf.xlu0
        %v987 = vpop.trf.xlu0
        %v988 = vpop.trf.xlu0
        %989 = vxpose.xlu0.b32.start [1/16] %v919, 128
        %990 = vxpose.xlu0.b32.cont [2/16] 0.0, 128
        %991 = vxpose.xlu0.b32.cont [3/16] 0.0, 128
        %992 = vxpose.xlu0.b32.cont [4/16] 0.0, 128
        %993 = vxpose.xlu0.b32.cont [5/16] 0.0, 128
        %994 = vxpose.xlu0.b32.cont [6/16] 0.0, 128
        %995 = vxpose.xlu0.b32.cont [7/16] 0.0, 128
        %996 = vxpose.xlu0.b32.cont [8/16] 0.0, 128
        %997 = vxpose.xlu0.b32.cont [9/16] 0.0, 128
        %998 = vxpose.xlu0.b32.cont [10/16] 0.0, 128
        %999 = vxpose.xlu0.b32.cont [11/16] 0.0, 128
        %1000 = vxpose.xlu0.b32.cont [12/16] 0.0, 128
        %1001 = vxpose.xlu0.b32.cont [13/16] 0.0, 128
        %1002 = vxpose.xlu0.b32.cont [14/16] 0.0, 128
        %1003 = vxpose.xlu0.b32.cont [15/16] 0.0, 128
        %1004 = vxpose.xlu0.b32.end [16/16] 0.0, 128
        %v1005 = vpop.trf.xlu0
        %v1006 = vpop.trf.xlu0
        %v1007 = vpop.trf.xlu0
        %v1008 = vpop.trf.xlu0
        %v1009 = vpop.trf.xlu0
        %v1010 = vpop.trf.xlu0
        %v1011 = vpop.trf.xlu0
        %v1012 = vpop.trf.xlu0
        %v1013 = vpop.trf.xlu0
        %v1014 = vpop.trf.xlu0
        %v1015 = vpop.trf.xlu0
        %v1016 = vpop.trf.xlu0
        %v1017 = vpop.trf.xlu0
        %v1018 = vpop.trf.xlu0
        %v1019 = vpop.trf.xlu0
        %v1020 = vpop.trf.xlu0
        %1021 = vxpose.xlu0.b32.start [1/16] %v922, 128
        %1022 = vxpose.xlu0.b32.cont [2/16] 0.0, 128
        %1023 = vxpose.xlu0.b32.cont [3/16] 0.0, 128
        %1024 = vxpose.xlu0.b32.cont [4/16] 0.0, 128
        %1025 = vxpose.xlu0.b32.cont [5/16] 0.0, 128
        %1026 = vxpose.xlu0.b32.cont [6/16] 0.0, 128
        %1027 = vxpose.xlu0.b32.cont [7/16] 0.0, 128
        %1028 = vxpose.xlu0.b32.cont [8/16] 0.0, 128
        %1029 = vxpose.xlu0.b32.cont [9/16] 0.0, 128
        %1030 = vxpose.xlu0.b32.cont [10/16] 0.0, 128
        %1031 = vxpose.xlu0.b32.cont [11/16] 0.0, 128
        %1032 = vxpose.xlu0.b32.cont [12/16] 0.0, 128
        %1033 = vxpose.xlu0.b32.cont [13/16] 0.0, 128
        %1034 = vxpose.xlu0.b32.cont [14/16] 0.0, 128
        %1035 = vxpose.xlu0.b32.cont [15/16] 0.0, 128
        %1036 = vxpose.xlu0.b32.end [16/16] 0.0, 128
        %v1037 = vpop.trf.xlu0
        %v1038 = vpop.trf.xlu0
        %v1039 = vpop.trf.xlu0
        %v1040 = vpop.trf.xlu0
        %v1041 = vpop.trf.xlu0
        %v1042 = vpop.trf.xlu0
        %v1043 = vpop.trf.xlu0
        %v1044 = vpop.trf.xlu0
        %v1045 = vpop.trf.xlu0
        %v1046 = vpop.trf.xlu0
        %v1047 = vpop.trf.xlu0
        %v1048 = vpop.trf.xlu0
        %v1049 = vpop.trf.xlu0
        %v1050 = vpop.trf.xlu0
        %v1051 = vpop.trf.xlu0
        %v1052 = vpop.trf.xlu0
        %v1053 = vpack.c.bf16 %v941, %v941
        %v1054 = vpack.c.bf16 %v973, %v973
        %v1055 = vpack.c.bf16 %v1005, %v1005
        %v1056 = vpack.c.bf16 %v1037, %v1037
        %v1057 = vld [vmem:[#allocation2] sm:$0xf]
        %v1058 = vld [vmem:[#allocation2 + $0x4] sm:$0xf]
        %v1059 = vld [vmem:[#allocation2 + $0x8] sm:$0xf]
        %v1060 = vld [vmem:[#allocation2 + $0xc] sm:$0xf]
        %v1061 = vld [vmem:[#allocation3] sm:$0xf]
        %v1062 = vld [vmem:[#allocation3 + $0x4] sm:$0xf]
        %v1063 = vld [vmem:[#allocation3 + $0x8] sm:$0xf]
        %v1064 = vld [vmem:[#allocation3 + $0xc] sm:$0xf]
        %vm1065 = vcmask 64512
        %v1067 = vsel %vm1065, %v1053, 0
        %vm1069 = vcmask 1043456
        %v1071 = vsel %vm1069, %v1057, 0
        %1073 = vmatprep.subr.bf16.mxu0 0
        %1074 = vmatpush1.bf16.msra.mxu0 %v1071
        %1075 = vmatprep.subr.bf16.mxu0 0
        %1076 = vmatpush1.bf16.msra.mxu0 0
        %1077 = vmatprep.subr.bf16.mxu0 0
        %1078 = vmatpush1.bf16.msra.mxu0 0
        %1079 = vmatprep.subr.bf16.mxu0 0
        %1080 = vmatpush1.bf16.msra.mxu0 0
        %1081 = vmatprep.subr.bf16.mxu0 0
        %1082 = vmatpush1.bf16.msra.mxu0 0
        %1083 = vmatprep.subr.bf16.mxu0 0
        %1084 = vmatpush1.bf16.msra.mxu0 0
        %1085 = vmatprep.subr.bf16.mxu0 0
        %1086 = vmatpush1.bf16.msra.mxu0 0
        %1087 = vmatprep.subr.bf16.mxu0 0
        %1088 = vmatpush1.bf16.msra.mxu0 0
        %1089 = vmatprep.subr.bf16.mxu0 0
        %1090 = vmatpush1.bf16.msra.mxu0 0
        %1091 = vmatprep.subr.bf16.mxu0 0
        %1092 = vmatpush1.bf16.msra.mxu0 0
        %1093 = vmatprep.subr.bf16.mxu0 0
        %1094 = vmatpush1.bf16.msra.mxu0 0
        %1095 = vmatprep.subr.bf16.mxu0 0
        %1096 = vmatpush1.bf16.msra.mxu0 0
        %1097 = vmatprep.subr.bf16.mxu0 0
        %1098 = vmatpush1.bf16.msra.mxu0 0
        %1099 = vmatprep.subr.bf16.mxu0 0
        %1100 = vmatpush1.bf16.msra.mxu0 0
        %1101 = vmatprep.subr.bf16.mxu0 0
        %1102 = vmatpush1.bf16.msra.mxu0 0
        %1103 = vmatprep.subr.bf16.mxu0 0
        %1104 = vmatpush1.bf16.msra.mxu0 0
        %1105 = vmatprep.mubr.bf16.mxu0 0
        %1106 = vmatmul.mubr.bf16.gmra.mrb[0].mxu0 %v1067
        %v1107 = vpop.f32.mrb[0].mxu0
        %v1108 = vadd.f32 0.0, %v1107
        %v1109 = vpop.f32.mrb[0].mxu0
        %v1110 = vpop.f32.mrb[0].mxu0
        %v1111 = vpop.f32.mrb[0].mxu0
        %1112 = vdwg.mxu0
        %v1114 = vsel %vm1065, %v1054, 0
        %v1117 = vsel %vm1069, %v1058, 0
        %1119 = vmatprep.subr.bf16.mxu0 0
        %1120 = vmatpush1.bf16.msra.mxu0 %v1117
        %1121 = vmatprep.subr.bf16.mxu0 0
        %1122 = vmatpush1.bf16.msra.mxu0 0
        %1123 = vmatprep.subr.bf16.mxu0 0
        %1124 = vmatpush1.bf16.msra.mxu0 0
        %1125 = vmatprep.subr.bf16.mxu0 0
        %1126 = vmatpush1.bf16.msra.mxu0 0
        %1127 = vmatprep.subr.bf16.mxu0 0
        %1128 = vmatpush1.bf16.msra.mxu0 0
        %1129 = vmatprep.subr.bf16.mxu0 0
        %1130 = vmatpush1.bf16.msra.mxu0 0
        %1131 = vmatprep.subr.bf16.mxu0 0
        %1132 = vmatpush1.bf16.msra.mxu0 0
        %1133 = vmatprep.subr.bf16.mxu0 0
        %1134 = vmatpush1.bf16.msra.mxu0 0
        %1135 = vmatprep.subr.bf16.mxu0 0
        %1136 = vmatpush1.bf16.msra.mxu0 0
        %1137 = vmatprep.subr.bf16.mxu0 0
        %1138 = vmatpush1.bf16.msra.mxu0 0
        %1139 = vmatprep.subr.bf16.mxu0 0
        %1140 = vmatpush1.bf16.msra.mxu0 0
        %1141 = vmatprep.subr.bf16.mxu0 0
        %1142 = vmatpush1.bf16.msra.mxu0 0
        %1143 = vmatprep.subr.bf16.mxu0 0
        %1144 = vmatpush1.bf16.msra.mxu0 0
        %1145 = vmatprep.subr.bf16.mxu0 0
        %1146 = vmatpush1.bf16.msra.mxu0 0
        %1147 = vmatprep.subr.bf16.mxu0 0
        %1148 = vmatpush1.bf16.msra.mxu0 0
        %1149 = vmatprep.subr.bf16.mxu0 0
        %1150 = vmatpush1.bf16.msra.mxu0 0
        %1151 = vmatprep.mubr.bf16.mxu0 0
        %1152 = vmatmul.mubr.bf16.gmra.mrb[0].mxu0 %v1114
        %v1153 = vpop.f32.mrb[0].mxu0
        %v1154 = vadd.f32 0.0, %v1153
        %v1155 = vpop.f32.mrb[0].mxu0
        %v1156 = vpop.f32.mrb[0].mxu0
        %v1157 = vpop.f32.mrb[0].mxu0
        %1158 = vdwg.mxu0
        %v1160 = vsel %vm1065, %v1055, 0
        %v1163 = vsel %vm1069, %v1059, 0
        %1165 = vmatprep.subr.bf16.mxu0 0
        %1166 = vmatpush1.bf16.msra.mxu0 %v1163
        %1167 = vmatprep.subr.bf16.mxu0 0
        %1168 = vmatpush1.bf16.msra.mxu0 0
        %1169 = vmatprep.subr.bf16.mxu0 0
        %1170 = vmatpush1.bf16.msra.mxu0 0
        %1171 = vmatprep.subr.bf16.mxu0 0
        %1172 = vmatpush1.bf16.msra.mxu0 0
        %1173 = vmatprep.subr.bf16.mxu0 0
        %1174 = vmatpush1.bf16.msra.mxu0 0
        %1175 = vmatprep.subr.bf16.mxu0 0
        %1176 = vmatpush1.bf16.msra.mxu0 0
        %1177 = vmatprep.subr.bf16.mxu0 0
        %1178 = vmatpush1.bf16.msra.mxu0 0
        %1179 = vmatprep.subr.bf16.mxu0 0
        %1180 = vmatpush1.bf16.msra.mxu0 0
        %1181 = vmatprep.subr.bf16.mxu0 0
        %1182 = vmatpush1.bf16.msra.mxu0 0
        %1183 = vmatprep.subr.bf16.mxu0 0
        %1184 = vmatpush1.bf16.msra.mxu0 0
        %1185 = vmatprep.subr.bf16.mxu0 0
        %1186 = vmatpush1.bf16.msra.mxu0 0
        %1187 = vmatprep.subr.bf16.mxu0 0
        %1188 = vmatpush1.bf16.msra.mxu0 0
        %1189 = vmatprep.subr.bf16.mxu0 0
        %1190 = vmatpush1.bf16.msra.mxu0 0
        %1191 = vmatprep.subr.bf16.mxu0 0
        %1192 = vmatpush1.bf16.msra.mxu0 0
        %1193 = vmatprep.subr.bf16.mxu0 0
        %1194 = vmatpush1.bf16.msra.mxu0 0
        %1195 = vmatprep.subr.bf16.mxu0 0
        %1196 = vmatpush1.bf16.msra.mxu0 0
        %1197 = vmatprep.mubr.bf16.mxu0 0
        %1198 = vmatmul.mubr.bf16.gmra.mrb[0].mxu0 %v1160
        %v1199 = vpop.f32.mrb[0].mxu0
        %v1200 = vadd.f32 0.0, %v1199
        %v1201 = vpop.f32.mrb[0].mxu0
        %v1202 = vpop.f32.mrb[0].mxu0
        %v1203 = vpop.f32.mrb[0].mxu0
        %1204 = vdwg.mxu0
        %v1206 = vsel %vm1065, %v1056, 0
        %v1209 = vsel %vm1069, %v1060, 0
        %1211 = vmatprep.subr.bf16.mxu0 0
        %1212 = vmatpush1.bf16.msra.mxu0 %v1209
        %1213 = vmatprep.subr.bf16.mxu0 0
        %1214 = vmatpush1.bf16.msra.mxu0 0
        %1215 = vmatprep.subr.bf16.mxu0 0
        %1216 = vmatpush1.bf16.msra.mxu0 0
        %1217 = vmatprep.subr.bf16.mxu0 0
        %1218 = vmatpush1.bf16.msra.mxu0 0
        %1219 = vmatprep.subr.bf16.mxu0 0
        %1220 = vmatpush1.bf16.msra.mxu0 0
        %1221 = vmatprep.subr.bf16.mxu0 0
        %1222 = vmatpush1.bf16.msra.mxu0 0
        %1223 = vmatprep.subr.bf16.mxu0 0
        %1224 = vmatpush1.bf16.msra.mxu0 0
        %1225 = vmatprep.subr.bf16.mxu0 0
        %1226 = vmatpush1.bf16.msra.mxu0 0
        %1227 = vmatprep.subr.bf16.mxu0 0
        %1228 = vmatpush1.bf16.msra.mxu0 0
        %1229 = vmatprep.subr.bf16.mxu0 0
        %1230 = vmatpush1.bf16.msra.mxu0 0
        %1231 = vmatprep.subr.bf16.mxu0 0
        %1232 = vmatpush1.bf16.msra.mxu0 0
        %1233 = vmatprep.subr.bf16.mxu0 0
        %1234 = vmatpush1.bf16.msra.mxu0 0
        %1235 = vmatprep.subr.bf16.mxu0 0
        %1236 = vmatpush1.bf16.msra.mxu0 0
        %1237 = vmatprep.subr.bf16.mxu0 0
        %1238 = vmatpush1.bf16.msra.mxu0 0
        %1239 = vmatprep.subr.bf16.mxu0 0
        %1240 = vmatpush1.bf16.msra.mxu0 0
        %1241 = vmatprep.subr.bf16.mxu0 0
        %1242 = vmatpush1.bf16.msra.mxu0 0
        %1243 = vmatprep.mubr.bf16.mxu0 0
        %1244 = vmatmul.mubr.bf16.gmra.mrb[0].mxu0 %v1206
        %v1245 = vpop.f32.mrb[0].mxu0
        %v1246 = vadd.f32 0.0, %v1245
        %v1247 = vpop.f32.mrb[0].mxu0
        %v1248 = vpop.f32.mrb[0].mxu0
        %v1249 = vpop.f32.mrb[0].mxu0
        %1250 = vdwg.mxu0
        %v1251 = vsel %vm1065, %v1108, -inf
        %1252 = vmax.xlane.f32.xlu0 %v1251
        %v1253 = vpop.xlane.xlu0 %1252
        %v1254 = vsel %vm1065, %v1154, -inf
        %1255 = vmax.xlane.f32.xlu0 %v1254
        %v1256 = vpop.xlane.xlu0 %1255
        %v1257 = vsel %vm1065, %v1200, -inf
        %1258 = vmax.xlane.f32.xlu0 %v1257
        %v1259 = vpop.xlane.xlu0 %1258
        %v1260 = vsel %vm1065, %v1246, -inf
        %1261 = vmax.xlane.f32.xlu0 %v1260
        %v1262 = vpop.xlane.xlu0 %1261
        %v1263 = vsub.f32 -inf, %v1253
        %v1264 = vsub.f32 -inf, %v1256
        %v1265 = vsub.f32 -inf, %v1259
        %v1266 = vsub.f32 -inf, %v1262
        %v1267 = vmul.f32 %v1263, 1.442695
        %v1268 = vpow.pop %v1267
        %v1269 = vmul.f32 %v1264, 1.442695
        %v1270 = vpow.pop %v1269
        %v1271 = vmul.f32 %v1265, 1.442695
        %v1272 = vpow.pop %v1271
        %v1273 = vmul.f32 %v1266, 1.442695
        %v1274 = vpow.pop %v1273
        %v1275 = vsub.f32 %v1108, %v1253
        %v1276 = vsub.f32 %v1154, %v1256
        %v1277 = vsub.f32 %v1200, %v1259
        %v1278 = vsub.f32 %v1246, %v1262
        %v1279 = vmul.f32 %v1275, 1.442695
        %v1280 = vpow.pop %v1279
        %v1281 = vmul.f32 %v1276, 1.442695
        %v1282 = vpow.pop %v1281
        %v1283 = vmul.f32 %v1277, 1.442695
        %v1284 = vpow.pop %v1283
        %v1285 = vmul.f32 %v1278, 1.442695
        %v1286 = vpow.pop %v1285
        %v1287 = vmul.f32 %v1268, 0.0
        %v1288 = vmul.f32 %v1270, 0.0
        %v1289 = vmul.f32 %v1272, 0.0
        %v1290 = vmul.f32 %v1274, 0.0
        %v1291 = vsel %vm1065, %v1280, 0.0
        %1292 = vadd.xlane.f32.xlu0 %v1291
        %v1293 = vpop.xlane.xlu0 %1292
        %v1294 = vsel %vm1065, %v1282, 0.0
        %1295 = vadd.xlane.f32.xlu0 %v1294
        %v1296 = vpop.xlane.xlu0 %1295
        %v1297 = vsel %vm1065, %v1284, 0.0
        %1298 = vadd.xlane.f32.xlu0 %v1297
        %v1299 = vpop.xlane.xlu0 %1298
        %v1300 = vsel %vm1065, %v1286, 0.0
        %1301 = vadd.xlane.f32.xlu0 %v1300
        %v1302 = vpop.xlane.xlu0 %1301
        %v1303 = vadd.f32 %v1287, %v1293
        %v1304 = vadd.f32 %v1288, %v1296
        %v1305 = vadd.f32 %v1289, %v1299
        %v1306 = vadd.f32 %v1290, %v1302
        %v1307 = vpack.c.bf16 %v1280, %v1280
        %v1308 = vpack.c.bf16 %v1282, %v1282
        %v1309 = vpack.c.bf16 %v1284, %v1284
        %v1310 = vpack.c.bf16 %v1286, %v1286
        %v1312 = vsel %vm1065, %v1307, 0
        %v1315 = vsel %vm1065, %v1061, 0
        %1317 = vmatprep.subr.bf16.mxu0 0
        %1318 = vmatpush1.bf16.xpose.msra.mxu0 %v1315
        %1319 = vmatprep.subr.bf16.mxu0 0
        %1320 = vmatpush1.bf16.xpose.msra.mxu0 0
        %1321 = vmatprep.subr.bf16.mxu0 0
        %1322 = vmatpush1.bf16.xpose.msra.mxu0 0
        %1323 = vmatprep.subr.bf16.mxu0 0
        %1324 = vmatpush1.bf16.xpose.msra.mxu0 0
        %1325 = vmatprep.subr.bf16.mxu0 0
        %1326 = vmatpush1.bf16.xpose.msra.mxu0 0
        %1327 = vmatprep.subr.bf16.mxu0 0
        %1328 = vmatpush1.bf16.xpose.msra.mxu0 0
        %1329 = vmatprep.subr.bf16.mxu0 0
        %1330 = vmatpush1.bf16.xpose.msra.mxu0 0
        %1331 = vmatprep.subr.bf16.mxu0 0
        %1332 = vmatpush1.bf16.xpose.msra.mxu0 0
        %1333 = vmatprep.subr.bf16.mxu0 0
        %1334 = vmatpush1.bf16.xpose.msra.mxu0 0
        %1335 = vmatprep.subr.bf16.mxu0 0
        %1336 = vmatpush1.bf16.xpose.msra.mxu0 0
        %1337 = vmatprep.subr.bf16.mxu0 0
        %1338 = vmatpush1.bf16.xpose.msra.mxu0 0
        %1339 = vmatprep.subr.bf16.mxu0 0
        %1340 = vmatpush1.bf16.xpose.msra.mxu0 0
        %1341 = vmatprep.subr.bf16.mxu0 0
        %1342 = vmatpush1.bf16.xpose.msra.mxu0 0
        %1343 = vmatprep.subr.bf16.mxu0 0
        %1344 = vmatpush1.bf16.xpose.msra.mxu0 0
        %1345 = vmatprep.subr.bf16.mxu0 0
        %1346 = vmatpush1.bf16.xpose.msra.mxu0 0
        %1347 = vmatprep.subr.bf16.mxu0 0
        %1348 = vmatpush1.bf16.xpose.msra.mxu0 0
        %1349 = vmatprep.mubr.bf16.mxu0 0
        %1350 = vmatmul.mubr.bf16.gmra.mrb[0].mxu0 %v1312
        %v1351 = vpop.f32.mrb[0].mxu0
        %v1352 = vadd.f32 0.0, %v1351
        %v1353 = vpop.f32.mrb[0].mxu0
        %v1354 = vpop.f32.mrb[0].mxu0
        %v1355 = vpop.f32.mrb[0].mxu0
        %1356 = vdwg.mxu0
        %v1358 = vsel %vm1065, %v1308, 0
        %v1361 = vsel %vm1065, %v1062, 0
        %1363 = vmatprep.subr.bf16.mxu0 0
        %1364 = vmatpush1.bf16.xpose.msra.mxu0 %v1361
        %1365 = vmatprep.subr.bf16.mxu0 0
        %1366 = vmatpush1.bf16.xpose.msra.mxu0 0
        %1367 = vmatprep.subr.bf16.mxu0 0
        %1368 = vmatpush1.bf16.xpose.msra.mxu0 0
        %1369 = vmatprep.subr.bf16.mxu0 0
        %1370 = vmatpush1.bf16.xpose.msra.mxu0 0
        %1371 = vmatprep.subr.bf16.mxu0 0
        %1372 = vmatpush1.bf16.xpose.msra.mxu0 0
        %1373 = vmatprep.subr.bf16.mxu0 0
        %1374 = vmatpush1.bf16.xpose.msra.mxu0 0
        %1375 = vmatprep.subr.bf16.mxu0 0
        %1376 = vmatpush1.bf16.xpose.msra.mxu0 0
        %1377 = vmatprep.subr.bf16.mxu0 0
        %1378 = vmatpush1.bf16.xpose.msra.mxu0 0
        %1379 = vmatprep.subr.bf16.mxu0 0
        %1380 = vmatpush1.bf16.xpose.msra.mxu0 0
        %1381 = vmatprep.subr.bf16.mxu0 0
        %1382 = vmatpush1.bf16.xpose.msra.mxu0 0
        %1383 = vmatprep.subr.bf16.mxu0 0
        %1384 = vmatpush1.bf16.xpose.msra.mxu0 0
        %1385 = vmatprep.subr.bf16.mxu0 0
        %1386 = vmatpush1.bf16.xpose.msra.mxu0 0
        %1387 = vmatprep.subr.bf16.mxu0 0
        %1388 = vmatpush1.bf16.xpose.msra.mxu0 0
        %1389 = vmatprep.subr.bf16.mxu0 0
        %1390 = vmatpush1.bf16.xpose.msra.mxu0 0
        %1391 = vmatprep.subr.bf16.mxu0 0
        %1392 = vmatpush1.bf16.xpose.msra.mxu0 0
        %1393 = vmatprep.subr.bf16.mxu0 0
        %1394 = vmatpush1.bf16.xpose.msra.mxu0 0
        %1395 = vmatprep.mubr.bf16.mxu0 0
        %1396 = vmatmul.mubr.bf16.gmra.mrb[0].mxu0 %v1358
        %v1397 = vpop.f32.mrb[0].mxu0
        %v1398 = vadd.f32 0.0, %v1397
        %v1399 = vpop.f32.mrb[0].mxu0
        %v1400 = vpop.f32.mrb[0].mxu0
        %v1401 = vpop.f32.mrb[0].mxu0
        %1402 = vdwg.mxu0
        %v1404 = vsel %vm1065, %v1309, 0
        %v1407 = vsel %vm1065, %v1063, 0
        %1409 = vmatprep.subr.bf16.mxu0 0
        %1410 = vmatpush1.bf16.xpose.msra.mxu0 %v1407
        %1411 = vmatprep.subr.bf16.mxu0 0
        %1412 = vmatpush1.bf16.xpose.msra.mxu0 0
        %1413 = vmatprep.subr.bf16.mxu0 0
        %1414 = vmatpush1.bf16.xpose.msra.mxu0 0
        %1415 = vmatprep.subr.bf16.mxu0 0
        %1416 = vmatpush1.bf16.xpose.msra.mxu0 0
        %1417 = vmatprep.subr.bf16.mxu0 0
        %1418 = vmatpush1.bf16.xpose.msra.mxu0 0
        %1419 = vmatprep.subr.bf16.mxu0 0
        %1420 = vmatpush1.bf16.xpose.msra.mxu0 0
        %1421 = vmatprep.subr.bf16.mxu0 0
        %1422 = vmatpush1.bf16.xpose.msra.mxu0 0
        %1423 = vmatprep.subr.bf16.mxu0 0
        %1424 = vmatpush1.bf16.xpose.msra.mxu0 0
        %1425 = vmatprep.subr.bf16.mxu0 0
        %1426 = vmatpush1.bf16.xpose.msra.mxu0 0
        %1427 = vmatprep.subr.bf16.mxu0 0
        %1428 = vmatpush1.bf16.xpose.msra.mxu0 0
        %1429 = vmatprep.subr.bf16.mxu0 0
        %1430 = vmatpush1.bf16.xpose.msra.mxu0 0
        %1431 = vmatprep.subr.bf16.mxu0 0
        %1432 = vmatpush1.bf16.xpose.msra.mxu0 0
        %1433 = vmatprep.subr.bf16.mxu0 0
        %1434 = vmatpush1.bf16.xpose.msra.mxu0 0
        %1435 = vmatprep.subr.bf16.mxu0 0
        %1436 = vmatpush1.bf16.xpose.msra.mxu0 0
        %1437 = vmatprep.subr.bf16.mxu0 0
        %1438 = vmatpush1.bf16.xpose.msra.mxu0 0
        %1439 = vmatprep.subr.bf16.mxu0 0
        %1440 = vmatpush1.bf16.xpose.msra.mxu0 0
        %1441 = vmatprep.mubr.bf16.mxu0 0
        %1442 = vmatmul.mubr.bf16.gmra.mrb[0].mxu0 %v1404
        %v1443 = vpop.f32.mrb[0].mxu0
        %v1444 = vadd.f32 0.0, %v1443
        %v1445 = vpop.f32.mrb[0].mxu0
        %v1446 = vpop.f32.mrb[0].mxu0
        %v1447 = vpop.f32.mrb[0].mxu0
        %1448 = vdwg.mxu0
        %v1450 = vsel %vm1065, %v1310, 0
        %v1453 = vsel %vm1065, %v1064, 0
        %1455 = vmatprep.subr.bf16.mxu0 0
        %1456 = vmatpush1.bf16.xpose.msra.mxu0 %v1453
        %1457 = vmatprep.subr.bf16.mxu0 0
        %1458 = vmatpush1.bf16.xpose.msra.mxu0 0
        %1459 = vmatprep.subr.bf16.mxu0 0
        %1460 = vmatpush1.bf16.xpose.msra.mxu0 0
        %1461 = vmatprep.subr.bf16.mxu0 0
        %1462 = vmatpush1.bf16.xpose.msra.mxu0 0
        %1463 = vmatprep.subr.bf16.mxu0 0
        %1464 = vmatpush1.bf16.xpose.msra.mxu0 0
        %1465 = vmatprep.subr.bf16.mxu0 0
        %1466 = vmatpush1.bf16.xpose.msra.mxu0 0
        %1467 = vmatprep.subr.bf16.mxu0 0
        %1468 = vmatpush1.bf16.xpose.msra.mxu0 0
        %1469 = vmatprep.subr.bf16.mxu0 0
        %1470 = vmatpush1.bf16.xpose.msra.mxu0 0
        %1471 = vmatprep.subr.bf16.mxu0 0
        %1472 = vmatpush1.bf16.xpose.msra.mxu0 0
        %1473 = vmatprep.subr.bf16.mxu0 0
        %1474 = vmatpush1.bf16.xpose.msra.mxu0 0
        %1475 = vmatprep.subr.bf16.mxu0 0
        %1476 = vmatpush1.bf16.xpose.msra.mxu0 0
        %1477 = vmatprep.subr.bf16.mxu0 0
        %1478 = vmatpush1.bf16.xpose.msra.mxu0 0
        %1479 = vmatprep.subr.bf16.mxu0 0
        %1480 = vmatpush1.bf16.xpose.msra.mxu0 0
        %1481 = vmatprep.subr.bf16.mxu0 0
        %1482 = vmatpush1.bf16.xpose.msra.mxu0 0
        %1483 = vmatprep.subr.bf16.mxu0 0
        %1484 = vmatpush1.bf16.xpose.msra.mxu0 0
        %1485 = vmatprep.subr.bf16.mxu0 0
        %1486 = vmatpush1.bf16.xpose.msra.mxu0 0
        %1487 = vmatprep.mubr.bf16.mxu0 0
        %1488 = vmatmul.mubr.bf16.gmra.mrb[0].mxu0 %v1450
        %v1489 = vpop.f32.mrb[0].mxu0
        %v1490 = vadd.f32 0.0, %v1489
        %v1491 = vpop.f32.mrb[0].mxu0
        %v1492 = vpop.f32.mrb[0].mxu0
        %v1493 = vpop.f32.mrb[0].mxu0
        %1494 = vdwg.mxu0
        %v1495 = vadd.f32 %v1287, %v1352
        %v1496 = vadd.f32 %v1288, %v1398
        %v1497 = vadd.f32 %v1289, %v1444
        %v1498 = vadd.f32 %v1290, %v1490
        %v1499 = vrcp.pop %v1303
        %v1500 = vrcp.pop %v1304
        %v1501 = vrcp.pop %v1305
        %v1502 = vrcp.pop %v1306
        %v1503 = vmul.f32 %v1495, %v1499
        %v1504 = vmul.f32 %v1496, %v1500
        %v1505 = vmul.f32 %v1497, %v1501
        %v1506 = vmul.f32 %v1498, %v1502
        %1507 = vxpose.xlu0.b32.start [1/16] %v1503, 128
        %1508 = vxpose.xlu0.b32.cont [2/16] 0.0, 128
        %1509 = vxpose.xlu0.b32.cont [3/16] 0.0, 128
        %1510 = vxpose.xlu0.b32.cont [4/16] 0.0, 128
        %1511 = vxpose.xlu0.b32.cont [5/16] 0.0, 128
        %1512 = vxpose.xlu0.b32.cont [6/16] 0.0, 128
        %1513 = vxpose.xlu0.b32.cont [7/16] 0.0, 128
        %1514 = vxpose.xlu0.b32.cont [8/16] 0.0, 128
        %1515 = vxpose.xlu0.b32.cont [9/16] 0.0, 128
        %1516 = vxpose.xlu0.b32.cont [10/16] 0.0, 128
        %1517 = vxpose.xlu0.b32.cont [11/16] 0.0, 128
        %1518 = vxpose.xlu0.b32.cont [12/16] 0.0, 128
        %1519 = vxpose.xlu0.b32.cont [13/16] 0.0, 128
        %1520 = vxpose.xlu0.b32.cont [14/16] 0.0, 128
        %1521 = vxpose.xlu0.b32.cont [15/16] 0.0, 128
        %1522 = vxpose.xlu0.b32.end [16/16] 0.0, 128
        %v1523 = vpop.trf.xlu0
        %v1524 = vpop.trf.xlu0
        %v1525 = vpop.trf.xlu0
        %v1526 = vpop.trf.xlu0
        %v1527 = vpop.trf.xlu0
        %v1528 = vpop.trf.xlu0
        %v1529 = vpop.trf.xlu0
        %v1530 = vpop.trf.xlu0
        %v1531 = vpop.trf.xlu0
        %v1532 = vpop.trf.xlu0
        %v1533 = vpop.trf.xlu0
        %v1534 = vpop.trf.xlu0
        %v1535 = vpop.trf.xlu0
        %v1536 = vpop.trf.xlu0
        %v1537 = vpop.trf.xlu0
        %v1538 = vpop.trf.xlu0
        %1539 = vxpose.xlu0.b32.start [1/16] %v1504, 128
        %1540 = vxpose.xlu0.b32.cont [2/16] 0.0, 128
        %1541 = vxpose.xlu0.b32.cont [3/16] 0.0, 128
        %1542 = vxpose.xlu0.b32.cont [4/16] 0.0, 128
        %1543 = vxpose.xlu0.b32.cont [5/16] 0.0, 128
        %1544 = vxpose.xlu0.b32.cont [6/16] 0.0, 128
        %1545 = vxpose.xlu0.b32.cont [7/16] 0.0, 128
        %1546 = vxpose.xlu0.b32.cont [8/16] 0.0, 128
        %1547 = vxpose.xlu0.b32.cont [9/16] 0.0, 128
        %1548 = vxpose.xlu0.b32.cont [10/16] 0.0, 128
        %1549 = vxpose.xlu0.b32.cont [11/16] 0.0, 128
        %1550 = vxpose.xlu0.b32.cont [12/16] 0.0, 128
        %1551 = vxpose.xlu0.b32.cont [13/16] 0.0, 128
        %1552 = vxpose.xlu0.b32.cont [14/16] 0.0, 128
        %1553 = vxpose.xlu0.b32.cont [15/16] 0.0, 128
        %1554 = vxpose.xlu0.b32.end [16/16] 0.0, 128
        %v1555 = vpop.trf.xlu0
        %v1556 = vpop.trf.xlu0
        %v1557 = vpop.trf.xlu0
        %v1558 = vpop.trf.xlu0
        %v1559 = vpop.trf.xlu0
        %v1560 = vpop.trf.xlu0
        %v1561 = vpop.trf.xlu0
        %v1562 = vpop.trf.xlu0
        %v1563 = vpop.trf.xlu0
        %v1564 = vpop.trf.xlu0
        %v1565 = vpop.trf.xlu0
        %v1566 = vpop.trf.xlu0
        %v1567 = vpop.trf.xlu0
        %v1568 = vpop.trf.xlu0
        %v1569 = vpop.trf.xlu0
        %v1570 = vpop.trf.xlu0
        %1571 = vxpose.xlu0.b32.start [1/16] %v1505, 128
        %1572 = vxpose.xlu0.b32.cont [2/16] 0.0, 128
        %1573 = vxpose.xlu0.b32.cont [3/16] 0.0, 128
        %1574 = vxpose.xlu0.b32.cont [4/16] 0.0, 128
        %1575 = vxpose.xlu0.b32.cont [5/16] 0.0, 128
        %1576 = vxpose.xlu0.b32.cont [6/16] 0.0, 128
        %1577 = vxpose.xlu0.b32.cont [7/16] 0.0, 128
        %1578 = vxpose.xlu0.b32.cont [8/16] 0.0, 128
        %1579 = vxpose.xlu0.b32.cont [9/16] 0.0, 128
        %1580 = vxpose.xlu0.b32.cont [10/16] 0.0, 128
        %1581 = vxpose.xlu0.b32.cont [11/16] 0.0, 128
        %1582 = vxpose.xlu0.b32.cont [12/16] 0.0, 128
        %1583 = vxpose.xlu0.b32.cont [13/16] 0.0, 128
        %1584 = vxpose.xlu0.b32.cont [14/16] 0.0, 128
        %1585 = vxpose.xlu0.b32.cont [15/16] 0.0, 128
        %1586 = vxpose.xlu0.b32.end [16/16] 0.0, 128
        %v1587 = vpop.trf.xlu0
        %v1588 = vpop.trf.xlu0
        %v1589 = vpop.trf.xlu0
        %v1590 = vpop.trf.xlu0
        %v1591 = vpop.trf.xlu0
        %v1592 = vpop.trf.xlu0
        %v1593 = vpop.trf.xlu0
        %v1594 = vpop.trf.xlu0
        %v1595 = vpop.trf.xlu0
        %v1596 = vpop.trf.xlu0
        %v1597 = vpop.trf.xlu0
        %v1598 = vpop.trf.xlu0
        %v1599 = vpop.trf.xlu0
        %v1600 = vpop.trf.xlu0
        %v1601 = vpop.trf.xlu0
        %v1602 = vpop.trf.xlu0
        %1603 = vxpose.xlu0.b32.start [1/16] %v1506, 128
        %1604 = vxpose.xlu0.b32.cont [2/16] 0.0, 128
        %1605 = vxpose.xlu0.b32.cont [3/16] 0.0, 128
        %1606 = vxpose.xlu0.b32.cont [4/16] 0.0, 128
        %1607 = vxpose.xlu0.b32.cont [5/16] 0.0, 128
        %1608 = vxpose.xlu0.b32.cont [6/16] 0.0, 128
        %1609 = vxpose.xlu0.b32.cont [7/16] 0.0, 128
        %1610 = vxpose.xlu0.b32.cont [8/16] 0.0, 128
        %1611 = vxpose.xlu0.b32.cont [9/16] 0.0, 128
        %1612 = vxpose.xlu0.b32.cont [10/16] 0.0, 128
        %1613 = vxpose.xlu0.b32.cont [11/16] 0.0, 128
        %1614 = vxpose.xlu0.b32.cont [12/16] 0.0, 128
        %1615 = vxpose.xlu0.b32.cont [13/16] 0.0, 128
        %1616 = vxpose.xlu0.b32.cont [14/16] 0.0, 128
        %1617 = vxpose.xlu0.b32.cont [15/16] 0.0, 128
        %1618 = vxpose.xlu0.b32.end [16/16] 0.0, 128
        %v1619 = vpop.trf.xlu0
        %v1620 = vpop.trf.xlu0
        %v1621 = vpop.trf.xlu0
        %v1622 = vpop.trf.xlu0
        %v1623 = vpop.trf.xlu0
        %v1624 = vpop.trf.xlu0
        %v1625 = vpop.trf.xlu0
        %v1626 = vpop.trf.xlu0
        %v1627 = vpop.trf.xlu0
        %v1628 = vpop.trf.xlu0
        %v1629 = vpop.trf.xlu0
        %v1630 = vpop.trf.xlu0
        %v1631 = vpop.trf.xlu0
        %v1632 = vpop.trf.xlu0
        %v1633 = vpop.trf.xlu0
        %v1634 = vpop.trf.xlu0
        %1635 = vxpose.xlu0.b32.start [1/16] %v1523, 128
        %1636 = vxpose.xlu0.b32.cont [2/16] %v1555, 128
        %1637 = vxpose.xlu0.b32.cont [3/16] %v1587, 128
        %1638 = vxpose.xlu0.b32.cont [4/16] %v1619, 128
        %1639 = vxpose.xlu0.b32.cont [5/16] 0.0, 128
        %1640 = vxpose.xlu0.b32.cont [6/16] 0.0, 128
        %1641 = vxpose.xlu0.b32.cont [7/16] 0.0, 128
        %1642 = vxpose.xlu0.b32.cont [8/16] 0.0, 128
        %1643 = vxpose.xlu0.b32.cont [9/16] 0.0, 128
        %1644 = vxpose.xlu0.b32.cont [10/16] 0.0, 128
        %1645 = vxpose.xlu0.b32.cont [11/16] 0.0, 128
        %1646 = vxpose.xlu0.b32.cont [12/16] 0.0, 128
        %1647 = vxpose.xlu0.b32.cont [13/16] 0.0, 128
        %1648 = vxpose.xlu0.b32.cont [14/16] 0.0, 128
        %1649 = vxpose.xlu0.b32.cont [15/16] 0.0, 128
        %1650 = vxpose.xlu0.b32.end [16/16] 0.0, 128
        %v1651 = vpop.trf.xlu0
        %v1652 = vpop.trf.xlu0
        %v1653 = vpop.trf.xlu0
        %v1654 = vpop.trf.xlu0
        %v1655 = vpop.trf.xlu0
        %v1656 = vpop.trf.xlu0
        %v1657 = vpop.trf.xlu0
        %v1658 = vpop.trf.xlu0
        %v1659 = vpop.trf.xlu0
        %v1660 = vpop.trf.xlu0
        %v1661 = vpop.trf.xlu0
        %v1662 = vpop.trf.xlu0
        %v1663 = vpop.trf.xlu0
        %v1664 = vpop.trf.xlu0
        %v1665 = vpop.trf.xlu0
        %v1666 = vpop.trf.xlu0
        %v1667 = vpack.c.bf16 %v1651, %v1651
        %v1668 = vld [vmem:[%s8] sm:$0xf]
        %v1669 = vld [vmem:[%s8 + $0x4] sm:$0xf]
        %v1670 = vld [vmem:[%s8 + $0x8] sm:$0xf]
        %v1671 = vld [vmem:[%s8 + $0xc] sm:$0xf]
        %v1672 = vld [vmem:[%s9] sm:$0x1]
        %v1674 = vlaneseq
        %v1675 = vshrl.u32 %v1674, 7
        %v1676 = vsub.s32 0, %v1675
        %v1677 = vrot.slane %v1672, %v1676
        %v1683 = vunpack.c.l.b16 %v1668
        %v1684 = vunpack.c.l.b16 %v1669
        %v1685 = vunpack.c.l.b16 %v1670
        %v1686 = vunpack.c.l.b16 %v1671
        %v1687 = vpack.c.b16 %v1684, %v1683
        %v1688 = vpack.c.b16 %v1686, %v1685
        %v1692 = vsel %vm866, %v1667, 0
        %1694 = vmatprep.subr.bf16.mxu0 0
        %1695 = vmatpush1.bf16.msra.mxu0 %v1687
        %1696 = vmatprep.subr.bf16.mxu0 0
        %1697 = vmatpush1.bf16.msra.mxu0 %v1688
        %1698 = vmatprep.subr.bf16.mxu0 0
        %1699 = vmatpush1.bf16.msra.mxu0 0
        %1700 = vmatprep.subr.bf16.mxu0 0
        %1701 = vmatpush1.bf16.msra.mxu0 0
        %1702 = vmatprep.subr.bf16.mxu0 0
        %1703 = vmatpush1.bf16.msra.mxu0 0
        %1704 = vmatprep.subr.bf16.mxu0 0
        %1705 = vmatpush1.bf16.msra.mxu0 0
        %1706 = vmatprep.subr.bf16.mxu0 0
        %1707 = vmatpush1.bf16.msra.mxu0 0
        %1708 = vmatprep.subr.bf16.mxu0 0
        %1709 = vmatpush1.bf16.msra.mxu0 0
        %1710 = vmatprep.subr.bf16.mxu0 0
        %1711 = vmatpush1.bf16.msra.mxu0 0
        %1712 = vmatprep.subr.bf16.mxu0 0
        %1713 = vmatpush1.bf16.msra.mxu0 0
        %1714 = vmatprep.subr.bf16.mxu0 0
        %1715 = vmatpush1.bf16.msra.mxu0 0
        %1716 = vmatprep.subr.bf16.mxu0 0
        %1717 = vmatpush1.bf16.msra.mxu0 0
        %1718 = vmatprep.subr.bf16.mxu0 0
        %1719 = vmatpush1.bf16.msra.mxu0 0
        %1720 = vmatprep.subr.bf16.mxu0 0
        %1721 = vmatpush1.bf16.msra.mxu0 0
        %1722 = vmatprep.subr.bf16.mxu0 0
        %1723 = vmatpush1.bf16.msra.mxu0 0
        %1724 = vmatprep.subr.bf16.mxu0 0
        %1725 = vmatpush1.bf16.msra.mxu0 0
        %1726 = vmatprep.mubr.bf16.mxu0 0
        %1727 = vmatmul.mubr.bf16.gmra.mrb[0].mxu0 %v1692
        %v1728 = vpop.f32.mrb[0].mxu0
        %v1729 = vadd.f32 %v1677, %v1728
        %v1730 = vpop.f32.mrb[0].mxu0
        %v1731 = vpop.f32.mrb[0].mxu0
        %v1732 = vpop.f32.mrb[0].mxu0
        %1733 = vdwg.mxu0
        %v1734 = vadd.f32 %v826, %v1729
        %v1735 = vld [vmem:[%s10] sm:$0x1]
        %v1736 = vld [vmem:[%s11] sm:$0x1]
        %v1737 = vsel %vm866, %v1734, 0.0
        %1738 = vadd.xlane.f32.xlu0 %v1737
        %v1739 = vpop.xlane.xlu0 %1738
        %v1740 = vrcp.pop 32.0
        %v1741 = vmul.f32 %v1739, %v1740
        %v1742 = vsub.f32 %v1734, %v1741
        %v1743 = vmul.f32 %v1742, %v1742
        %v1744 = vsel %vm866, %v1743, 0.0
        %1745 = vadd.xlane.f32.xlu0 %v1744
        %v1746 = vpop.xlane.xlu0 %1745
        %v1747 = vmul.f32 %v1746, %v1740
        %v1748 = vadd.f32 %v1747, 1e-05
        %v1749 = vrsqrt.pop %v1748
        %v1750 = vmul.f32 %v1742, %v1749
        %v1752 = vlaneseq
        %v1753 = vshrl.u32 %v1752, 7
        %v1754 = vsub.s32 0, %v1753
        %v1755 = vrot.slane %v1735, %v1754
        %v1757 = vmul.f32 %v1750, %v1755
        %v1759 = vlaneseq
        %v1760 = vshrl.u32 %v1759, 7
        %v1761 = vsub.s32 0, %v1760
        %v1762 = vrot.slane %v1736, %v1761
        %v1764 = vadd.f32 %v1757, %v1762
        %v1765 = vpack.c.bf16 %v1764, %v1764
        %v1766 = vld [vmem:[%s12] sm:$0xf]
        %v1767 = vld [vmem:[%s12 + $0x4] sm:$0xf]
        %v1768 = vld [vmem:[%s12 + $0x8] sm:$0xf]
        %v1769 = vld [vmem:[%s12 + $0xc] sm:$0xf]
        %v1770 = vld [vmem:[%s13] sm:$0x1]
        %v1772 = vlaneseq
        %v1773 = vshrl.u32 %v1772, 7
        %v1774 = vsub.s32 0, %v1773
        %v1775 = vrot.slane %v1770, %v1774
        %v1781 = vunpack.c.l.b16 %v1766
        %v1782 = vunpack.c.l.b16 %v1767
        %v1783 = vunpack.c.l.b16 %v1768
        %v1784 = vunpack.c.l.b16 %v1769
        %v1785 = vpack.c.b16 %v1782, %v1781
        %v1786 = vpack.c.b16 %v1784, %v1783
        %v1790 = vsel %vm866, %v1765, 0
        %1792 = vmatprep.subr.bf16.mxu0 0
        %1793 = vmatpush1.bf16.msra.mxu0 %v1785
        %1794 = vmatprep.subr.bf16.mxu0 0
        %1795 = vmatpush1.bf16.msra.mxu0 %v1786
        %1796 = vmatprep.subr.bf16.mxu0 0
        %1797 = vmatpush1.bf16.msra.mxu0 0
        %1798 = vmatprep.subr.bf16.mxu0 0
        %1799 = vmatpush1.bf16.msra.mxu0 0
        %1800 = vmatprep.subr.bf16.mxu0 0
        %1801 = vmatpush1.bf16.msra.mxu0 0
        %1802 = vmatprep.subr.bf16.mxu0 0
        %1803 = vmatpush1.bf16.msra.mxu0 0
        %1804 = vmatprep.subr.bf16.mxu0 0
        %1805 = vmatpush1.bf16.msra.mxu0 0
        %1806 = vmatprep.subr.bf16.mxu0 0
        %1807 = vmatpush1.bf16.msra.mxu0 0
        %1808 = vmatprep.subr.bf16.mxu0 0
        %1809 = vmatpush1.bf16.msra.mxu0 0
        %1810 = vmatprep.subr.bf16.mxu0 0
        %1811 = vmatpush1.bf16.msra.mxu0 0
        %1812 = vmatprep.subr.bf16.mxu0 0
        %1813 = vmatpush1.bf16.msra.mxu0 0
        %1814 = vmatprep.subr.bf16.mxu0 0
        %1815 = vmatpush1.bf16.msra.mxu0 0
        %1816 = vmatprep.subr.bf16.mxu0 0
        %1817 = vmatpush1.bf16.msra.mxu0 0
        %1818 = vmatprep.subr.bf16.mxu0 0
        %1819 = vmatpush1.bf16.msra.mxu0 0
        %1820 = vmatprep.subr.bf16.mxu0 0
        %1821 = vmatpush1.bf16.msra.mxu0 0
        %1822 = vmatprep.subr.bf16.mxu0 0
        %1823 = vmatpush1.bf16.msra.mxu0 0
        %1824 = vmatprep.mubr.bf16.mxu0 0
        %1825 = vmatmul.mubr.bf16.gmra.mrb[0].mxu0 %v1790
        %v1826 = vpop.f32.mrb[0].mxu0
        %v1827 = vadd.f32 %v1775, %v1826
        %v1828 = vpop.f32.mrb[0].mxu0
        %v1829 = vpop.f32.mrb[0].mxu0
        %v1830 = vpop.f32.mrb[0].mxu0
        %1831 = vdwg.mxu0
        %v1832 = vmax.f32 %v1827, 0.0
        %v1833 = vpack.c.bf16 %v1832, %v1832
        %v1834 = vld [vmem:[%s14] sm:$0xf]
        %v1835 = vld [vmem:[%s14 + $0x4] sm:$0xf]
        %v1836 = vld [vmem:[%s14 + $0x8] sm:$0xf]
        %v1837 = vld [vmem:[%s14 + $0xc] sm:$0xf]
        %v1838 = vld [vmem:[%s14 + $0x10] sm:$0xf]
        %v1839 = vld [vmem:[%s14 + $0x14] sm:$0xf]
        %v1840 = vld [vmem:[%s14 + $0x18] sm:$0xf]
        %v1841 = vld [vmem:[%s14 + $0x1c] sm:$0xf]
        %v1842 = vld [vmem:[%s15] sm:$0x1]
        %v1844 = vlaneseq
        %v1845 = vshrl.u32 %v1844, 7
        %v1846 = vsub.s32 0, %v1845
        %v1847 = vrot.slane %v1842, %v1846
        %v1857 = vunpack.c.l.b16 %v1834
        %v1858 = vunpack.c.l.b16 %v1835
        %v1859 = vunpack.c.l.b16 %v1836
        %v1860 = vunpack.c.l.b16 %v1837
        %v1861 = vunpack.c.l.b16 %v1838
        %v1862 = vunpack.c.l.b16 %v1839
        %v1863 = vunpack.c.l.b16 %v1840
        %v1864 = vunpack.c.l.b16 %v1841
        %v1865 = vpack.c.b16 %v1858, %v1857
        %v1866 = vpack.c.b16 %v1860, %v1859
        %v1867 = vpack.c.b16 %v1862, %v1861
        %v1868 = vpack.c.b16 %v1864, %v1863
        %vm1873 = vcmask 523264
        %v1875 = vsel %vm1873, %v1833, 0
        %1877 = vmatprep.subr.bf16.mxu0 0
        %1878 = vmatpush1.bf16.msra.mxu0 %v1865
        %1879 = vmatprep.subr.bf16.mxu0 0
        %1880 = vmatpush1.bf16.msra.mxu0 %v1866
        %1881 = vmatprep.subr.bf16.mxu0 0
        %1882 = vmatpush1.bf16.msra.mxu0 %v1867
        %1883 = vmatprep.subr.bf16.mxu0 0
        %1884 = vmatpush1.bf16.msra.mxu0 %v1868
        %1885 = vmatprep.subr.bf16.mxu0 0
        %1886 = vmatpush1.bf16.msra.mxu0 0
        %1887 = vmatprep.subr.bf16.mxu0 0
        %1888 = vmatpush1.bf16.msra.mxu0 0
        %1889 = vmatprep.subr.bf16.mxu0 0
        %1890 = vmatpush1.bf16.msra.mxu0 0
        %1891 = vmatprep.subr.bf16.mxu0 0
        %1892 = vmatpush1.bf16.msra.mxu0 0
        %1893 = vmatprep.subr.bf16.mxu0 0
        %1894 = vmatpush1.bf16.msra.mxu0 0
        %1895 = vmatprep.subr.bf16.mxu0 0
        %1896 = vmatpush1.bf16.msra.mxu0 0
        %1897 = vmatprep.subr.bf16.mxu0 0
        %1898 = vmatpush1.bf16.msra.mxu0 0
        %1899 = vmatprep.subr.bf16.mxu0 0
        %1900 = vmatpush1.bf16.msra.mxu0 0
        %1901 = vmatprep.subr.bf16.mxu0 0
        %1902 = vmatpush1.bf16.msra.mxu0 0
        %1903 = vmatprep.subr.bf16.mxu0 0
        %1904 = vmatpush1.bf16.msra.mxu0 0
        %1905 = vmatprep.subr.bf16.mxu0 0
        %1906 = vmatpush1.bf16.msra.mxu0 0
        %1907 = vmatprep.subr.bf16.mxu0 0
        %1908 = vmatpush1.bf16.msra.mxu0 0
        %1909 = vmatprep.mubr.bf16.mxu0 0
        %1910 = vmatmul.mubr.bf16.gmra.mrb[0].mxu0 %v1875
        %v1911 = vpop.f32.mrb[0].mxu0
        %v1912 = vadd.f32 %v1847, %v1911
        %v1913 = vpop.f32.mrb[0].mxu0
        %v1914 = vpop.f32.mrb[0].mxu0
        %v1915 = vpop.f32.mrb[0].mxu0
        %1916 = vdwg.mxu0
        %v1917 = vadd.f32 %v1764, %v1912
        %v1918 = vld [vmem:[%s16] sm:$0x1]
        %v1919 = vld [vmem:[%s17] sm:$0x1]
        %v1920 = vsel %vm866, %v1917, 0.0
        %1921 = vadd.xlane.f32.xlu0 %v1920
        %v1922 = vpop.xlane.xlu0 %1921
        %v1923 = vmul.f32 %v1922, %v1740
        %v1924 = vsub.f32 %v1917, %v1923
        %v1925 = vmul.f32 %v1924, %v1924
        %v1926 = vsel %vm866, %v1925, 0.0
        %1927 = vadd.xlane.f32.xlu0 %v1926
        %v1928 = vpop.xlane.xlu0 %1927
        %v1929 = vmul.f32 %v1928, %v1740
        %v1930 = vadd.f32 %v1929, 1e-05
        %v1931 = vrsqrt.pop %v1930
        %v1932 = vmul.f32 %v1924, %v1931
        %v1934 = vlaneseq
        %v1935 = vshrl.u32 %v1934, 7
        %v1936 = vsub.s32 0, %v1935
        %v1937 = vrot.slane %v1918, %v1936
        %v1939 = vmul.f32 %v1932, %v1937
        %v1941 = vlaneseq
        %v1942 = vshrl.u32 %v1941, 7
        %v1943 = vsub.s32 0, %v1942
        %v1944 = vrot.slane %v1919, %v1943
        %v1946 = vadd.f32 %v1939, %v1944
        %1947 = vst.msk [vmem:[%s601] sm:$0xff] %vm866, %v1946
        %s1948 = sand.u32 %s444, 1
        %s1949 = scalar_lea.sflag [#allocation5], %s1948
        %s1950 = sand.u32 %s444, 1
        %s1951 = smul.addr %s1950, 8
        %s1952 = scalar_lea.vmem [#allocation4], %s1951
        // Predicated region
        $region97: #{tpu_custom_call.1} parent=91 // pred_check
          %p1953 = pneg %p454
        $region98: #{tpu_custom_call.1} parent=91 // pred_check_branch
          %1955 = sbr.rel (%p1953) target = $region100
        $region99: #{tpu_custom_call.1} parent=91 // pred_region
          %s1957 = ssub.s32 128, 128
          %1958 = vsyncadd %s1949, %s1957
          %s1959 = sadd.s32 %s37, %s36
          %s1960 = smul.addr %s1959, 128
          %s1961 = scalar_lea.hbm %s18, %s1960
          %s1963 = sshll.u32 %s1952, 4
          %s1964 = int_to_ptr.vmem [resolvable:$true] %s1963
          %1966 = dma.vmem_to_hbm [thread:$0]  %s1964, 128, %s1961, %s1949
        $region100: #{tpu_custom_call.1} parent=91 // pred_fallthru
          _
      $region92: #{tpu_custom_call.1} parent=5 // pred_fallthru
        _
      %p1967 = scmp.le.s32.totalorder 2, %s27
      // Predicated region
      $region101: #{tpu_custom_call.1} parent=5 // pred_check
        %p1968 = pneg %p1967
      $region102: #{tpu_custom_call.1} parent=5 // pred_check_branch
        %1970 = sbr.rel (%p1968) target = $region104
      $region103: #{tpu_custom_call.1} parent=5 // pred_region
        %s1971 = ssub.s32 %s27, 2
        // Predicated region
        $region105: #{tpu_custom_call.1} parent=103 // pred_check
          %p1972 = pneg %p460
        $region106: #{tpu_custom_call.1} parent=103 // pred_check_branch
          %1974 = sbr.rel (%p1972) target = $region108
        $region107: #{tpu_custom_call.1} parent=103 // pred_region
          %s1975 = sand.u32 %s445, 1
          %s1976 = scalar_lea.sflag [#allocation5], %s1975
          %s1977 = sand.u32 %s445, 1
          %s1978 = smul.addr %s1977, 8
          %s1979 = scalar_lea.vmem [#allocation4], %s1978
          %1980 = dma.done %s1976, 128
        $region108: #{tpu_custom_call.1} parent=103 // pred_fallthru
          _
      $region104: #{tpu_custom_call.1} parent=5 // pred_fallthru
        _
    $region6: #{tpu_custom_call.1} parent=1 // loop_footer
      %s31 = sadd.s32 1, %s27
    $region7: #{tpu_custom_call.1} parent=1 // loop_footer_branch
      %26 = sbr.rel target = $region3
    $region8: #{tpu_custom_call.1} parent=1 // loop_exit
      _
    %1981 = vsyncpa [#allocation5], 1
    %s1982 = scalar_lea.sflag [#allocation5], 1
    %1983 = vsyncpa %s1982, 1

// kernel: tpu_custom_call.1
$region0: #{tpu_custom_call.1}
  #allocation0 [shape = 'u32[]', space=smem, size = 0x4, offset = 0x4, fixed_abs, tag = 'smem constant byte address 0x4 - core index']
  #allocation1 [shape = 'u32[144,128]{1,0:T(1,128)}', space=vmem, size = 0x12000, scoped, tag = 'internal scratch']
  #allocation2 [shape = 'bf16[4,8,8]{2,1,0:T(8,128)(2,1)}', space=vmem, size = 0x2000, scoped, tag = 'scratch operand']
  #allocation3 [shape = 'bf16[4,8,8]{2,1,0:T(8,128)(2,1)}', space=vmem, size = 0x2000, scoped, tag = 'scratch operand']
  %s0 = inlined_call_operand.vmem [shape: f32[2,8,32], index: 0, kind: input, shape index: {}]
  %s1 = inlined_call_operand.vmem [shape: bf16[2,8,32], index: 1, kind: input, shape index: {}]
  %s2 = inlined_call_operand.vmem [shape: bf16[32,32], index: 2, kind: input, shape index: {}]
  %s3 = inlined_call_operand.vmem [shape: f32[32,1], index: 3, kind: input, shape index: {}]
  %s4 = inlined_call_operand.vmem [shape: bf16[32,32], index: 4, kind: input, shape index: {}]
  %s5 = inlined_call_operand.vmem [shape: f32[32,1], index: 5, kind: input, shape index: {}]
  %s6 = inlined_call_operand.vmem [shape: bf16[32,32], index: 6, kind: input, shape index: {}]
  %s7 = inlined_call_operand.vmem [shape: f32[32,1], index: 7, kind: input, shape index: {}]
  %s8 = inlined_call_operand.vmem [shape: bf16[32,32], index: 8, kind: input, shape index: {}]
  %s9 = inlined_call_operand.vmem [shape: f32[1,32], index: 9, kind: input, shape index: {}]
  %s10 = inlined_call_operand.vmem [shape: f32[1,32], index: 10, kind: input, shape index: {}]
  %s11 = inlined_call_operand.vmem [shape: f32[1,32], index: 11, kind: input, shape index: {}]
  %s12 = inlined_call_operand.vmem [shape: bf16[32,64], index: 12, kind: input, shape index: {}]
  %s13 = inlined_call_operand.vmem [shape: f32[1,64], index: 13, kind: input, shape index: {}]
  %s14 = inlined_call_operand.vmem [shape: bf16[64,32], index: 14, kind: input, shape index: {}]
  %s15 = inlined_call_operand.vmem [shape: f32[1,32], index: 15, kind: input, shape index: {}]
  %s16 = inlined_call_operand.vmem [shape: f32[1,32], index: 16, kind: input, shape index: {}]
  %s17 = inlined_call_operand.vmem [shape: f32[1,32], index: 17, kind: input, shape index: {}]
  %s18 = inlined_call_operand.hbm [shape: f32[2,8,32], index: 18, kind: output, shape index: {}]
  %s19 = sld [smem:[#allocation0]]
  $region109: #{tpu_custom_call.1} parent=0
    _
  %s21 = ssub.s32 1, %s19
  %s22 = scalar_select 0, %s21, %s19
  $region1: #{tpu_custom_call.1} parent=0
    #allocation4 [shape = 'u8[8192]{0}', space=vmem, size = 0x2000, scoped, tag = 'output window, operand 0']
    #allocation5 [shape = 's32[2]{0}', space=sflag, size = 0x8, scoped, tag = 'scoped memory for tpu_custom_call.1']
    %23 = vsyncpa [#allocation5], 0
    %s24 = scalar_lea.sflag [#allocation5], 1
    %25 = vsyncpa %s24, 0
    loop: start=0, step=1, limit=4
    $region2: #{tpu_custom_call.1} parent=1 // loop_pre_header
      _
    $region3: #{tpu_custom_call.1} parent=1 // loop_header
      %s27 = sphi 0, %s31
      %p28 = scmp.ge.s32.totalorder %s27, 4
      %s34 = sphi 0, %s46
      %s35 = sphi 0, %s42
      %s36 = sphi 0, %s34
      %s37 = sphi 0, %s35
      %s38 = sphi 0, %s36
      %s39 = sphi 0, %s37
      %s51 = sphi 0, %s53
      %s54 = sphi 0, %s51
      %s55 = sphi 0, %s54
      %s71 = sphi 0, %s55
      %s77 = sphi 0, %s79
      %s80 = sphi 0, %s77
      %s81 = sphi 0, %s80
      %s97 = sphi 0, %s81
      %s101 = sphi 0, %s101
      %s103 = sphi 0, %s101
      %s104 = sphi 0, %s103
      %s118 = sphi 0, %s104
      %s122 = sphi 0, %s122
      %s124 = sphi 0, %s122
      %s125 = sphi 0, %s124
      %s139 = sphi 0, %s125
      %s143 = sphi 0, %s143
      %s145 = sphi 0, %s143
      %s146 = sphi 0, %s145
      %s160 = sphi 0, %s146
      %s164 = sphi 0, %s164
      %s166 = sphi 0, %s164
      %s167 = sphi 0, %s166
      %s181 = sphi 0, %s167
      %s185 = sphi 0, %s185
      %s187 = sphi 0, %s185
      %s188 = sphi 0, %s187
      %s202 = sphi 0, %s188
      %s206 = sphi 0, %s206
      %s208 = sphi 0, %s206
      %s209 = sphi 0, %s208
      %s223 = sphi 0, %s209
      %s227 = sphi 0, %s227
      %s229 = sphi 0, %s227
      %s230 = sphi 0, %s229
      %s244 = sphi 0, %s230
      %s248 = sphi 0, %s248
      %s250 = sphi 0, %s248
      %s251 = sphi 0, %s250
      %s265 = sphi 0, %s251
      %s269 = sphi 0, %s269
      %s271 = sphi 0, %s269
      %s272 = sphi 0, %s271
      %s286 = sphi 0, %s272
      %s290 = sphi 0, %s290
      %s292 = sphi 0, %s290
      %s293 = sphi 0, %s292
      %s307 = sphi 0, %s293
      %s311 = sphi 0, %s311
      %s313 = sphi 0, %s311
      %s314 = sphi 0, %s313
      %s328 = sphi 0, %s314
      %s332 = sphi 0, %s332
      %s334 = sphi 0, %s332
      %s335 = sphi 0, %s334
      %s349 = sphi 0, %s335
      %s353 = sphi 0, %s353
      %s355 = sphi 0, %s353
      %s356 = sphi 0, %s355
      %s370 = sphi 0, %s356
      %s374 = sphi 0, %s374
      %s376 = sphi 0, %s374
      %s377 = sphi 0, %s376
      %s391 = sphi 0, %s377
      %s395 = sphi 0, %s395
      %s397 = sphi 0, %s395
      %s398 = sphi 0, %s397
      %s412 = sphi 0, %s398
      %s416 = sphi 0, %s416
      %s418 = sphi 0, %s416
      %s419 = sphi 0, %s418
      %s433 = sphi 0, %s419
      %s441 = sphi 0, %s443
      %s444 = sphi 0, %s441
      %s445 = sphi 0, %s444
      %s461 = sphi 0, %s445
    $region4: #{tpu_custom_call.1} parent=1 // loop_header_branch
      %30 = sbr.rel (%p28) target = $region8
    $region5: #{tpu_custom_call.1} parent=1 // loop_body
      %s32 = ssub.s32 %s27, 1
      %s33 = ssub.s32 %s27, 2
      %s40 = sadd.s32 1, %s35
      %p41 = scmp.ge.s32.totalorder %s40, 1
      %s42 = scalar_select %p41, 0, %s40
      %s43 = sadd.s32 1, %s34
      %s44 = scalar_select %p41, %s43, %s34
      %p45 = scmp.ge.s32.totalorder %s44, 2
      %s46 = scalar_select %p45, 0, %s44
      %s47 = ssub.s32 %s34, %s46
      %s48 = ssub.s32 %s35, %s42
      %s49 = sor.u32 %s47, %s48
      %p50 = scmp.eq.s32.totalorder %s49, 0
      %s52 = sadd.s32 %s51, 1
      %s53 = scalar_select %p50, %s51, %s52
      %p56 = pneg %p50
      %p57 = scmp.eq.s32.totalorder %s27, 1
      %p58 = por %p56, %p57
      %p59 = scmp.ne.s32.totalorder %s51, %s54
      %p60 = scmp.eq.s32.totalorder %s27, 0
      %p61 = por %p59, %p60
      %p62 = scmp.ne.s32.totalorder %s51, %s54
      %p63 = scmp.eq.s32.totalorder %s32, 1
      %p64 = por %p62, %p63
      %p65 = scmp.ne.s32.totalorder %s54, %s55
      %p66 = scmp.eq.s32.totalorder %s32, 0
      %p67 = por %p65, %p66
      %p68 = scmp.ne.s32.totalorder %s54, %s55
      %p69 = scmp.eq.s32.totalorder %s33, 1
      %p70 = por %p68, %p69
      %p72 = scmp.ne.s32.totalorder %s55, %s71
      %p73 = scmp.eq.s32.totalorder %s33, 0
      %p74 = por %p72, %p73
      %s75 = ssub.s32 %s34, %s46
      %p76 = scmp.eq.s32.totalorder %s75, 0
      %s78 = sadd.s32 %s77, 1
      %s79 = scalar_select %p76, %s77, %s78
      %p82 = pneg %p76
      %p83 = scmp.eq.s32.totalorder %s27, 1
      %p84 = por %p82, %p83
      %p85 = scmp.ne.s32.totalorder %s77, %s80
      %p86 = scmp.eq.s32.totalorder %s27, 0
      %p87 = por %p85, %p86
      %p88 = scmp.ne.s32.totalorder %s77, %s80
      %p89 = scmp.eq.s32.totalorder %s32, 1
      %p90 = por %p88, %p89
      %p91 = scmp.ne.s32.totalorder %s80, %s81
      %p92 = scmp.eq.s32.totalorder %s32, 0
      %p93 = por %p91, %p92
      %p94 = scmp.ne.s32.totalorder %s80, %s81
      %p95 = scmp.eq.s32.totalorder %s33, 1
      %p96 = por %p94, %p95
      %p98 = scmp.ne.s32.totalorder %s81, %s97
      %p99 = scmp.eq.s32.totalorder %s33, 0
      %p100 = por %p98, %p99
      %s102 = sadd.s32 %s101, 1
      %p105 = scmp.eq.s32.totalorder %s27, 1
      %p106 = scmp.ne.s32.totalorder %s101, %s103
      %p107 = scmp.eq.s32.totalorder %s27, 0
      %p108 = por %p106, %p107
      %p109 = scmp.ne.s32.totalorder %s101, %s103
      %p110 = scmp.eq.s32.totalorder %s32, 1
      %p111 = por %p109, %p110
      %p112 = scmp.ne.s32.totalorder %s103, %s104
      %p113 = scmp.eq.s32.totalorder %s32, 0
      %p114 = por %p112, %p113
      %p115 = scmp.ne.s32.totalorder %s103, %s104
      %p116 = scmp.eq.s32.totalorder %s33, 1
      %p117 = por %p115, %p116
      %p119 = scmp.ne.s32.totalorder %s104, %s118
      %p120 = scmp.eq.s32.totalorder %s33, 0
      %p121 = por %p119, %p120
      %s123 = sadd.s32 %s122, 1
      %p126 = scmp.eq.s32.totalorder %s27, 1
      %p127 = scmp.ne.s32.totalorder %s122, %s124
      %p128 = scmp.eq.s32.totalorder %s27, 0
      %p129 = por %p127, %p128
      %p130 = scmp.ne.s32.totalorder %s122, %s124
      %p131 = scmp.eq.s32.totalorder %s32, 1
      %p132 = por %p130, %p131
      %p133 = scmp.ne.s32.totalorder %s124, %s125
      %p134 = scmp.eq.s32.totalorder %s32, 0
      %p135 = por %p133, %p134
      %p136 = scmp.ne.s32.totalorder %s124, %s125
      %p137 = scmp.eq.s32.totalorder %s33, 1
      %p138 = por %p136, %p137
      %p140 = scmp.ne.s32.totalorder %s125, %s139
      %p141 = scmp.eq.s32.totalorder %s33, 0
      %p142 = por %p140, %p141
      %s144 = sadd.s32 %s143, 1
      %p147 = scmp.eq.s32.totalorder %s27, 1
      %p148 = scmp.ne.s32.totalorder %s143, %s145
      %p149 = scmp.eq.s32.totalorder %s27, 0
      %p150 = por %p148, %p149
      %p151 = scmp.ne.s32.totalorder %s143, %s145
      %p152 = scmp.eq.s32.totalorder %s32, 1
      %p153 = por %p151, %p152
      %p154 = scmp.ne.s32.totalorder %s145, %s146
      %p155 = scmp.eq.s32.totalorder %s32, 0
      %p156 = por %p154, %p155
      %p157 = scmp.ne.s32.totalorder %s145, %s146
      %p158 = scmp.eq.s32.totalorder %s33, 1
      %p159 = por %p157, %p158
      %p161 = scmp.ne.s32.totalorder %s146, %s160
      %p162 = scmp.eq.s32.totalorder %s33, 0
      %p163 = por %p161, %p162
      %s165 = sadd.s32 %s164, 1
      %p168 = scmp.eq.s32.totalorder %s27, 1
      %p169 = scmp.ne.s32.totalorder %s164, %s166
      %p170 = scmp.eq.s32.totalorder %s27, 0
      %p171 = por %p169, %p170
      %p172 = scmp.ne.s32.totalorder %s164, %s166
      %p173 = scmp.eq.s32.totalorder %s32, 1
      %p174 = por %p172, %p173
      %p175 = scmp.ne.s32.totalorder %s166, %s167
      %p176 = scmp.eq.s32.totalorder %s32, 0
      %p177 = por %p175, %p176
      %p178 = scmp.ne.s32.totalorder %s166, %s167
      %p179 = scmp.eq.s32.totalorder %s33, 1
      %p180 = por %p178, %p179
      %p182 = scmp.ne.s32.totalorder %s167, %s181
      %p183 = scmp.eq.s32.totalorder %s33, 0
      %p184 = por %p182, %p183
      %s186 = sadd.s32 %s185, 1
      %p189 = scmp.eq.s32.totalorder %s27, 1
      %p190 = scmp.ne.s32.totalorder %s185, %s187
      %p191 = scmp.eq.s32.totalorder %s27, 0
      %p192 = por %p190, %p191
      %p193 = scmp.ne.s32.totalorder %s185, %s187
      %p194 = scmp.eq.s32.totalorder %s32, 1
      %p195 = por %p193, %p194
      %p196 = scmp.ne.s32.totalorder %s187, %s188
      %p197 = scmp.eq.s32.totalorder %s32, 0
      %p198 = por %p196, %p197
      %p199 = scmp.ne.s32.totalorder %s187, %s188
      %p200 = scmp.eq.s32.totalorder %s33, 1
      %p201 = por %p199, %p200
      %p203 = scmp.ne.s32.totalorder %s188, %s202
      %p204 = scmp.eq.s32.totalorder %s33, 0
      %p205 = por %p203, %p204
      %s207 = sadd.s32 %s206, 1
      %p210 = scmp.eq.s32.totalorder %s27, 1
      %p211 = scmp.ne.s32.totalorder %s206, %s208
      %p212 = scmp.eq.s32.totalorder %s27, 0
      %p213 = por %p211, %p212
      %p214 = scmp.ne.s32.totalorder %s206, %s208
      %p215 = scmp.eq.s32.totalorder %s32, 1
      %p216 = por %p214, %p215
      %p217 = scmp.ne.s32.totalorder %s208, %s209
      %p218 = scmp.eq.s32.totalorder %s32, 0
      %p219 = por %p217, %p218
      %p220 = scmp.ne.s32.totalorder %s208, %s209
      %p221 = scmp.eq.s32.totalorder %s33, 1
      %p222 = por %p220, %p221
      %p224 = scmp.ne.s32.totalorder %s209, %s223
      %p225 = scmp.eq.s32.totalorder %s33, 0
      %p226 = por %p224, %p225
      %s228 = sadd.s32 %s227, 1
      %p231 = scmp.eq.s32.totalorder %s27, 1
      %p232 = scmp.ne.s32.totalorder %s227, %s229
      %p233 = scmp.eq.s32.totalorder %s27, 0
      %p234 = por %p232, %p233
      %p235 = scmp.ne.s32.totalorder %s227, %s229
      %p236 = scmp.eq.s32.totalorder %s32, 1
      %p237 = por %p235, %p236
      %p238 = scmp.ne.s32.totalorder %s229, %s230
      %p239 = scmp.eq.s32.totalorder %s32, 0
      %p240 = por %p238, %p239
      %p241 = scmp.ne.s32.totalorder %s229, %s230
      %p242 = scmp.eq.s32.totalorder %s33, 1
      %p243 = por %p241, %p242
      %p245 = scmp.ne.s32.totalorder %s230, %s244
      %p246 = scmp.eq.s32.totalorder %s33, 0
      %p247 = por %p245, %p246
      %s249 = sadd.s32 %s248, 1
      %p252 = scmp.eq.s32.totalorder %s27, 1
      %p253 = scmp.ne.s32.totalorder %s248, %s250
      %p254 = scmp.eq.s32.totalorder %s27, 0
      %p255 = por %p253, %p254
      %p256 = scmp.ne.s32.totalorder %s248, %s250
      %p257 = scmp.eq.s32.totalorder %s32, 1
      %p258 = por %p256, %p257
      %p259 = scmp.ne.s32.totalorder %s250, %s251
      %p260 = scmp.eq.s32.totalorder %s32, 0
      %p261 = por %p259, %p260
      %p262 = scmp.ne.s32.totalorder %s250, %s251
      %p263 = scmp.eq.s32.totalorder %s33, 1
      %p264 = por %p262, %p263
      %p266 = scmp.ne.s32.totalorder %s251, %s265
      %p267 = scmp.eq.s32.totalorder %s33, 0
      %p268 = por %p266, %p267
      %s270 = sadd.s32 %s269, 1
      %p273 = scmp.eq.s32.totalorder %s27, 1
      %p274 = scmp.ne.s32.totalorder %s269, %s271
      %p275 = scmp.eq.s32.totalorder %s27, 0
      %p276 = por %p274, %p275
      %p277 = scmp.ne.s32.totalorder %s269, %s271
      %p278 = scmp.eq.s32.totalorder %s32, 1
      %p279 = por %p277, %p278
      %p280 = scmp.ne.s32.totalorder %s271, %s272
      %p281 = scmp.eq.s32.totalorder %s32, 0
      %p282 = por %p280, %p281
      %p283 = scmp.ne.s32.totalorder %s271, %s272
      %p284 = scmp.eq.s32.totalorder %s33, 1
      %p285 = por %p283, %p284
      %p287 = scmp.ne.s32.totalorder %s272, %s286
      %p288 = scmp.eq.s32.totalorder %s33, 0
      %p289 = por %p287, %p288
      %s291 = sadd.s32 %s290, 1
      %p294 = scmp.eq.s32.totalorder %s27, 1
      %p295 = scmp.ne.s32.totalorder %s290, %s292
      %p296 = scmp.eq.s32.totalorder %s27, 0
      %p297 = por %p295, %p296
      %p298 = scmp.ne.s32.totalorder %s290, %s292
      %p299 = scmp.eq.s32.totalorder %s32, 1
      %p300 = por %p298, %p299
      %p301 = scmp.ne.s32.totalorder %s292, %s293
      %p302 = scmp.eq.s32.totalorder %s32, 0
      %p303 = por %p301, %p302
      %p304 = scmp.ne.s32.totalorder %s292, %s293
      %p305 = scmp.eq.s32.totalorder %s33, 1
      %p306 = por %p304, %p305
      %p308 = scmp.ne.s32.totalorder %s293, %s307
      %p309 = scmp.eq.s32.totalorder %s33, 0
      %p310 = por %p308, %p309
      %s312 = sadd.s32 %s311, 1
      %p315 = scmp.eq.s32.totalorder %s27, 1
      %p316 = scmp.ne.s32.totalorder %s311, %s313
      %p317 = scmp.eq.s32.totalorder %s27, 0
      %p318 = por %p316, %p317
      %p319 = scmp.ne.s32.totalorder %s311, %s313
      %p320 = scmp.eq.s32.totalorder %s32, 1
      %p321 = por %p319, %p320
      %p322 = scmp.ne.s32.totalorder %s313, %s314
      %p323 = scmp.eq.s32.totalorder %s32, 0
      %p324 = por %p322, %p323
      %p325 = scmp.ne.s32.totalorder %s313, %s314
      %p326 = scmp.eq.s32.totalorder %s33, 1
      %p327 = por %p325, %p326
      %p329 = scmp.ne.s32.totalorder %s314, %s328
      %p330 = scmp.eq.s32.totalorder %s33, 0
      %p331 = por %p329, %p330
      %s333 = sadd.s32 %s332, 1
      %p336 = scmp.eq.s32.totalorder %s27, 1
      %p337 = scmp.ne.s32.totalorder %s332, %s334
      %p338 = scmp.eq.s32.totalorder %s27, 0
      %p339 = por %p337, %p338
      %p340 = scmp.ne.s32.totalorder %s332, %s334
      %p341 = scmp.eq.s32.totalorder %s32, 1
      %p342 = por %p340, %p341
      %p343 = scmp.ne.s32.totalorder %s334, %s335
      %p344 = scmp.eq.s32.totalorder %s32, 0
      %p345 = por %p343, %p344
      %p346 = scmp.ne.s32.totalorder %s334, %s335
      %p347 = scmp.eq.s32.totalorder %s33, 1
      %p348 = por %p346, %p347
      %p350 = scmp.ne.s32.totalorder %s335, %s349
      %p351 = scmp.eq.s32.totalorder %s33, 0
      %p352 = por %p350, %p351
      %s354 = sadd.s32 %s353, 1
      %p357 = scmp.eq.s32.totalorder %s27, 1
      %p358 = scmp.ne.s32.totalorder %s353, %s355
      %p359 = scmp.eq.s32.totalorder %s27, 0
      %p360 = por %p358, %p359
      %p361 = scmp.ne.s32.totalorder %s353, %s355
      %p362 = scmp.eq.s32.totalorder %s32, 1
      %p363 = por %p361, %p362
      %p364 = scmp.ne.s32.totalorder %s355, %s356
      %p365 = scmp.eq.s32.totalorder %s32, 0
      %p366 = por %p364, %p365
      %p367 = scmp.ne.s32.totalorder %s355, %s356
      %p368 = scmp.eq.s32.totalorder %s33, 1
      %p369 = por %p367, %p368
      %p371 = scmp.ne.s32.totalorder %s356, %s370
      %p372 = scmp.eq.s32.totalorder %s33, 0
      %p373 = por %p371, %p372
      %s375 = sadd.s32 %s374, 1
      %p378 = scmp.eq.s32.totalorder %s27, 1
      %p379 = scmp.ne.s32.totalorder %s374, %s376
      %p380 = scmp.eq.s32.totalorder %s27, 0
      %p381 = por %p379, %p380
      %p382 = scmp.ne.s32.totalorder %s374, %s376
      %p383 = scmp.eq.s32.totalorder %s32, 1
      %p384 = por %p382, %p383
      %p385 = scmp.ne.s32.totalorder %s376, %s377
      %p386 = scmp.eq.s32.totalorder %s32, 0
      %p387 = por %p385, %p386
      %p388 = scmp.ne.s32.totalorder %s376, %s377
      %p389 = scmp.eq.s32.totalorder %s33, 1
      %p390 = por %p388, %p389
      %p392 = scmp.ne.s32.totalorder %s377, %s391
      %p393 = scmp.eq.s32.totalorder %s33, 0
      %p394 = por %p392, %p393
      %s396 = sadd.s32 %s395, 1
      %p399 = scmp.eq.s32.totalorder %s27, 1
      %p400 = scmp.ne.s32.totalorder %s395, %s397
      %p401 = scmp.eq.s32.totalorder %s27, 0
      %p402 = por %p400, %p401
      %p403 = scmp.ne.s32.totalorder %s395, %s397
      %p404 = scmp.eq.s32.totalorder %s32, 1
      %p405 = por %p403, %p404
      %p406 = scmp.ne.s32.totalorder %s397, %s398
      %p407 = scmp.eq.s32.totalorder %s32, 0
      %p408 = por %p406, %p407
      %p409 = scmp.ne.s32.totalorder %s397, %s398
      %p410 = scmp.eq.s32.totalorder %s33, 1
      %p411 = por %p409, %p410
      %p413 = scmp.ne.s32.totalorder %s398, %s412
      %p414 = scmp.eq.s32.totalorder %s33, 0
      %p415 = por %p413, %p414
      %s417 = sadd.s32 %s416, 1
      %p420 = scmp.eq.s32.totalorder %s27, 1
      %p421 = scmp.ne.s32.totalorder %s416, %s418
      %p422 = scmp.eq.s32.totalorder %s27, 0
      %p423 = por %p421, %p422
      %p424 = scmp.ne.s32.totalorder %s416, %s418
      %p425 = scmp.eq.s32.totalorder %s32, 1
      %p426 = por %p424, %p425
      %p427 = scmp.ne.s32.totalorder %s418, %s419
      %p428 = scmp.eq.s32.totalorder %s32, 0
      %p429 = por %p427, %p428
      %p430 = scmp.ne.s32.totalorder %s418, %s419
      %p431 = scmp.eq.s32.totalorder %s33, 1
      %p432 = por %p430, %p431
      %p434 = scmp.ne.s32.totalorder %s419, %s433
      %p435 = scmp.eq.s32.totalorder %s33, 0
      %p436 = por %p434, %p435
      %s437 = ssub.s32 %s34, %s46
      %s438 = ssub.s32 %s35, %s42
      %s439 = sor.u32 %s437, %s438
      %p440 = scmp.eq.s32.totalorder %s439, 0
      %s442 = sadd.s32 %s441, 1
      %s443 = scalar_select %p440, %s441, %s442
      %p446 = pneg %p440
      %p447 = scmp.eq.s32.totalorder %s27, 1
      %p448 = por %p446, %p447
      %p449 = scmp.ne.s32.totalorder %s441, %s444
      %p450 = scmp.eq.s32.totalorder %s27, 0
      %p451 = por %p449, %p450
      %p452 = scmp.ne.s32.totalorder %s441, %s444
      %p453 = scmp.eq.s32.totalorder %s32, 1
      %p454 = por %p452, %p453
      %p455 = scmp.ne.s32.totalorder %s444, %s445
      %p456 = scmp.eq.s32.totalorder %s32, 0
      %p457 = por %p455, %p456
      %p458 = scmp.ne.s32.totalorder %s444, %s445
      %p459 = scmp.eq.s32.totalorder %s33, 1
      %p460 = por %p458, %p459
      %p462 = scmp.ne.s32.totalorder %s445, %s461
      %p463 = scmp.eq.s32.totalorder %s33, 0
      %p464 = por %p462, %p463
      %p465 = scmp.le.s32.totalorder 1, %s27
      %p466 = scmp.lt.s32.totalorder %s27, 3
      %p467 = pnand %p465, %p466
      %p468 = pneg %p467
      // Predicated region
      $region9: #{tpu_custom_call.1} parent=5 // pred_check
        _
      $region10: #{tpu_custom_call.1} parent=5 // pred_check_branch
        %470 = sbr.rel (%p467) target = $region12
      $region11: #{tpu_custom_call.1} parent=5 // pred_region
        %s471 = ssub.s32 %s27, 1
        // Predicated region
        $region13: #{tpu_custom_call.1} parent=11 // pred_check
          %p472 = pneg %p114
        $region14: #{tpu_custom_call.1} parent=11 // pred_check_branch
          %474 = sbr.rel (%p472) target = $region16
        $region15: #{tpu_custom_call.1} parent=11 // pred_region
          _
        $region16: #{tpu_custom_call.1} parent=11 // pred_fallthru
          _
        // Predicated region
        $region17: #{tpu_custom_call.1} parent=11 // pred_check
          %p475 = pneg %p135
        $region18: #{tpu_custom_call.1} parent=11 // pred_check_branch
          %477 = sbr.rel (%p475) target = $region20
        $region19: #{tpu_custom_call.1} parent=11 // pred_region
          _
        $region20: #{tpu_custom_call.1} parent=11 // pred_fallthru
          _
        // Predicated region
        $region21: #{tpu_custom_call.1} parent=11 // pred_check
          %p478 = pneg %p156
        $region22: #{tpu_custom_call.1} parent=11 // pred_check_branch
          %480 = sbr.rel (%p478) target = $region24
        $region23: #{tpu_custom_call.1} parent=11 // pred_region
          _
        $region24: #{tpu_custom_call.1} parent=11 // pred_fallthru
          _
        // Predicated region
        $region25: #{tpu_custom_call.1} parent=11 // pred_check
          %p481 = pneg %p177
        $region26: #{tpu_custom_call.1} parent=11 // pred_check_branch
          %483 = sbr.rel (%p481) target = $region28
        $region27: #{tpu_custom_call.1} parent=11 // pred_region
          _
        $region28: #{tpu_custom_call.1} parent=11 // pred_fallthru
          _
        // Predicated region
        $region29: #{tpu_custom_call.1} parent=11 // pred_check
          %p484 = pneg %p198
        $region30: #{tpu_custom_call.1} parent=11 // pred_check_branch
          %486 = sbr.rel (%p484) target = $region32
        $region31: #{tpu_custom_call.1} parent=11 // pred_region
          _
        $region32: #{tpu_custom_call.1} parent=11 // pred_fallthru
          _
        // Predicated region
        $region33: #{tpu_custom_call.1} parent=11 // pred_check
          %p487 = pneg %p219
        $region34: #{tpu_custom_call.1} parent=11 // pred_check_branch
          %489 = sbr.rel (%p487) target = $region36
        $region35: #{tpu_custom_call.1} parent=11 // pred_region
          _
        $region36: #{tpu_custom_call.1} parent=11 // pred_fallthru
          _
        // Predicated region
        $region37: #{tpu_custom_call.1} parent=11 // pred_check
          %p490 = pneg %p240
        $region38: #{tpu_custom_call.1} parent=11 // pred_check_branch
          %492 = sbr.rel (%p490) target = $region40
        $region39: #{tpu_custom_call.1} parent=11 // pred_region
          _
        $region40: #{tpu_custom_call.1} parent=11 // pred_fallthru
          _
        // Predicated region
        $region41: #{tpu_custom_call.1} parent=11 // pred_check
          %p493 = pneg %p261
        $region42: #{tpu_custom_call.1} parent=11 // pred_check_branch
          %495 = sbr.rel (%p493) target = $region44
        $region43: #{tpu_custom_call.1} parent=11 // pred_region
          _
        $region44: #{tpu_custom_call.1} parent=11 // pred_fallthru
          _
        // Predicated region
        $region45: #{tpu_custom_call.1} parent=11 // pred_check
          %p496 = pneg %p282
        $region46: #{tpu_custom_call.1} parent=11 // pred_check_branch
          %498 = sbr.rel (%p496) target = $region48
        $region47: #{tpu_custom_call.1} parent=11 // pred_region
          _
        $region48: #{tpu_custom_call.1} parent=11 // pred_fallthru
          _
        // Predicated region
        $region49: #{tpu_custom_call.1} parent=11 // pred_check
          %p499 = pneg %p303
        $region50: #{tpu_custom_call.1} parent=11 // pred_check_branch
          %501 = sbr.rel (%p499) target = $region52
        $region51: #{tpu_custom_call.1} parent=11 // pred_region
          _
        $region52: #{tpu_custom_call.1} parent=11 // pred_fallthru
          _
        // Predicated region
        $region53: #{tpu_custom_call.1} parent=11 // pred_check
          %p502 = pneg %p324
        $region54: #{tpu_custom_call.1} parent=11 // pred_check_branch
          %504 = sbr.rel (%p502) target = $region56
        $region55: #{tpu_custom_call.1} parent=11 // pred_region
          _
        $region56: #{tpu_custom_call.1} parent=11 // pred_fallthru
          _
        // Predicated region
        $region57: #{tpu_custom_call.1} parent=11 // pred_check
          %p505 = pneg %p345
        $region58: #{tpu_custom_call.1} parent=11 // pred_check_branch
          %507 = sbr.rel (%p505) target = $region60
        $region59: #{tpu_custom_call.1} parent=11 // pred_region
          _
        $region60: #{tpu_custom_call.1} parent=11 // pred_fallthru
          _
        // Predicated region
        $region61: #{tpu_custom_call.1} parent=11 // pred_check
          %p508 = pneg %p366
        $region62: #{tpu_custom_call.1} parent=11 // pred_check_branch
          %510 = sbr.rel (%p508) target = $region64
        $region63: #{tpu_custom_call.1} parent=11 // pred_region
          _
        $region64: #{tpu_custom_call.1} parent=11 // pred_fallthru
          _
        // Predicated region
        $region65: #{tpu_custom_call.1} parent=11 // pred_check
          %p511 = pneg %p387
        $region66: #{tpu_custom_call.1} parent=11 // pred_check_branch
          %513 = sbr.rel (%p511) target = $region68
        $region67: #{tpu_custom_call.1} parent=11 // pred_region
          _
        $region68: #{tpu_custom_call.1} parent=11 // pred_fallthru
          _
        // Predicated region
        $region69: #{tpu_custom_call.1} parent=11 // pred_check
          %p514 = pneg %p408
        $region70: #{tpu_custom_call.1} parent=11 // pred_check_branch
          %516 = sbr.rel (%p514) target = $region72
        $region71: #{tpu_custom_call.1} parent=11 // pred_region
          _
        $region72: #{tpu_custom_call.1} parent=11 // pred_fallthru
          _
        // Predicated region
        $region73: #{tpu_custom_call.1} parent=11 // pred_check
          %p517 = pneg %p429
        $region74: #{tpu_custom_call.1} parent=11 // pred_check_branch
          %519 = sbr.rel (%p517) target = $region76
        $region75: #{tpu_custom_call.1} parent=11 // pred_region
          _
        $region76: #{tpu_custom_call.1} parent=11 // pred_fallthru
          _
      $region12: #{tpu_custom_call.1} parent=5 // pred_fallthru
        _
      %p520 = scmp.lt.s32.totalorder %s27, 2
      // Predicated region
      $region77: #{tpu_custom_call.1} parent=5 // pred_check
        %p521 = pneg %p520
      $region78: #{tpu_custom_call.1} parent=5 // pred_check_branch
        %523 = sbr.rel (%p521) target = $region80
      $region79: #{tpu_custom_call.1} parent=5 // pred_region
        // Predicated region
        $region81: #{tpu_custom_call.1} parent=79 // pred_check
          %p524 = pneg %p61
        $region82: #{tpu_custom_call.1} parent=79 // pred_check_branch
          %526 = sbr.rel (%p524) target = $region84
        $region83: #{tpu_custom_call.1} parent=79 // pred_region
          %p527 = scmp.lt.s32.totalorder %s34, 1
          %s528 = scalar_select %p527, %s34, 1
          %p529 = scmp.lt.s32.totalorder %s35, 0
          %s530 = scalar_select %p529, %s35, 0
          %s531 = sadd.s32 %s530, %s528
          %s532 = smul.addr %s531, 8
          %s533 = scalar_lea.vmem %s0, %s532
        $region84: #{tpu_custom_call.1} parent=79 // pred_fallthru
          _
        // Predicated region
        $region85: #{tpu_custom_call.1} parent=79 // pred_check
          %p534 = pneg %p87
        $region86: #{tpu_custom_call.1} parent=79 // pred_check_branch
          %536 = sbr.rel (%p534) target = $region88
        $region87: #{tpu_custom_call.1} parent=79 // pred_region
          %p537 = scmp.lt.s32.totalorder %s34, 1
          %s538 = scalar_select %p537, %s34, 1
          %s539 = smul.addr %s538, 4
          %s540 = scalar_lea.vmem %s1, %s539
        $region88: #{tpu_custom_call.1} parent=79 // pred_fallthru
          _
      $region80: #{tpu_custom_call.1} parent=5 // pred_fallthru
        _
      %p541 = scmp.le.s32.totalorder 1, %s27
      %p542 = scmp.lt.s32.totalorder %s27, 3
      %p543 = pnand %p541, %p542
      %p544 = pneg %p543
      // Predicated region
      $region89: #{tpu_custom_call.1} parent=5 // pred_check
        _
      $region90: #{tpu_custom_call.1} parent=5 // pred_check_branch
        %546 = sbr.rel (%p543) target = $region92
      $region91: #{tpu_custom_call.1} parent=5 // pred_region
        %s547 = ssub.s32 %s27, 1
        %p548 = scmp.lt.s32.totalorder %s36, 1
        %s549 = scalar_select %p548, %s36, 1
        %p550 = scmp.lt.s32.totalorder %s37, 0
        %s551 = scalar_select %p550, %s37, 0
        %s552 = sadd.s32 %s551, %s549
        %s553 = smul.addr %s552, 8
        %s554 = scalar_lea.vmem %s0, %s553
        %p555 = pneg %p67
        %p556 = pneg %p64
        %p557 = scmp.lt.s32.totalorder %s36, 1
        %s558 = scalar_select %p557, %s36, 1
        %s559 = smul.addr %s558, 4
        %s560 = scalar_lea.vmem %s1, %s559
        %p561 = pneg %p93
        %p562 = pneg %p90
        %p563 = pneg %p114
        %p564 = pneg %p111
        %p565 = pneg %p135
        %p566 = pneg %p132
        %p567 = pneg %p156
        %p568 = pneg %p153
        %p569 = pneg %p177
        %p570 = pneg %p174
        %p571 = pneg %p198
        %p572 = pneg %p195
        %p573 = pneg %p219
        %p574 = pneg %p216
        %p575 = pneg %p240
        %p576 = pneg %p237
        %p577 = pneg %p261
        %p578 = pneg %p258
        %p579 = pneg %p282
        %p580 = pneg %p279
        %p581 = pneg %p303
        %p582 = pneg %p300
        %p583 = pneg %p324
        %p584 = pneg %p321
        %p585 = pneg %p345
        %p586 = pneg %p342
        %p587 = pneg %p366
        %p588 = pneg %p363
        %p589 = pneg %p387
        %p590 = pneg %p384
        %p591 = pneg %p408
        %p592 = pneg %p405
        %p593 = pneg %p429
        %p594 = pneg %p426
        %p595 = pneg %p457
        %p596 = pneg %p454
        %s597 = sand.u32 %s444, 1
        %s598 = scalar_lea.sflag [#allocation5], %s597
        %s599 = sand.u32 %s444, 1
        %s600 = smul.addr %s599, 8
        %s601 = scalar_lea.vmem [#allocation4], %s600
        %p602 = scmp.lt.s32.totalorder %s36, 1
        %s603 = scalar_select %p602, %s36, 1
        %p604 = scmp.lt.s32.totalorder %s37, 0
        %s605 = scalar_select %p604, %s37, 0
        %s606 = sadd.s32 %s605, %s603
        %s607 = smul.addr %s606, 8
        %s608 = scalar_lea.vmem %s0, %s607
        %p609 = scmp.lt.s32.totalorder %s36, 1
        %s610 = scalar_select %p609, %s36, 1
        %s611 = smul.addr %s610, 4
        %s612 = scalar_lea.vmem %s1, %s611
        %p614 = scmp.eq.s32.totalorder %s37, 0
        // Predicated region
        $region93: #{tpu_custom_call.1} parent=91 // pred_check
          %p615 = pneg %p614
        $region94: #{tpu_custom_call.1} parent=91 // pred_check_branch
          %617 = sbr.rel (%p615) target = $region96
        $region95: #{tpu_custom_call.1} parent=91 // pred_region
          %v618 = vld [vmem:[%s612] sm:$0xf]
          %v619 = vld [vmem:[%s4] sm:$0xf]
          %v620 = vld [vmem:[%s4 + $0x4] sm:$0xf]
          %v621 = vld [vmem:[%s4 + $0x8] sm:$0xf]
          %v622 = vld [vmem:[%s4 + $0xc] sm:$0xf]
          %v623 = vld [vmem:[%s5] sm:$0xff]
          %v624 = vld [vmem:[%s5 + $0x8] sm:$0xff]
          %v625 = vld [vmem:[%s5 + $0x10] sm:$0xff]
          %v626 = vld [vmem:[%s5 + $0x18] sm:$0xff]
          %628 = vset.pattern.permute.xlu0 0
          %629 = vperm.xlu0 %628, %v623
          %v630 = vpop.permute.xlu0 %629
          %633 = vset.pattern.permute.xlu0 0
          %634 = vperm.xlu0 %633, %v624
          %v635 = vpop.permute.xlu0 %634
          %638 = vset.pattern.permute.xlu0 0
          %639 = vperm.xlu0 %638, %v625
          %v640 = vpop.permute.xlu0 %639
          %643 = vset.pattern.permute.xlu0 0
          %644 = vperm.xlu0 %643, %v626
          %v645 = vpop.permute.xlu0 %644
          %v651 = vunpack.c.l.b16 %v619
          %v652 = vunpack.c.l.b16 %v620
          %v653 = vunpack.c.l.b16 %v621
          %v654 = vunpack.c.l.b16 %v622
          %v655 = vpack.c.b16 %v652, %v651
          %v656 = vpack.c.b16 %v654, %v653
          %vm657 = vcmask 261120
          %v659 = vsel %vm657, %v655, 0
          %v662 = vsel %vm657, %v656, 0
          %v665 = vsel %vm657, %v618, 0
          %667 = vmatprep.subr.bf16.mxu0 0
          %668 = vmatpush1.bf16.xpose.msra.mxu0 %v665
          %669 = vmatprep.subr.bf16.mxu0 0
          %670 = vmatpush1.bf16.xpose.msra.mxu0 0
          %671 = vmatprep.subr.bf16.mxu0 0
          %672 = vmatpush1.bf16.xpose.msra.mxu0 0
          %673 = vmatprep.subr.bf16.mxu0 0
          %674 = vmatpush1.bf16.xpose.msra.mxu0 0
          %675 = vmatprep.subr.bf16.mxu0 0
          %676 = vmatpush1.bf16.xpose.msra.mxu0 0
          %677 = vmatprep.subr.bf16.mxu0 0
          %678 = vmatpush1.bf16.xpose.msra.mxu0 0
          %679 = vmatprep.subr.bf16.mxu0 0
          %680 = vmatpush1.bf16.xpose.msra.mxu0 0
          %681 = vmatprep.subr.bf16.mxu0 0
          %682 = vmatpush1.bf16.xpose.msra.mxu0 0
          %683 = vmatprep.subr.bf16.mxu0 0
          %684 = vmatpush1.bf16.xpose.msra.mxu0 0
          %685 = vmatprep.subr.bf16.mxu0 0
          %686 = vmatpush1.bf16.xpose.msra.mxu0 0
          %687 = vmatprep.subr.bf16.mxu0 0
          %688 = vmatpush1.bf16.xpose.msra.mxu0 0
          %689 = vmatprep.subr.bf16.mxu0 0
          %690 = vmatpush1.bf16.xpose.msra.mxu0 0
          %691 = vmatprep.subr.bf16.mxu0 0
          %692 = vmatpush1.bf16.xpose.msra.mxu0 0
          %693 = vmatprep.subr.bf16.mxu0 0
          %694 = vmatpush1.bf16.xpose.msra.mxu0 0
          %695 = vmatprep.subr.bf16.mxu0 0
          %696 = vmatpush1.bf16.xpose.msra.mxu0 0
          %697 = vmatprep.subr.bf16.mxu0 0
          %698 = vmatpush1.bf16.xpose.msra.mxu0 0
          %699 = vmatprep.mubr.bf16.mxu0 0
          %700 = vmatmul.mubr.bf16.gmra.mrb[0].mxu0 %v659
          %v701 = vpop.f32.mrb[0].mxu0
          %v702 = vadd.f32 %v630, %v701
          %v703 = vpop.f32.mrb[0].mxu0
          %v704 = vpop.f32.mrb[0].mxu0
          %v705 = vadd.f32 %v635, %v704
          %v706 = vpop.f32.mrb[0].mxu0
          %707 = vmatprep.mubr.bf16.mxu0 0
          %708 = vmatmul.mubr.bf16.gmra.mrb[0].mxu0 %v662
          %v709 = vpop.f32.mrb[0].mxu0
          %v710 = vadd.f32 %v640, %v709
          %v711 = vpop.f32.mrb[0].mxu0
          %v712 = vpop.f32.mrb[0].mxu0
          %v713 = vadd.f32 %v645, %v712
          %v714 = vpop.f32.mrb[0].mxu0
          %715 = vdwg.mxu0
          %v716 = vpack.c.bf16 %v702, %v702
          %v717 = vpack.c.bf16 %v705, %v705
          %v718 = vpack.c.bf16 %v710, %v710
          %v719 = vpack.c.bf16 %v713, %v713
          %vm720 = vcmask 60416
          %721 = vst.msk [vmem:[#allocation2] sm:$0xf] %vm720, %v716
          %722 = vst.msk [vmem:[#allocation2 + $0x4] sm:$0xf] %vm720, %v717
          %723 = vst.msk [vmem:[#allocation2 + $0x8] sm:$0xf] %vm720, %v718
          %724 = vst.msk [vmem:[#allocation2 + $0xc] sm:$0xf] %vm720, %v719
          %v725 = vld [vmem:[%s6] sm:$0xf]
          %v726 = vld [vmem:[%s6 + $0x4] sm:$0xf]
          %v727 = vld [vmem:[%s6 + $0x8] sm:$0xf]
          %v728 = vld [vmem:[%s6 + $0xc] sm:$0xf]
          %v729 = vld [vmem:[%s7] sm:$0xff]
          %v730 = vld [vmem:[%s7 + $0x8] sm:$0xff]
          %v731 = vld [vmem:[%s7 + $0x10] sm:$0xff]
          %v732 = vld [vmem:[%s7 + $0x18] sm:$0xff]
          %734 = vset.pattern.permute.xlu0 0
          %735 = vperm.xlu0 %734, %v729
          %v736 = vpop.permute.xlu0 %735
          %739 = vset.pattern.permute.xlu0 0
          %740 = vperm.xlu0 %739, %v730
          %v741 = vpop.permute.xlu0 %740
          %744 = vset.pattern.permute.xlu0 0
          %745 = vperm.xlu0 %744, %v731
          %v746 = vpop.permute.xlu0 %745
          %749 = vset.pattern.permute.xlu0 0
          %750 = vperm.xlu0 %749, %v732
          %v751 = vpop.permute.xlu0 %750
          %v757 = vunpack.c.l.b16 %v725
          %v758 = vunpack.c.l.b16 %v726
          %v759 = vunpack.c.l.b16 %v727
          %v760 = vunpack.c.l.b16 %v728
          %v761 = vpack.c.b16 %v758, %v757
          %v762 = vpack.c.b16 %v760, %v759
          %v764 = vsel %vm657, %v761, 0
          %v767 = vsel %vm657, %v762, 0
          %769 = vmatprep.subr.bf16.mxu0 0
          %770 = vmatpush1.bf16.xpose.msra.mxu0 %v665
          %771 = vmatprep.subr.bf16.mxu0 0
          %772 = vmatpush1.bf16.xpose.msra.mxu0 0
          %773 = vmatprep.subr.bf16.mxu0 0
          %774 = vmatpush1.bf16.xpose.msra.mxu0 0
          %775 = vmatprep.subr.bf16.mxu0 0
          %776 = vmatpush1.bf16.xpose.msra.mxu0 0
          %777 = vmatprep.subr.bf16.mxu0 0
          %778 = vmatpush1.bf16.xpose.msra.mxu0 0
          %779 = vmatprep.subr.bf16.mxu0 0
          %780 = vmatpush1.bf16.xpose.msra.mxu0 0
          %781 = vmatprep.subr.bf16.mxu0 0
          %782 = vmatpush1.bf16.xpose.msra.mxu0 0
          %783 = vmatprep.subr.bf16.mxu0 0
          %784 = vmatpush1.bf16.xpose.msra.mxu0 0
          %785 = vmatprep.subr.bf16.mxu0 0
          %786 = vmatpush1.bf16.xpose.msra.mxu0 0
          %787 = vmatprep.subr.bf16.mxu0 0
          %788 = vmatpush1.bf16.xpose.msra.mxu0 0
          %789 = vmatprep.subr.bf16.mxu0 0
          %790 = vmatpush1.bf16.xpose.msra.mxu0 0
          %791 = vmatprep.subr.bf16.mxu0 0
          %792 = vmatpush1.bf16.xpose.msra.mxu0 0
          %793 = vmatprep.subr.bf16.mxu0 0
          %794 = vmatpush1.bf16.xpose.msra.mxu0 0
          %795 = vmatprep.subr.bf16.mxu0 0
          %796 = vmatpush1.bf16.xpose.msra.mxu0 0
          %797 = vmatprep.subr.bf16.mxu0 0
          %798 = vmatpush1.bf16.xpose.msra.mxu0 0
          %799 = vmatprep.subr.bf16.mxu0 0
          %800 = vmatpush1.bf16.xpose.msra.mxu0 0
          %801 = vmatprep.mubr.bf16.mxu0 0
          %802 = vmatmul.mubr.bf16.gmra.mrb[0].mxu0 %v764
          %v803 = vpop.f32.mrb[0].mxu0
          %v804 = vadd.f32 %v736, %v803
          %v805 = vpop.f32.mrb[0].mxu0
          %v806 = vpop.f32.mrb[0].mxu0
          %v807 = vadd.f32 %v741, %v806
          %v808 = vpop.f32.mrb[0].mxu0
          %809 = vmatprep.mubr.bf16.mxu0 0
          %810 = vmatmul.mubr.bf16.gmra.mrb[0].mxu0 %v767
          %v811 = vpop.f32.mrb[0].mxu0
          %v812 = vadd.f32 %v746, %v811
          %v813 = vpop.f32.mrb[0].mxu0
          %v814 = vpop.f32.mrb[0].mxu0
          %v815 = vadd.f32 %v751, %v814
          %v816 = vpop.f32.mrb[0].mxu0
          %817 = vdwg.mxu0
          %v818 = vpack.c.bf16 %v804, %v804
          %v819 = vpack.c.bf16 %v807, %v807
          %v820 = vpack.c.bf16 %v812, %v812
          %v821 = vpack.c.bf16 %v815, %v815
          %822 = vst.msk [vmem:[#allocation3] sm:$0xf] %vm720, %v818
          %823 = vst.msk [vmem:[#allocation3 + $0x4] sm:$0xf] %vm720, %v819
          %824 = vst.msk [vmem:[#allocation3 + $0x8] sm:$0xf] %vm720, %v820
          %825 = vst.msk [vmem:[#allocation3 + $0xc] sm:$0xf] %vm720, %v821
        $region96: #{tpu_custom_call.1} parent=91 // pred_fallthru
          _
        %v826 = vld [vmem:[%s608] sm:$0xff]
        %v827 = vld [vmem:[%s2] sm:$0xf]
        %v828 = vld [vmem:[%s2 + $0x4] sm:$0xf]
        %v829 = vld [vmem:[%s2 + $0x8] sm:$0xf]
        %v830 = vld [vmem:[%s2 + $0xc] sm:$0xf]
        %v831 = vpack.c.bf16 %v826, %v826
        %v832 = vld [vmem:[%s3] sm:$0xff]
        %v833 = vld [vmem:[%s3 + $0x8] sm:$0xff]
        %v834 = vld [vmem:[%s3 + $0x10] sm:$0xff]
        %v835 = vld [vmem:[%s3 + $0x18] sm:$0xff]
        %837 = vset.pattern.permute.xlu0 0
        %838 = vperm.xlu0 %837, %v832
        %v839 = vpop.permute.xlu0 %838
        %842 = vset.pattern.permute.xlu0 0
        %843 = vperm.xlu0 %842, %v833
        %v844 = vpop.permute.xlu0 %843
        %847 = vset.pattern.permute.xlu0 0
        %848 = vperm.xlu0 %847, %v834
        %v849 = vpop.permute.xlu0 %848
        %852 = vset.pattern.permute.xlu0 0
        %853 = vperm.xlu0 %852, %v835
        %v854 = vpop.permute.xlu0 %853
        %v860 = vunpack.c.l.b16 %v827
        %v861 = vunpack.c.l.b16 %v828
        %v862 = vunpack.c.l.b16 %v829
        %v863 = vunpack.c.l.b16 %v830
        %v864 = vpack.c.b16 %v861, %v860
        %v865 = vpack.c.b16 %v863, %v862
        %vm866 = vcmask 261120
        %v868 = vsel %vm866, %v864, 0
        %v871 = vsel %vm866, %v865, 0
        %v874 = vsel %vm866, %v831, 0
        %876 = vmatprep.subr.bf16.mxu0 0
        %877 = vmatpush1.bf16.xpose.msra.mxu0 %v874
        %878 = vmatprep.subr.bf16.mxu0 0
        %879 = vmatpush1.bf16.xpose.msra.mxu0 0
        %880 = vmatprep.subr.bf16.mxu0 0
        %881 = vmatpush1.bf16.xpose.msra.mxu0 0
        %882 = vmatprep.subr.bf16.mxu0 0
        %883 = vmatpush1.bf16.xpose.msra.mxu0 0
        %884 = vmatprep.subr.bf16.mxu0 0
        %885 = vmatpush1.bf16.xpose.msra.mxu0 0
        %886 = vmatprep.subr.bf16.mxu0 0
        %887 = vmatpush1.bf16.xpose.msra.mxu0 0
        %888 = vmatprep.subr.bf16.mxu0 0
        %889 = vmatpush1.bf16.xpose.msra.mxu0 0
        %890 = vmatprep.subr.bf16.mxu0 0
        %891 = vmatpush1.bf16.xpose.msra.mxu0 0
        %892 = vmatprep.subr.bf16.mxu0 0
        %893 = vmatpush1.bf16.xpose.msra.mxu0 0
        %894 = vmatprep.subr.bf16.mxu0 0
        %895 = vmatpush1.bf16.xpose.msra.mxu0 0
        %896 = vmatprep.subr.bf16.mxu0 0
        %897 = vmatpush1.bf16.xpose.msra.mxu0 0
        %898 = vmatprep.subr.bf16.mxu0 0
        %899 = vmatpush1.bf16.xpose.msra.mxu0 0
        %900 = vmatprep.subr.bf16.mxu0 0
        %901 = vmatpush1.bf16.xpose.msra.mxu0 0
        %902 = vmatprep.subr.bf16.mxu0 0
        %903 = vmatpush1.bf16.xpose.msra.mxu0 0
        %904 = vmatprep.subr.bf16.mxu0 0
        %905 = vmatpush1.bf16.xpose.msra.mxu0 0
        %906 = vmatprep.subr.bf16.mxu0 0
        %907 = vmatpush1.bf16.xpose.msra.mxu0 0
        %908 = vmatprep.mubr.bf16.mxu0 0
        %909 = vmatmul.mubr.bf16.gmra.mrb[0].mxu0 %v868
        %v910 = vpop.f32.mrb[0].mxu0
        %v911 = vadd.f32 %v839, %v910
        %v912 = vpop.f32.mrb[0].mxu0
        %v913 = vpop.f32.mrb[0].mxu0
        %v914 = vadd.f32 %v844, %v913
        %v915 = vpop.f32.mrb[0].mxu0
        %916 = vmatprep.mubr.bf16.mxu0 0
        %917 = vmatmul.mubr.bf16.gmra.mrb[0].mxu0 %v871
        %v918 = vpop.f32.mrb[0].mxu0
        %v919 = vadd.f32 %v849, %v918
        %v920 = vpop.f32.mrb[0].mxu0
        %v921 = vpop.f32.mrb[0].mxu0
        %v922 = vadd.f32 %v854, %v921
        %v923 = vpop.f32.mrb[0].mxu0
        %924 = vdwg.mxu0
        %925 = vxpose.xlu0.b32.start [1/16] %v911, 128
        %926 = vxpose.xlu0.b32.cont [2/16] 0.0, 128
        %927 = vxpose.xlu0.b32.cont [3/16] 0.0, 128
        %928 = vxpose.xlu0.b32.cont [4/16] 0.0, 128
        %929 = vxpose.xlu0.b32.cont [5/16] 0.0, 128
        %930 = vxpose.xlu0.b32.cont [6/16] 0.0, 128
        %931 = vxpose.xlu0.b32.cont [7/16] 0.0, 128
        %932 = vxpose.xlu0.b32.cont [8/16] 0.0, 128
        %933 = vxpose.xlu0.b32.cont [9/16] 0.0, 128
        %934 = vxpose.xlu0.b32.cont [10/16] 0.0, 128
        %935 = vxpose.xlu0.b32.cont [11/16] 0.0, 128
        %936 = vxpose.xlu0.b32.cont [12/16] 0.0, 128
        %937 = vxpose.xlu0.b32.cont [13/16] 0.0, 128
        %938 = vxpose.xlu0.b32.cont [14/16] 0.0, 128
        %939 = vxpose.xlu0.b32.cont [15/16] 0.0, 128
        %940 = vxpose.xlu0.b32.end [16/16] 0.0, 128
        %v941 = vpop.trf.xlu0
        %v942 = vpop.trf.xlu0
        %v943 = vpop.trf.xlu0
        %v944 = vpop.trf.xlu0
        %v945 = vpop.trf.xlu0
        %v946 = vpop.trf.xlu0
        %v947 = vpop.trf.xlu0
        %v948 = vpop.trf.xlu0
        %v949 = vpop.trf.xlu0
        %v950 = vpop.trf.xlu0
        %v951 = vpop.trf.xlu0
        %v952 = vpop.trf.xlu0
        %v953 = vpop.trf.xlu0
        %v954 = vpop.trf.xlu0
        %v955 = vpop.trf.xlu0
        %v956 = vpop.trf.xlu0
        %957 = vxpose.xlu0.b32.start [1/16] %v914, 128
        %958 = vxpose.xlu0.b32.cont [2/16] 0.0, 128
        %959 = vxpose.xlu0.b32.cont [3/16] 0.0, 128
        %960 = vxpose.xlu0.b32.cont [4/16] 0.0, 128
        %961 = vxpose.xlu0.b32.cont [5/16] 0.0, 128
        %962 = vxpose.xlu0.b32.cont [6/16] 0.0, 128
        %963 = vxpose.xlu0.b32.cont [7/16] 0.0, 128
        %964 = vxpose.xlu0.b32.cont [8/16] 0.0, 128
        %965 = vxpose.xlu0.b32.cont [9/16] 0.0, 128
        %966 = vxpose.xlu0.b32.cont [10/16] 0.0, 128
        %967 = vxpose.xlu0.b32.cont [11/16] 0.0, 128
        %968 = vxpose.xlu0.b32.cont [12/16] 0.0, 128
        %969 = vxpose.xlu0.b32.cont [13/16] 0.0, 128
        %970 = vxpose.xlu0.b32.cont [14/16] 0.0, 128
        %971 = vxpose.xlu0.b32.cont [15/16] 0.0, 128
        %972 = vxpose.xlu0.b32.end [16/16] 0.0, 128
        %v973 = vpop.trf.xlu0
        %v974 = vpop.trf.xlu0
        %v975 = vpop.trf.xlu0
        %v976 = vpop.trf.xlu0
        %v977 = vpop.trf.xlu0
        %v978 = vpop.trf.xlu0
        %v979 = vpop.trf.xlu0
        %v980 = vpop.trf.xlu0
        %v981 = vpop.trf.xlu0
        %v982 = vpop.trf.xlu0
        %v983 = vpop.trf.xlu0
        %v984 = vpop.trf.xlu0
        %v985 = vpop.trf.xlu0
        %v986 = vpop.trf.xlu0
        %v987 = vpop.trf.xlu0
        %v988 = vpop.trf.xlu0
        %989 = vxpose.xlu0.b32.start [1/16] %v919, 128
        %990 = vxpose.xlu0.b32.cont [2/16] 0.0, 128
        %991 = vxpose.xlu0.b32.cont [3/16] 0.0, 128
        %992 = vxpose.xlu0.b32.cont [4/16] 0.0, 128
        %993 = vxpose.xlu0.b32.cont [5/16] 0.0, 128
        %994 = vxpose.xlu0.b32.cont [6/16] 0.0, 128
        %995 = vxpose.xlu0.b32.cont [7/16] 0.0, 128
        %996 = vxpose.xlu0.b32.cont [8/16] 0.0, 128
        %997 = vxpose.xlu0.b32.cont [9/16] 0.0, 128
        %998 = vxpose.xlu0.b32.cont [10/16] 0.0, 128
        %999 = vxpose.xlu0.b32.cont [11/16] 0.0, 128
        %1000 = vxpose.xlu0.b32.cont [12/16] 0.0, 128
        %1001 = vxpose.xlu0.b32.cont [13/16] 0.0, 128
        %1002 = vxpose.xlu0.b32.cont [14/16] 0.0, 128
        %1003 = vxpose.xlu0.b32.cont [15/16] 0.0, 128
        %1004 = vxpose.xlu0.b32.end [16/16] 0.0, 128
        %v1005 = vpop.trf.xlu0
        %v1006 = vpop.trf.xlu0
        %v1007 = vpop.trf.xlu0
        %v1008 = vpop.trf.xlu0
        %v1009 = vpop.trf.xlu0
        %v1010 = vpop.trf.xlu0
        %v1011 = vpop.trf.xlu0
        %v1012 = vpop.trf.xlu0
        %v1013 = vpop.trf.xlu0
        %v1014 = vpop.trf.xlu0
        %v1015 = vpop.trf.xlu0
        %v1016 = vpop.trf.xlu0
        %v1017 = vpop.trf.xlu0
        %v1018 = vpop.trf.xlu0
        %v1019 = vpop.trf.xlu0
        %v1020 = vpop.trf.xlu0
        %1021 = vxpose.xlu0.b32.start [1/16] %v922, 128
        %1022 = vxpose.xlu0.b32.cont [2/16] 0.0, 128
        %1023 = vxpose.xlu0.b32.cont [3/16] 0.0, 128
        %1024 = vxpose.xlu0.b32.cont [4/16] 0.0, 128
        %1025 = vxpose.xlu0.b32.cont [5/16] 0.0, 128
        %1026 = vxpose.xlu0.b32.cont [6/16] 0.0, 128
        %1027 = vxpose.xlu0.b32.cont [7/16] 0.0, 128
        %1028 = vxpose.xlu0.b32.cont [8/16] 0.0, 128
        %1029 = vxpose.xlu0.b32.cont [9/16] 0.0, 128
        %1030 = vxpose.xlu0.b32.cont [10/16] 0.0, 128
        %1031 = vxpose.xlu0.b32.cont [11/16] 0.0, 128
        %1032 = vxpose.xlu0.b32.cont [12/16] 0.0, 128
        %1033 = vxpose.xlu0.b32.cont [13/16] 0.0, 128
        %1034 = vxpose.xlu0.b32.cont [14/16] 0.0, 128
        %1035 = vxpose.xlu0.b32.cont [15/16] 0.0, 128
        %1036 = vxpose.xlu0.b32.end [16/16] 0.0, 128
        %v1037 = vpop.trf.xlu0
        %v1038 = vpop.trf.xlu0
        %v1039 = vpop.trf.xlu0
        %v1040 = vpop.trf.xlu0
        %v1041 = vpop.trf.xlu0
        %v1042 = vpop.trf.xlu0
        %v1043 = vpop.trf.xlu0
        %v1044 = vpop.trf.xlu0
        %v1045 = vpop.trf.xlu0
        %v1046 = vpop.trf.xlu0
        %v1047 = vpop.trf.xlu0
        %v1048 = vpop.trf.xlu0
        %v1049 = vpop.trf.xlu0
        %v1050 = vpop.trf.xlu0
        %v1051 = vpop.trf.xlu0
        %v1052 = vpop.trf.xlu0
        %v1053 = vpack.c.bf16 %v941, %v941
        %v1054 = vpack.c.bf16 %v973, %v973
        %v1055 = vpack.c.bf16 %v1005, %v1005
        %v1056 = vpack.c.bf16 %v1037, %v1037
        %v1057 = vld [vmem:[#allocation2] sm:$0xf]
        %v1058 = vld [vmem:[#allocation2 + $0x4] sm:$0xf]
        %v1059 = vld [vmem:[#allocation2 + $0x8] sm:$0xf]
        %v1060 = vld [vmem:[#allocation2 + $0xc] sm:$0xf]
        %v1061 = vld [vmem:[#allocation3] sm:$0xf]
        %v1062 = vld [vmem:[#allocation3 + $0x4] sm:$0xf]
        %v1063 = vld [vmem:[#allocation3 + $0x8] sm:$0xf]
        %v1064 = vld [vmem:[#allocation3 + $0xc] sm:$0xf]
        %vm1065 = vcmask 64512
        %v1067 = vsel %vm1065, %v1053, 0
        %vm1069 = vcmask 1043456
        %v1071 = vsel %vm1069, %v1057, 0
        %1073 = vmatprep.subr.bf16.mxu0 0
        %1074 = vmatpush1.bf16.msra.mxu0 %v1071
        %1075 = vmatprep.subr.bf16.mxu0 0
        %1076 = vmatpush1.bf16.msra.mxu0 0
        %1077 = vmatprep.subr.bf16.mxu0 0
        %1078 = vmatpush1.bf16.msra.mxu0 0
        %1079 = vmatprep.subr.bf16.mxu0 0
        %1080 = vmatpush1.bf16.msra.mxu0 0
        %1081 = vmatprep.subr.bf16.mxu0 0
        %1082 = vmatpush1.bf16.msra.mxu0 0
        %1083 = vmatprep.subr.bf16.mxu0 0
        %1084 = vmatpush1.bf16.msra.mxu0 0
        %1085 = vmatprep.subr.bf16.mxu0 0
        %1086 = vmatpush1.bf16.msra.mxu0 0
        %1087 = vmatprep.subr.bf16.mxu0 0
        %1088 = vmatpush1.bf16.msra.mxu0 0
        %1089 = vmatprep.subr.bf16.mxu0 0
        %1090 = vmatpush1.bf16.msra.mxu0 0
        %1091 = vmatprep.subr.bf16.mxu0 0
        %1092 = vmatpush1.bf16.msra.mxu0 0
        %1093 = vmatprep.subr.bf16.mxu0 0
        %1094 = vmatpush1.bf16.msra.mxu0 0
        %1095 = vmatprep.subr.bf16.mxu0 0
        %1096 = vmatpush1.bf16.msra.mxu0 0
        %1097 = vmatprep.subr.bf16.mxu0 0
        %1098 = vmatpush1.bf16.msra.mxu0 0
        %1099 = vmatprep.subr.bf16.mxu0 0
        %1100 = vmatpush1.bf16.msra.mxu0 0
        %1101 = vmatprep.subr.bf16.mxu0 0
        %1102 = vmatpush1.bf16.msra.mxu0 0
        %1103 = vmatprep.subr.bf16.mxu0 0
        %1104 = vmatpush1.bf16.msra.mxu0 0
        %1105 = vmatprep.mubr.bf16.mxu0 0
        %1106 = vmatmul.mubr.bf16.gmra.mrb[0].mxu0 %v1067
        %v1107 = vpop.f32.mrb[0].mxu0
        %v1108 = vadd.f32 0.0, %v1107
        %v1109 = vpop.f32.mrb[0].mxu0
        %v1110 = vpop.f32.mrb[0].mxu0
        %v1111 = vpop.f32.mrb[0].mxu0
        %1112 = vdwg.mxu0
        %v1114 = vsel %vm1065, %v1054, 0
        %v1117 = vsel %vm1069, %v1058, 0
        %1119 = vmatprep.subr.bf16.mxu0 0
        %1120 = vmatpush1.bf16.msra.mxu0 %v1117
        %1121 = vmatprep.subr.bf16.mxu0 0
        %1122 = vmatpush1.bf16.msra.mxu0 0
        %1123 = vmatprep.subr.bf16.mxu0 0
        %1124 = vmatpush1.bf16.msra.mxu0 0
        %1125 = vmatprep.subr.bf16.mxu0 0
        %1126 = vmatpush1.bf16.msra.mxu0 0
        %1127 = vmatprep.subr.bf16.mxu0 0
        %1128 = vmatpush1.bf16.msra.mxu0 0
        %1129 = vmatprep.subr.bf16.mxu0 0
        %1130 = vmatpush1.bf16.msra.mxu0 0
        %1131 = vmatprep.subr.bf16.mxu0 0
        %1132 = vmatpush1.bf16.msra.mxu0 0
        %1133 = vmatprep.subr.bf16.mxu0 0
        %1134 = vmatpush1.bf16.msra.mxu0 0
        %1135 = vmatprep.subr.bf16.mxu0 0
        %1136 = vmatpush1.bf16.msra.mxu0 0
        %1137 = vmatprep.subr.bf16.mxu0 0
        %1138 = vmatpush1.bf16.msra.mxu0 0
        %1139 = vmatprep.subr.bf16.mxu0 0
        %1140 = vmatpush1.bf16.msra.mxu0 0
        %1141 = vmatprep.subr.bf16.mxu0 0
        %1142 = vmatpush1.bf16.msra.mxu0 0
        %1143 = vmatprep.subr.bf16.mxu0 0
        %1144 = vmatpush1.bf16.msra.mxu0 0
        %1145 = vmatprep.subr.bf16.mxu0 0
        %1146 = vmatpush1.bf16.msra.mxu0 0
        %1147 = vmatprep.subr.bf16.mxu0 0
        %1148 = vmatpush1.bf16.msra.mxu0 0
        %1149 = vmatprep.subr.bf16.mxu0 0
        %1150 = vmatpush1.bf16.msra.mxu0 0
        %1151 = vmatprep.mubr.bf16.mxu0 0
        %1152 = vmatmul.mubr.bf16.gmra.mrb[0].mxu0 %v1114
        %v1153 = vpop.f32.mrb[0].mxu0
        %v1154 = vadd.f32 0.0, %v1153
        %v1155 = vpop.f32.mrb[0].mxu0
        %v1156 = vpop.f32.mrb[0].mxu0
        %v1157 = vpop.f32.mrb[0].mxu0
        %1158 = vdwg.mxu0
        %v1160 = vsel %vm1065, %v1055, 0
        %v1163 = vsel %vm1069, %v1059, 0
        %1165 = vmatprep.subr.bf16.mxu0 0
        %1166 = vmatpush1.bf16.msra.mxu0 %v1163
        %1167 = vmatprep.subr.bf16.mxu0 0
        %1168 = vmatpush1.bf16.msra.mxu0 0
        %1169 = vmatprep.subr.bf16.mxu0 0
        %1170 = vmatpush1.bf16.msra.mxu0 0
        %1171 = vmatprep.subr.bf16.mxu0 0
        %1172 = vmatpush1.bf16.msra.mxu0 0
        %1173 = vmatprep.subr.bf16.mxu0 0
        %1174 = vmatpush1.bf16.msra.mxu0 0
        %1175 = vmatprep.subr.bf16.mxu0 0
        %1176 = vmatpush1.bf16.msra.mxu0 0
        %1177 = vmatprep.subr.bf16.mxu0 0
        %1178 = vmatpush1.bf16.msra.mxu0 0
        %1179 = vmatprep.subr.bf16.mxu0 0
        %1180 = vmatpush1.bf16.msra.mxu0 0
        %1181 = vmatprep.subr.bf16.mxu0 0
        %1182 = vmatpush1.bf16.msra.mxu0 0
        %1183 = vmatprep.subr.bf16.mxu0 0
        %1184 = vmatpush1.bf16.msra.mxu0 0
        %1185 = vmatprep.subr.bf16.mxu0 0
        %1186 = vmatpush1.bf16.msra.mxu0 0
        %1187 = vmatprep.subr.bf16.mxu0 0
        %1188 = vmatpush1.bf16.msra.mxu0 0
        %1189 = vmatprep.subr.bf16.mxu0 0
        %1190 = vmatpush1.bf16.msra.mxu0 0
        %1191 = vmatprep.subr.bf16.mxu0 0
        %1192 = vmatpush1.bf16.msra.mxu0 0
        %1193 = vmatprep.subr.bf16.mxu0 0
        %1194 = vmatpush1.bf16.msra.mxu0 0
        %1195 = vmatprep.subr.bf16.mxu0 0
        %1196 = vmatpush1.bf16.msra.mxu0 0
        %1197 = vmatprep.mubr.bf16.mxu0 0
        %1198 = vmatmul.mubr.bf16.gmra.mrb[0].mxu0 %v1160
        %v1199 = vpop.f32.mrb[0].mxu0
        %v1200 = vadd.f32 0.0, %v1199
        %v1201 = vpop.f32.mrb[0].mxu0
        %v1202 = vpop.f32.mrb[0].mxu0
        %v1203 = vpop.f32.mrb[0].mxu0
        %1204 = vdwg.mxu0
        %v1206 = vsel %vm1065, %v1056, 0
        %v1209 = vsel %vm1069, %v1060, 0
        %1211 = vmatprep.subr.bf16.mxu0 0
        %1212 = vmatpush1.bf16.msra.mxu0 %v1209
        %1213 = vmatprep.subr.bf16.mxu0 0
        %1214 = vmatpush1.bf16.msra.mxu0 0
        %1215 = vmatprep.subr.bf16.mxu0 0
        %1216 = vmatpush1.bf16.msra.mxu0 0
        %1217 = vmatprep.subr.bf16.mxu0 0
        %1218 = vmatpush1.bf16.msra.mxu0 0
        %1219 = vmatprep.subr.bf16.mxu0 0
        %1220 = vmatpush1.bf16.msra.mxu0 0
        %1221 = vmatprep.subr.bf16.mxu0 0
        %1222 = vmatpush1.bf16.msra.mxu0 0
        %1223 = vmatprep.subr.bf16.mxu0 0
        %1224 = vmatpush1.bf16.msra.mxu0 0
        %1225 = vmatprep.subr.bf16.mxu0 0
        %1226 = vmatpush1.bf16.msra.mxu0 0
        %1227 = vmatprep.subr.bf16.mxu0 0
        %1228 = vmatpush1.bf16.msra.mxu0 0
        %1229 = vmatprep.subr.bf16.mxu0 0
        %1230 = vmatpush1.bf16.msra.mxu0 0
        %1231 = vmatprep.subr.bf16.mxu0 0
        %1232 = vmatpush1.bf16.msra.mxu0 0
        %1233 = vmatprep.subr.bf16.mxu0 0
        %1234 = vmatpush1.bf16.msra.mxu0 0
        %1235 = vmatprep.subr.bf16.mxu0 0
        %1236 = vmatpush1.bf16.msra.mxu0 0
        %1237 = vmatprep.subr.bf16.mxu0 0
        %1238 = vmatpush1.bf16.msra.mxu0 0
        %1239 = vmatprep.subr.bf16.mxu0 0
        %1240 = vmatpush1.bf16.msra.mxu0 0
        %1241 = vmatprep.subr.bf16.mxu0 0
        %1242 = vmatpush1.bf16.msra.mxu0 0
        %1243 = vmatprep.mubr.bf16.mxu0 0
        %1244 = vmatmul.mubr.bf16.gmra.mrb[0].mxu0 %v1206
        %v1245 = vpop.f32.mrb[0].mxu0
        %v1246 = vadd.f32 0.0, %v1245
        %v1247 = vpop.f32.mrb[0].mxu0
        %v1248 = vpop.f32.mrb[0].mxu0
        %v1249 = vpop.f32.mrb[0].mxu0
        %1250 = vdwg.mxu0
        %v1251 = vsel %vm1065, %v1108, -inf
        %1252 = vmax.xlane.f32.xlu0 %v1251
        %v1253 = vpop.xlane.xlu0 %1252
        %v1254 = vsel %vm1065, %v1154, -inf
        %1255 = vmax.xlane.f32.xlu0 %v1254
        %v1256 = vpop.xlane.xlu0 %1255
        %v1257 = vsel %vm1065, %v1200, -inf
        %1258 = vmax.xlane.f32.xlu0 %v1257
        %v1259 = vpop.xlane.xlu0 %1258
        %v1260 = vsel %vm1065, %v1246, -inf
        %1261 = vmax.xlane.f32.xlu0 %v1260
        %v1262 = vpop.xlane.xlu0 %1261
        %v1263 = vsub.f32 -inf, %v1253
        %v1264 = vsub.f32 -inf, %v1256
        %v1265 = vsub.f32 -inf, %v1259
        %v1266 = vsub.f32 -inf, %v1262
        %v1267 = vmul.f32 %v1263, 1.442695
        %v1268 = vpow.pop %v1267
        %v1269 = vmul.f32 %v1264, 1.442695
        %v1270 = vpow.pop %v1269
        %v1271 = vmul.f32 %v1265, 1.442695
        %v1272 = vpow.pop %v1271
        %v1273 = vmul.f32 %v1266, 1.442695
        %v1274 = vpow.pop %v1273
        %v1275 = vsub.f32 %v1108, %v1253
        %v1276 = vsub.f32 %v1154, %v1256
        %v1277 = vsub.f32 %v1200, %v1259
        %v1278 = vsub.f32 %v1246, %v1262
        %v1279 = vmul.f32 %v1275, 1.442695
        %v1280 = vpow.pop %v1279
        %v1281 = vmul.f32 %v1276, 1.442695
        %v1282 = vpow.pop %v1281
        %v1283 = vmul.f32 %v1277, 1.442695
        %v1284 = vpow.pop %v1283
        %v1285 = vmul.f32 %v1278, 1.442695
        %v1286 = vpow.pop %v1285
        %v1287 = vmul.f32 %v1268, 0.0
        %v1288 = vmul.f32 %v1270, 0.0
        %v1289 = vmul.f32 %v1272, 0.0
        %v1290 = vmul.f32 %v1274, 0.0
        %v1291 = vsel %vm1065, %v1280, 0.0
        %1292 = vadd.xlane.f32.xlu0 %v1291
        %v1293 = vpop.xlane.xlu0 %1292
        %v1294 = vsel %vm1065, %v1282, 0.0
        %1295 = vadd.xlane.f32.xlu0 %v1294
        %v1296 = vpop.xlane.xlu0 %1295
        %v1297 = vsel %vm1065, %v1284, 0.0
        %1298 = vadd.xlane.f32.xlu0 %v1297
        %v1299 = vpop.xlane.xlu0 %1298
        %v1300 = vsel %vm1065, %v1286, 0.0
        %1301 = vadd.xlane.f32.xlu0 %v1300
        %v1302 = vpop.xlane.xlu0 %1301
        %v1303 = vadd.f32 %v1287, %v1293
        %v1304 = vadd.f32 %v1288, %v1296
        %v1305 = vadd.f32 %v1289, %v1299
        %v1306 = vadd.f32 %v1290, %v1302
        %v1307 = vpack.c.bf16 %v1280, %v1280
        %v1308 = vpack.c.bf16 %v1282, %v1282
        %v1309 = vpack.c.bf16 %v1284, %v1284
        %v1310 = vpack.c.bf16 %v1286, %v1286
        %v1312 = vsel %vm1065, %v1307, 0
        %v1315 = vsel %vm1065, %v1061, 0
        %1317 = vmatprep.subr.bf16.mxu0 0
        %1318 = vmatpush1.bf16.xpose.msra.mxu0 %v1315
        %1319 = vmatprep.subr.bf16.mxu0 0
        %1320 = vmatpush1.bf16.xpose.msra.mxu0 0
        %1321 = vmatprep.subr.bf16.mxu0 0
        %1322 = vmatpush1.bf16.xpose.msra.mxu0 0
        %1323 = vmatprep.subr.bf16.mxu0 0
        %1324 = vmatpush1.bf16.xpose.msra.mxu0 0
        %1325 = vmatprep.subr.bf16.mxu0 0
        %1326 = vmatpush1.bf16.xpose.msra.mxu0 0
        %1327 = vmatprep.subr.bf16.mxu0 0
        %1328 = vmatpush1.bf16.xpose.msra.mxu0 0
        %1329 = vmatprep.subr.bf16.mxu0 0
        %1330 = vmatpush1.bf16.xpose.msra.mxu0 0
        %1331 = vmatprep.subr.bf16.mxu0 0
        %1332 = vmatpush1.bf16.xpose.msra.mxu0 0
        %1333 = vmatprep.subr.bf16.mxu0 0
        %1334 = vmatpush1.bf16.xpose.msra.mxu0 0
        %1335 = vmatprep.subr.bf16.mxu0 0
        %1336 = vmatpush1.bf16.xpose.msra.mxu0 0
        %1337 = vmatprep.subr.bf16.mxu0 0
        %1338 = vmatpush1.bf16.xpose.msra.mxu0 0
        %1339 = vmatprep.subr.bf16.mxu0 0
        %1340 = vmatpush1.bf16.xpose.msra.mxu0 0
        %1341 = vmatprep.subr.bf16.mxu0 0
        %1342 = vmatpush1.bf16.xpose.msra.mxu0 0
        %1343 = vmatprep.subr.bf16.mxu0 0
        %1344 = vmatpush1.bf16.xpose.msra.mxu0 0
        %1345 = vmatprep.subr.bf16.mxu0 0
        %1346 = vmatpush1.bf16.xpose.msra.mxu0 0
        %1347 = vmatprep.subr.bf16.mxu0 0
        %1348 = vmatpush1.bf16.xpose.msra.mxu0 0
        %1349 = vmatprep.mubr.bf16.mxu0 0
        %1350 = vmatmul.mubr.bf16.gmra.mrb[0].mxu0 %v1312
        %v1351 = vpop.f32.mrb[0].mxu0
        %v1352 = vadd.f32 0.0, %v1351
        %v1353 = vpop.f32.mrb[0].mxu0
        %v1354 = vpop.f32.mrb[0].mxu0
        %v1355 = vpop.f32.mrb[0].mxu0
        %1356 = vdwg.mxu0
        %v1358 = vsel %vm1065, %v1308, 0
        %v1361 = vsel %vm1065, %v1062, 0
        %1363 = vmatprep.subr.bf16.mxu0 0
        %1364 = vmatpush1.bf16.xpose.msra.mxu0 %v1361
        %1365 = vmatprep.subr.bf16.mxu0 0
        %1366 = vmatpush1.bf16.xpose.msra.mxu0 0
        %1367 = vmatprep.subr.bf16.mxu0 0
        %1368 = vmatpush1.bf16.xpose.msra.mxu0 0
        %1369 = vmatprep.subr.bf16.mxu0 0
        %1370 = vmatpush1.bf16.xpose.msra.mxu0 0
        %1371 = vmatprep.subr.bf16.mxu0 0
        %1372 = vmatpush1.bf16.xpose.msra.mxu0 0
        %1373 = vmatprep.subr.bf16.mxu0 0
        %1374 = vmatpush1.bf16.xpose.msra.mxu0 0
        %1375 = vmatprep.subr.bf16.mxu0 0
        %1376 = vmatpush1.bf16.xpose.msra.mxu0 0
        %1377 = vmatprep.subr.bf16.mxu0 0
        %1378 = vmatpush1.bf16.xpose.msra.mxu0 0
        %1379 = vmatprep.subr.bf16.mxu0 0
        %1380 = vmatpush1.bf16.xpose.msra.mxu0 0
        %1381 = vmatprep.subr.bf16.mxu0 0
        %1382 = vmatpush1.bf16.xpose.msra.mxu0 0
        %1383 = vmatprep.subr.bf16.mxu0 0
        %1384 = vmatpush1.bf16.xpose.msra.mxu0 0
        %1385 = vmatprep.subr.bf16.mxu0 0
        %1386 = vmatpush1.bf16.xpose.msra.mxu0 0
        %1387 = vmatprep.subr.bf16.mxu0 0
        %1388 = vmatpush1.bf16.xpose.msra.mxu0 0
        %1389 = vmatprep.subr.bf16.mxu0 0
        %1390 = vmatpush1.bf16.xpose.msra.mxu0 0
        %1391 = vmatprep.subr.bf16.mxu0 0
        %1392 = vmatpush1.bf16.xpose.msra.mxu0 0
        %1393 = vmatprep.subr.bf16.mxu0 0
        %1394 = vmatpush1.bf16.xpose.msra.mxu0 0
        %1395 = vmatprep.mubr.bf16.mxu0 0
        %1396 = vmatmul.mubr.bf16.gmra.mrb[0].mxu0 %v1358
        %v1397 = vpop.f32.mrb[0].mxu0
        %v1398 = vadd.f32 0.0, %v1397
        %v1399 = vpop.f32.mrb[0].mxu0
        %v1400 = vpop.f32.mrb[0].mxu0
        %v1401 = vpop.f32.mrb[0].mxu0
        %1402 = vdwg.mxu0
        %v1404 = vsel %vm1065, %v1309, 0
        %v1407 = vsel %vm1065, %v1063, 0
        %1409 = vmatprep.subr.bf16.mxu0 0
        %1410 = vmatpush1.bf16.xpose.msra.mxu0 %v1407
        %1411 = vmatprep.subr.bf16.mxu0 0
        %1412 = vmatpush1.bf16.xpose.msra.mxu0 0
        %1413 = vmatprep.subr.bf16.mxu0 0
        %1414 = vmatpush1.bf16.xpose.msra.mxu0 0
        %1415 = vmatprep.subr.bf16.mxu0 0
        %1416 = vmatpush1.bf16.xpose.msra.mxu0 0
        %1417 = vmatprep.subr.bf16.mxu0 0
        %1418 = vmatpush1.bf16.xpose.msra.mxu0 0
        %1419 = vmatprep.subr.bf16.mxu0 0
        %1420 = vmatpush1.bf16.xpose.msra.mxu0 0
        %1421 = vmatprep.subr.bf16.mxu0 0
        %1422 = vmatpush1.bf16.xpose.msra.mxu0 0
        %1423 = vmatprep.subr.bf16.mxu0 0
        %1424 = vmatpush1.bf16.xpose.msra.mxu0 0
        %1425 = vmatprep.subr.bf16.mxu0 0
        %1426 = vmatpush1.bf16.xpose.msra.mxu0 0
        %1427 = vmatprep.subr.bf16.mxu0 0
        %1428 = vmatpush1.bf16.xpose.msra.mxu0 0
        %1429 = vmatprep.subr.bf16.mxu0 0
        %1430 = vmatpush1.bf16.xpose.msra.mxu0 0
        %1431 = vmatprep.subr.bf16.mxu0 0
        %1432 = vmatpush1.bf16.xpose.msra.mxu0 0
        %1433 = vmatprep.subr.bf16.mxu0 0
        %1434 = vmatpush1.bf16.xpose.msra.mxu0 0
        %1435 = vmatprep.subr.bf16.mxu0 0
        %1436 = vmatpush1.bf16.xpose.msra.mxu0 0
        %1437 = vmatprep.subr.bf16.mxu0 0
        %1438 = vmatpush1.bf16.xpose.msra.mxu0 0
        %1439 = vmatprep.subr.bf16.mxu0 0
        %1440 = vmatpush1.bf16.xpose.msra.mxu0 0
        %1441 = vmatprep.mubr.bf16.mxu0 0
        %1442 = vmatmul.mubr.bf16.gmra.mrb[0].mxu0 %v1404
        %v1443 = vpop.f32.mrb[0].mxu0
        %v1444 = vadd.f32 0.0, %v1443
        %v1445 = vpop.f32.mrb[0].mxu0
        %v1446 = vpop.f32.mrb[0].mxu0
        %v1447 = vpop.f32.mrb[0].mxu0
        %1448 = vdwg.mxu0
        %v1450 = vsel %vm1065, %v1310, 0
        %v1453 = vsel %vm1065, %v1064, 0
        %1455 = vmatprep.subr.bf16.mxu0 0
        %1456 = vmatpush1.bf16.xpose.msra.mxu0 %v1453
        %1457 = vmatprep.subr.bf16.mxu0 0
        %1458 = vmatpush1.bf16.xpose.msra.mxu0 0
        %1459 = vmatprep.subr.bf16.mxu0 0
        %1460 = vmatpush1.bf16.xpose.msra.mxu0 0
        %1461 = vmatprep.subr.bf16.mxu0 0
        %1462 = vmatpush1.bf16.xpose.msra.mxu0 0
        %1463 = vmatprep.subr.bf16.mxu0 0
        %1464 = vmatpush1.bf16.xpose.msra.mxu0 0
        %1465 = vmatprep.subr.bf16.mxu0 0
        %1466 = vmatpush1.bf16.xpose.msra.mxu0 0
        %1467 = vmatprep.subr.bf16.mxu0 0
        %1468 = vmatpush1.bf16.xpose.msra.mxu0 0
        %1469 = vmatprep.subr.bf16.mxu0 0
        %1470 = vmatpush1.bf16.xpose.msra.mxu0 0
        %1471 = vmatprep.subr.bf16.mxu0 0
        %1472 = vmatpush1.bf16.xpose.msra.mxu0 0
        %1473 = vmatprep.subr.bf16.mxu0 0
        %1474 = vmatpush1.bf16.xpose.msra.mxu0 0
        %1475 = vmatprep.subr.bf16.mxu0 0
        %1476 = vmatpush1.bf16.xpose.msra.mxu0 0
        %1477 = vmatprep.subr.bf16.mxu0 0
        %1478 = vmatpush1.bf16.xpose.msra.mxu0 0
        %1479 = vmatprep.subr.bf16.mxu0 0
        %1480 = vmatpush1.bf16.xpose.msra.mxu0 0
        %1481 = vmatprep.subr.bf16.mxu0 0
        %1482 = vmatpush1.bf16.xpose.msra.mxu0 0
        %1483 = vmatprep.subr.bf16.mxu0 0
        %1484 = vmatpush1.bf16.xpose.msra.mxu0 0
        %1485 = vmatprep.subr.bf16.mxu0 0
        %1486 = vmatpush1.bf16.xpose.msra.mxu0 0
        %1487 = vmatprep.mubr.bf16.mxu0 0
        %1488 = vmatmul.mubr.bf16.gmra.mrb[0].mxu0 %v1450
        %v1489 = vpop.f32.mrb[0].mxu0
        %v1490 = vadd.f32 0.0, %v1489
        %v1491 = vpop.f32.mrb[0].mxu0
        %v1492 = vpop.f32.mrb[0].mxu0
        %v1493 = vpop.f32.mrb[0].mxu0
        %1494 = vdwg.mxu0
        %v1495 = vadd.f32 %v1287, %v1352
        %v1496 = vadd.f32 %v1288, %v1398
        %v1497 = vadd.f32 %v1289, %v1444
        %v1498 = vadd.f32 %v1290, %v1490
        %v1499 = vrcp.pop %v1303
        %v1500 = vrcp.pop %v1304
        %v1501 = vrcp.pop %v1305
        %v1502 = vrcp.pop %v1306
        %v1503 = vmul.f32 %v1495, %v1499
        %v1504 = vmul.f32 %v1496, %v1500
        %v1505 = vmul.f32 %v1497, %v1501
        %v1506 = vmul.f32 %v1498, %v1502
        %1507 = vxpose.xlu0.b32.start [1/16] %v1503, 128
        %1508 = vxpose.xlu0.b32.cont [2/16] 0.0, 128
        %1509 = vxpose.xlu0.b32.cont [3/16] 0.0, 128
        %1510 = vxpose.xlu0.b32.cont [4/16] 0.0, 128
        %1511 = vxpose.xlu0.b32.cont [5/16] 0.0, 128
        %1512 = vxpose.xlu0.b32.cont [6/16] 0.0, 128
        %1513 = vxpose.xlu0.b32.cont [7/16] 0.0, 128
        %1514 = vxpose.xlu0.b32.cont [8/16] 0.0, 128
        %1515 = vxpose.xlu0.b32.cont [9/16] 0.0, 128
        %1516 = vxpose.xlu0.b32.cont [10/16] 0.0, 128
        %1517 = vxpose.xlu0.b32.cont [11/16] 0.0, 128
        %1518 = vxpose.xlu0.b32.cont [12/16] 0.0, 128
        %1519 = vxpose.xlu0.b32.cont [13/16] 0.0, 128
        %1520 = vxpose.xlu0.b32.cont [14/16] 0.0, 128
        %1521 = vxpose.xlu0.b32.cont [15/16] 0.0, 128
        %1522 = vxpose.xlu0.b32.end [16/16] 0.0, 128
        %v1523 = vpop.trf.xlu0
        %v1524 = vpop.trf.xlu0
        %v1525 = vpop.trf.xlu0
        %v1526 = vpop.trf.xlu0
        %v1527 = vpop.trf.xlu0
        %v1528 = vpop.trf.xlu0
        %v1529 = vpop.trf.xlu0
        %v1530 = vpop.trf.xlu0
        %v1531 = vpop.trf.xlu0
        %v1532 = vpop.trf.xlu0
        %v1533 = vpop.trf.xlu0
        %v1534 = vpop.trf.xlu0
        %v1535 = vpop.trf.xlu0
        %v1536 = vpop.trf.xlu0
        %v1537 = vpop.trf.xlu0
        %v1538 = vpop.trf.xlu0
        %1539 = vxpose.xlu0.b32.start [1/16] %v1504, 128
        %1540 = vxpose.xlu0.b32.cont [2/16] 0.0, 128
        %1541 = vxpose.xlu0.b32.cont [3/16] 0.0, 128
        %1542 = vxpose.xlu0.b32.cont [4/16] 0.0, 128
        %1543 = vxpose.xlu0.b32.cont [5/16] 0.0, 128
        %1544 = vxpose.xlu0.b32.cont [6/16] 0.0, 128
        %1545 = vxpose.xlu0.b32.cont [7/16] 0.0, 128
        %1546 = vxpose.xlu0.b32.cont [8/16] 0.0, 128
        %1547 = vxpose.xlu0.b32.cont [9/16] 0.0, 128
        %1548 = vxpose.xlu0.b32.cont [10/16] 0.0, 128
        %1549 = vxpose.xlu0.b32.cont [11/16] 0.0, 128
        %1550 = vxpose.xlu0.b32.cont [12/16] 0.0, 128
        %1551 = vxpose.xlu0.b32.cont [13/16] 0.0, 128
        %1552 = vxpose.xlu0.b32.cont [14/16] 0.0, 128
        %1553 = vxpose.xlu0.b32.cont [15/16] 0.0, 128
        %1554 = vxpose.xlu0.b32.end [16/16] 0.0, 128
        %v1555 = vpop.trf.xlu0
        %v1556 = vpop.trf.xlu0
        %v1557 = vpop.trf.xlu0
        %v1558 = vpop.trf.xlu0
        %v1559 = vpop.trf.xlu0
        %v1560 = vpop.trf.xlu0
        %v1561 = vpop.trf.xlu0
        %v1562 = vpop.trf.xlu0
        %v1563 = vpop.trf.xlu0
        %v1564 = vpop.trf.xlu0
        %v1565 = vpop.trf.xlu0
        %v1566 = vpop.trf.xlu0
        %v1567 = vpop.trf.xlu0
        %v1568 = vpop.trf.xlu0
        %v1569 = vpop.trf.xlu0
        %v1570 = vpop.trf.xlu0
        %1571 = vxpose.xlu0.b32.start [1/16] %v1505, 128
        %1572 = vxpose.xlu0.b32.cont [2/16] 0.0, 128
        %1573 = vxpose.xlu0.b32.cont [3/16] 0.0, 128
        %1574 = vxpose.xlu0.b32.cont [4/16] 0.0, 128
        %1575 = vxpose.xlu0.b32.cont [5/16] 0.0, 128
        %1576 = vxpose.xlu0.b32.cont [6/16] 0.0, 128
        %1577 = vxpose.xlu0.b32.cont [7/16] 0.0, 128
        %1578 = vxpose.xlu0.b32.cont [8/16] 0.0, 128
        %1579 = vxpose.xlu0.b32.cont [9/16] 0.0, 128
        %1580 = vxpose.xlu0.b32.cont [10/16] 0.0, 128
        %1581 = vxpose.xlu0.b32.cont [11/16] 0.0, 128
        %1582 = vxpose.xlu0.b32.cont [12/16] 0.0, 128
        %1583 = vxpose.xlu0.b32.cont [13/16] 0.0, 128
        %1584 = vxpose.xlu0.b32.cont [14/16] 0.0, 128
        %1585 = vxpose.xlu0.b32.cont [15/16] 0.0, 128
        %1586 = vxpose.xlu0.b32.end [16/16] 0.0, 128
        %v1587 = vpop.trf.xlu0
        %v1588 = vpop.trf.xlu0
        %v1589 = vpop.trf.xlu0
        %v1590 = vpop.trf.xlu0
        %v1591 = vpop.trf.xlu0
        %v1592 = vpop.trf.xlu0
        %v1593 = vpop.trf.xlu0
        %v1594 = vpop.trf.xlu0
        %v1595 = vpop.trf.xlu0
        %v1596 = vpop.trf.xlu0
        %v1597 = vpop.trf.xlu0
        %v1598 = vpop.trf.xlu0
        %v1599 = vpop.trf.xlu0
        %v1600 = vpop.trf.xlu0
        %v1601 = vpop.trf.xlu0
        %v1602 = vpop.trf.xlu0
        %1603 = vxpose.xlu0.b32.start [1/16] %v1506, 128
        %1604 = vxpose.xlu0.b32.cont [2/16] 0.0, 128
        %1605 = vxpose.xlu0.b32.cont [3/16] 0.0, 128
        %1606 = vxpose.xlu0.b32.cont [4/16] 0.0, 128
        %1607 = vxpose.xlu0.b32.cont [5/16] 0.0, 128
        %1608 = vxpose.xlu0.b32.cont [6/16] 0.0, 128
        %1609 = vxpose.xlu0.b32.cont [7/16] 0.0, 128
        %1610 = vxpose.xlu0.b32.cont [8/16] 0.0, 128
        %1611 = vxpose.xlu0.b32.cont [9/16] 0.0, 128
        %1612 = vxpose.xlu0.b32.cont [10/16] 0.0, 128
        %1613 = vxpose.xlu0.b32.cont [11/16] 0.0, 128
        %1614 = vxpose.xlu0.b32.cont [12/16] 0.0, 128
        %1615 = vxpose.xlu0.b32.cont [13/16] 0.0, 128
        %1616 = vxpose.xlu0.b32.cont [14/16] 0.0, 128
        %1617 = vxpose.xlu0.b32.cont [15/16] 0.0, 128
        %1618 = vxpose.xlu0.b32.end [16/16] 0.0, 128
        %v1619 = vpop.trf.xlu0
        %v1620 = vpop.trf.xlu0
        %v1621 = vpop.trf.xlu0
        %v1622 = vpop.trf.xlu0
        %v1623 = vpop.trf.xlu0
        %v1624 = vpop.trf.xlu0
        %v1625 = vpop.trf.xlu0
        %v1626 = vpop.trf.xlu0
        %v1627 = vpop.trf.xlu0
        %v1628 = vpop.trf.xlu0
        %v1629 = vpop.trf.xlu0
        %v1630 = vpop.trf.xlu0
        %v1631 = vpop.trf.xlu0
        %v1632 = vpop.trf.xlu0
        %v1633 = vpop.trf.xlu0
        %v1634 = vpop.trf.xlu0
        %1635 = vxpose.xlu0.b32.start [1/16] %v1523, 128
        %1636 = vxpose.xlu0.b32.cont [2/16] %v1555, 128
        %1637 = vxpose.xlu0.b32.cont [3/16] %v1587, 128
        %1638 = vxpose.xlu0.b32.cont [4/16] %v1619, 128
        %1639 = vxpose.xlu0.b32.cont [5/16] 0.0, 128
        %1640 = vxpose.xlu0.b32.cont [6/16] 0.0, 128
        %1641 = vxpose.xlu0.b32.cont [7/16] 0.0, 128
        %1642 = vxpose.xlu0.b32.cont [8/16] 0.0, 128
        %1643 = vxpose.xlu0.b32.cont [9/16] 0.0, 128
        %1644 = vxpose.xlu0.b32.cont [10/16] 0.0, 128
        %1645 = vxpose.xlu0.b32.cont [11/16] 0.0, 128
        %1646 = vxpose.xlu0.b32.cont [12/16] 0.0, 128
        %1647 = vxpose.xlu0.b32.cont [13/16] 0.0, 128
        %1648 = vxpose.xlu0.b32.cont [14/16] 0.0, 128
        %1649 = vxpose.xlu0.b32.cont [15/16] 0.0, 128
        %1650 = vxpose.xlu0.b32.end [16/16] 0.0, 128
        %v1651 = vpop.trf.xlu0
        %v1652 = vpop.trf.xlu0
        %v1653 = vpop.trf.xlu0
        %v1654 = vpop.trf.xlu0
        %v1655 = vpop.trf.xlu0
        %v1656 = vpop.trf.xlu0
        %v1657 = vpop.trf.xlu0
        %v1658 = vpop.trf.xlu0
        %v1659 = vpop.trf.xlu0
        %v1660 = vpop.trf.xlu0
        %v1661 = vpop.trf.xlu0
        %v1662 = vpop.trf.xlu0
        %v1663 = vpop.trf.xlu0
        %v1664 = vpop.trf.xlu0
        %v1665 = vpop.trf.xlu0
        %v1666 = vpop.trf.xlu0
        %v1667 = vpack.c.bf16 %v1651, %v1651
        %v1668 = vld [vmem:[%s8] sm:$0xf]
        %v1669 = vld [vmem:[%s8 + $0x4] sm:$0xf]
        %v1670 = vld [vmem:[%s8 + $0x8] sm:$0xf]
        %v1671 = vld [vmem:[%s8 + $0xc] sm:$0xf]
        %v1672 = vld [vmem:[%s9] sm:$0x1]
        %v1674 = vlaneseq
        %v1675 = vshrl.u32 %v1674, 7
        %v1676 = vsub.s32 0, %v1675
        %v1677 = vrot.slane %v1672, %v1676
        %v1683 = vunpack.c.l.b16 %v1668
        %v1684 = vunpack.c.l.b16 %v1669
        %v1685 = vunpack.c.l.b16 %v1670
        %v1686 = vunpack.c.l.b16 %v1671
        %v1687 = vpack.c.b16 %v1684, %v1683
        %v1688 = vpack.c.b16 %v1686, %v1685
        %v1692 = vsel %vm866, %v1667, 0
        %1694 = vmatprep.subr.bf16.mxu0 0
        %1695 = vmatpush1.bf16.msra.mxu0 %v1687
        %1696 = vmatprep.subr.bf16.mxu0 0
        %1697 = vmatpush1.bf16.msra.mxu0 %v1688
        %1698 = vmatprep.subr.bf16.mxu0 0
        %1699 = vmatpush1.bf16.msra.mxu0 0
        %1700 = vmatprep.subr.bf16.mxu0 0
        %1701 = vmatpush1.bf16.msra.mxu0 0
        %1702 = vmatprep.subr.bf16.mxu0 0
        %1703 = vmatpush1.bf16.msra.mxu0 0
        %1704 = vmatprep.subr.bf16.mxu0 0
        %1705 = vmatpush1.bf16.msra.mxu0 0
        %1706 = vmatprep.subr.bf16.mxu0 0
        %1707 = vmatpush1.bf16.msra.mxu0 0
        %1708 = vmatprep.subr.bf16.mxu0 0
        %1709 = vmatpush1.bf16.msra.mxu0 0
        %1710 = vmatprep.subr.bf16.mxu0 0
        %1711 = vmatpush1.bf16.msra.mxu0 0
        %1712 = vmatprep.subr.bf16.mxu0 0
        %1713 = vmatpush1.bf16.msra.mxu0 0
        %1714 = vmatprep.subr.bf16.mxu0 0
        %1715 = vmatpush1.bf16.msra.mxu0 0
        %1716 = vmatprep.subr.bf16.mxu0 0
        %1717 = vmatpush1.bf16.msra.mxu0 0
        %1718 = vmatprep.subr.bf16.mxu0 0
        %1719 = vmatpush1.bf16.msra.mxu0 0
        %1720 = vmatprep.subr.bf16.mxu0 0
        %1721 = vmatpush1.bf16.msra.mxu0 0
        %1722 = vmatprep.subr.bf16.mxu0 0
        %1723 = vmatpush1.bf16.msra.mxu0 0
        %1724 = vmatprep.subr.bf16.mxu0 0
        %1725 = vmatpush1.bf16.msra.mxu0 0
        %1726 = vmatprep.mubr.bf16.mxu0 0
        %1727 = vmatmul.mubr.bf16.gmra.mrb[0].mxu0 %v1692
        %v1728 = vpop.f32.mrb[0].mxu0
        %v1729 = vadd.f32 %v1677, %v1728
        %v1730 = vpop.f32.mrb[0].mxu0
        %v1731 = vpop.f32.mrb[0].mxu0
        %v1732 = vpop.f32.mrb[0].mxu0
        %1733 = vdwg.mxu0
        %v1734 = vadd.f32 %v826, %v1729
        %v1735 = vld [vmem:[%s10] sm:$0x1]
        %v1736 = vld [vmem:[%s11] sm:$0x1]
        %v1737 = vsel %vm866, %v1734, 0.0
        %1738 = vadd.xlane.f32.xlu0 %v1737
        %v1739 = vpop.xlane.xlu0 %1738
        %v1740 = vrcp.pop 32.0
        %v1741 = vmul.f32 %v1739, %v1740
        %v1742 = vsub.f32 %v1734, %v1741
        %v1743 = vmul.f32 %v1742, %v1742
        %v1744 = vsel %vm866, %v1743, 0.0
        %1745 = vadd.xlane.f32.xlu0 %v1744
        %v1746 = vpop.xlane.xlu0 %1745
        %v1747 = vmul.f32 %v1746, %v1740
        %v1748 = vadd.f32 %v1747, 1e-05
        %v1749 = vrsqrt.pop %v1748
        %v1750 = vmul.f32 %v1742, %v1749
        %v1752 = vlaneseq
        %v1753 = vshrl.u32 %v1752, 7
        %v1754 = vsub.s32 0, %v1753
        %v1755 = vrot.slane %v1735, %v1754
        %v1757 = vmul.f32 %v1750, %v1755
        %v1759 = vlaneseq
        %v1760 = vshrl.u32 %v1759, 7
        %v1761 = vsub.s32 0, %v1760
        %v1762 = vrot.slane %v1736, %v1761
        %v1764 = vadd.f32 %v1757, %v1762
        %v1765 = vpack.c.bf16 %v1764, %v1764
        %v1766 = vld [vmem:[%s12] sm:$0xf]
        %v1767 = vld [vmem:[%s12 + $0x4] sm:$0xf]
        %v1768 = vld [vmem:[%s12 + $0x8] sm:$0xf]
        %v1769 = vld [vmem:[%s12 + $0xc] sm:$0xf]
        %v1770 = vld [vmem:[%s13] sm:$0x1]
        %v1772 = vlaneseq
        %v1773 = vshrl.u32 %v1772, 7
        %v1774 = vsub.s32 0, %v1773
        %v1775 = vrot.slane %v1770, %v1774
        %v1781 = vunpack.c.l.b16 %v1766
        %v1782 = vunpack.c.l.b16 %v1767
        %v1783 = vunpack.c.l.b16 %v1768
        %v1784 = vunpack.c.l.b16 %v1769
        %v1785 = vpack.c.b16 %v1782, %v1781
        %v1786 = vpack.c.b16 %v1784, %v1783
        %v1790 = vsel %vm866, %v1765, 0
        %1792 = vmatprep.subr.bf16.mxu0 0
        %1793 = vmatpush1.bf16.msra.mxu0 %v1785
        %1794 = vmatprep.subr.bf16.mxu0 0
        %1795 = vmatpush1.bf16.msra.mxu0 %v1786
        %1796 = vmatprep.subr.bf16.mxu0 0
        %1797 = vmatpush1.bf16.msra.mxu0 0
        %1798 = vmatprep.subr.bf16.mxu0 0
        %1799 = vmatpush1.bf16.msra.mxu0 0
        %1800 = vmatprep.subr.bf16.mxu0 0
        %1801 = vmatpush1.bf16.msra.mxu0 0
        %1802 = vmatprep.subr.bf16.mxu0 0
        %1803 = vmatpush1.bf16.msra.mxu0 0
        %1804 = vmatprep.subr.bf16.mxu0 0
        %1805 = vmatpush1.bf16.msra.mxu0 0
        %1806 = vmatprep.subr.bf16.mxu0 0
        %1807 = vmatpush1.bf16.msra.mxu0 0
        %1808 = vmatprep.subr.bf16.mxu0 0
        %1809 = vmatpush1.bf16.msra.mxu0 0
        %1810 = vmatprep.subr.bf16.mxu0 0
        %1811 = vmatpush1.bf16.msra.mxu0 0
        %1812 = vmatprep.subr.bf16.mxu0 0
        %1813 = vmatpush1.bf16.msra.mxu0 0
        %1814 = vmatprep.subr.bf16.mxu0 0
        %1815 = vmatpush1.bf16.msra.mxu0 0
        %1816 = vmatprep.subr.bf16.mxu0 0
        %1817 = vmatpush1.bf16.msra.mxu0 0
        %1818 = vmatprep.subr.bf16.mxu0 0
        %1819 = vmatpush1.bf16.msra.mxu0 0
        %1820 = vmatprep.subr.bf16.mxu0 0
        %1821 = vmatpush1.bf16.msra.mxu0 0
        %1822 = vmatprep.subr.bf16.mxu0 0
        %1823 = vmatpush1.bf16.msra.mxu0 0
        %1824 = vmatprep.mubr.bf16.mxu0 0
        %1825 = vmatmul.mubr.bf16.gmra.mrb[0].mxu0 %v1790
        %v1826 = vpop.f32.mrb[0].mxu0
        %v1827 = vadd.f32 %v1775, %v1826
        %v1828 = vpop.f32.mrb[0].mxu0
        %v1829 = vpop.f32.mrb[0].mxu0
        %v1830 = vpop.f32.mrb[0].mxu0
        %1831 = vdwg.mxu0
        %v1832 = vmax.f32 %v1827, 0.0
        %v1833 = vpack.c.bf16 %v1832, %v1832
        %v1834 = vld [vmem:[%s14] sm:$0xf]
        %v1835 = vld [vmem:[%s14 + $0x4] sm:$0xf]
        %v1836 = vld [vmem:[%s14 + $0x8] sm:$0xf]
        %v1837 = vld [vmem:[%s14 + $0xc] sm:$0xf]
        %v1838 = vld [vmem:[%s14 + $0x10] sm:$0xf]
        %v1839 = vld [vmem:[%s14 + $0x14] sm:$0xf]
        %v1840 = vld [vmem:[%s14 + $0x18] sm:$0xf]
        %v1841 = vld [vmem:[%s14 + $0x1c] sm:$0xf]
        %v1842 = vld [vmem:[%s15] sm:$0x1]
        %v1844 = vlaneseq
        %v1845 = vshrl.u32 %v1844, 7
        %v1846 = vsub.s32 0, %v1845
        %v1847 = vrot.slane %v1842, %v1846
        %v1857 = vunpack.c.l.b16 %v1834
        %v1858 = vunpack.c.l.b16 %v1835
        %v1859 = vunpack.c.l.b16 %v1836
        %v1860 = vunpack.c.l.b16 %v1837
        %v1861 = vunpack.c.l.b16 %v1838
        %v1862 = vunpack.c.l.b16 %v1839
        %v1863 = vunpack.c.l.b16 %v1840
        %v1864 = vunpack.c.l.b16 %v1841
        %v1865 = vpack.c.b16 %v1858, %v1857
        %v1866 = vpack.c.b16 %v1860, %v1859
        %v1867 = vpack.c.b16 %v1862, %v1861
        %v1868 = vpack.c.b16 %v1864, %v1863
        %vm1873 = vcmask 523264
        %v1875 = vsel %vm1873, %v1833, 0
        %1877 = vmatprep.subr.bf16.mxu0 0
        %1878 = vmatpush1.bf16.msra.mxu0 %v1865
        %1879 = vmatprep.subr.bf16.mxu0 0
        %1880 = vmatpush1.bf16.msra.mxu0 %v1866
        %1881 = vmatprep.subr.bf16.mxu0 0
        %1882 = vmatpush1.bf16.msra.mxu0 %v1867
        %1883 = vmatprep.subr.bf16.mxu0 0
        %1884 = vmatpush1.bf16.msra.mxu0 %v1868
        %1885 = vmatprep.subr.bf16.mxu0 0
        %1886 = vmatpush1.bf16.msra.mxu0 0
        %1887 = vmatprep.subr.bf16.mxu0 0
        %1888 = vmatpush1.bf16.msra.mxu0 0
        %1889 = vmatprep.subr.bf16.mxu0 0
        %1890 = vmatpush1.bf16.msra.mxu0 0
        %1891 = vmatprep.subr.bf16.mxu0 0
        %1892 = vmatpush1.bf16.msra.mxu0 0
        %1893 = vmatprep.subr.bf16.mxu0 0
        %1894 = vmatpush1.bf16.msra.mxu0 0
        %1895 = vmatprep.subr.bf16.mxu0 0
        %1896 = vmatpush1.bf16.msra.mxu0 0
        %1897 = vmatprep.subr.bf16.mxu0 0
        %1898 = vmatpush1.bf16.msra.mxu0 0
        %1899 = vmatprep.subr.bf16.mxu0 0
        %1900 = vmatpush1.bf16.msra.mxu0 0
        %1901 = vmatprep.subr.bf16.mxu0 0
        %1902 = vmatpush1.bf16.msra.mxu0 0
        %1903 = vmatprep.subr.bf16.mxu0 0
        %1904 = vmatpush1.bf16.msra.mxu0 0
        %1905 = vmatprep.subr.bf16.mxu0 0
        %1906 = vmatpush1.bf16.msra.mxu0 0
        %1907 = vmatprep.subr.bf16.mxu0 0
        %1908 = vmatpush1.bf16.msra.mxu0 0
        %1909 = vmatprep.mubr.bf16.mxu0 0
        %1910 = vmatmul.mubr.bf16.gmra.mrb[0].mxu0 %v1875
        %v1911 = vpop.f32.mrb[0].mxu0
        %v1912 = vadd.f32 %v1847, %v1911
        %v1913 = vpop.f32.mrb[0].mxu0
        %v1914 = vpop.f32.mrb[0].mxu0
        %v1915 = vpop.f32.mrb[0].mxu0
        %1916 = vdwg.mxu0
        %v1917 = vadd.f32 %v1764, %v1912
        %v1918 = vld [vmem:[%s16] sm:$0x1]
        %v1919 = vld [vmem:[%s17] sm:$0x1]
        %v1920 = vsel %vm866, %v1917, 0.0
        %1921 = vadd.xlane.f32.xlu0 %v1920
        %v1922 = vpop.xlane.xlu0 %1921
        %v1923 = vmul.f32 %v1922, %v1740
        %v1924 = vsub.f32 %v1917, %v1923
        %v1925 = vmul.f32 %v1924, %v1924
        %v1926 = vsel %vm866, %v1925, 0.0
        %1927 = vadd.xlane.f32.xlu0 %v1926
        %v1928 = vpop.xlane.xlu0 %1927
        %v1929 = vmul.f32 %v1928, %v1740
        %v1930 = vadd.f32 %v1929, 1e-05
        %v1931 = vrsqrt.pop %v1930
        %v1932 = vmul.f32 %v1924, %v1931
        %v1934 = vlaneseq
        %v1935 = vshrl.u32 %v1934, 7
        %v1936 = vsub.s32 0, %v1935
        %v1937 = vrot.slane %v1918, %v1936
        %v1939 = vmul.f32 %v1932, %v1937
        %v1941 = vlaneseq
        %v1942 = vshrl.u32 %v1941, 7
        %v1943 = vsub.s32 0, %v1942
        %v1944 = vrot.slane %v1919, %v1943
        %v1946 = vadd.f32 %v1939, %v1944
        %1947 = vst.msk [vmem:[%s601] sm:$0xff] %vm866, %v1946
        %s1948 = sand.u32 %s444, 1
        %s1949 = scalar_lea.sflag [#allocation5], %s1948
        %s1950 = sand.u32 %s444, 1
        %s1951 = smul.addr %s1950, 8
        %s1952 = scalar_lea.vmem [#allocation4], %s1951
        // Predicated region
        $region97: #{tpu_custom_call.1} parent=91 // pred_check
          %p1953 = pneg %p454
        $region98: #{tpu_custom_call.1} parent=91 // pred_check_branch
          %1955 = sbr.rel (%p1953) target = $region100
        $region99: #{tpu_custom_call.1} parent=91 // pred_region
          %s1957 = ssub.s32 128, 128
          %1958 = vsyncadd %s1949, %s1957
          %s1959 = sadd.s32 %s37, %s36
          %s1960 = smul.addr %s1959, 128
          %s1961 = scalar_lea.hbm %s18, %s1960
          %s1963 = sshll.u32 %s1952, 4
          %s1964 = int_to_ptr.vmem [resolvable:$true] %s1963
          %1966 = dma.vmem_to_hbm [thread:$0]  %s1964, 128, %s1961, %s1949
        $region100: #{tpu_custom_call.1} parent=91 // pred_fallthru
          _
      $region92: #{tpu_custom_call.1} parent=5 // pred_fallthru
        _
      %p1967 = scmp.le.s32.totalorder 2, %s27
      // Predicated region
      $region101: #{tpu_custom_call.1} parent=5 // pred_check
        %p1968 = pneg %p1967
      $region102: #{tpu_custom_call.1} parent=5 // pred_check_branch
        %1970 = sbr.rel (%p1968) target = $region104
      $region103: #{tpu_custom_call.1} parent=5 // pred_region
        %s1971 = ssub.s32 %s27, 2
        // Predicated region
        $region105: #{tpu_custom_call.1} parent=103 // pred_check
          %p1972 = pneg %p460
        $region106: #{tpu_custom_call.1} parent=103 // pred_check_branch
          %1974 = sbr.rel (%p1972) target = $region108
        $region107: #{tpu_custom_call.1} parent=103 // pred_region
          %s1975 = sand.u32 %s445, 1
          %s1976 = scalar_lea.sflag [#allocation5], %s1975
          %s1977 = sand.u32 %s445, 1
          %s1978 = smul.addr %s1977, 8
          %s1979 = scalar_lea.vmem [#allocation4], %s1978
          %1980 = dma.done %s1976, 128
        $region108: #{tpu_custom_call.1} parent=103 // pred_fallthru
          _
      $region104: #{tpu_custom_call.1} parent=5 // pred_fallthru
        _
    $region6: #{tpu_custom_call.1} parent=1 // loop_footer
      %s31 = sadd.s32 1, %s27
    $region7: #{tpu_custom_call.1} parent=1 // loop_footer_branch
      %26 = sbr.rel target = $region3
    $region8: #{tpu_custom_call.1} parent=1 // loop_exit
      _
    %1981 = vsyncpa [#allocation5], 1
    %s1982 = scalar_lea.sflag [#allocation5], 1
    %1983 = vsyncpa %s1982, 1

</llo_original>
